<compile_context>
chip_gen: v7x
topology: tpu7x:2x2x1
jax: 0.10.0
libtpu: 0.0.40
codegen_flags: <defaults>
</compile_context>

<pallas_src>
import functools
import math

import jax
import jax.numpy as jnp
from jax.experimental import pallas as pl
from jax.experimental.pallas import tpu as pltpu


# ---------------------------------------------------------------------------
# activation:  antiderivTanh(x) = |x| + log(1 + exp(-2|x|))
# ---------------------------------------------------------------------------
def antideriv_tanh(x):
    ax = jnp.abs(x)
    # TODO(synk): on v6e/v7x, if the bundle dump shows the single EUP slot is
    # binding, compute the exp/log1p in bf16 (v5e has no bf16 EUP, keep f32).
    return ax + jnp.log1p(jnp.exp(-2.0 * ax))


# ---------------------------------------------------------------------------
# Pallas kernel: one batch tile (lanes) -> (1, block_n) row of Phi values.
#
#   xt_ref   : (D, bn)            transposed input tile (batch on lanes), f32
#   w0_ref   : (m, D)             opening layer weight (compute_dtype)
#   b0_ref   : (m, 1)             opening bias (column, f32)
#   wh_ref   : (nTh-1, m, m)      hidden layer weights (compute_dtype)
#   bh_ref   : (nTh-1, m, 1)      hidden biases (columns, f32)
#   symA_ref : (D, D)             A'A (compute_dtype)
#   w_ref    : (m, 1)             w.weight column (f32)
#   cw_ref   : (D, 1)             c.weight column (f32)
#   cb_ref   : (1, 1)             c.bias (f32)
#   out_ref  : (1, bn)            Phi values for this tile (lane-dense)
# ---------------------------------------------------------------------------
def phi_kernel(xt_ref, w0_ref, b0_ref, wh_ref, bh_ref, symA_ref,
               w_ref, cw_ref, cb_ref, out_ref, *, nTh):
    h = 1.0 / (nTh - 1)

    xt = xt_ref[...]                                   # (D, bn) f32
    xt_mm = xt.astype(w0_ref.dtype)                    # MXU-operand dtype

    # --- ResNN (transposed layout: featT = act(W @ featT + b)) ---
    opening = jnp.dot(w0_ref[...], xt_mm,
                      preferred_element_type=jnp.float32) + b0_ref[...]
    feat = antideriv_tanh(opening)                     # (m, bn) f32
    for i in range(1, nTh):                            # nTh static -> unrolled
        z = jnp.dot(wh_ref[i - 1], feat.astype(wh_ref.dtype),
                    preferred_element_type=jnp.float32) + bh_ref[i - 1]
        feat = feat + h * antideriv_tanh(z)

    # --- w' * ResNN(x): VPU multiply + sublane reduce (no N=1 MXU matmul) ---
    term_w = jnp.sum(feat * w_ref[...], axis=0, keepdims=True)          # (1, bn)

    # --- c(x): VPU multiply + sublane reduce ---
    cx = jnp.sum(xt * cw_ref[...], axis=0, keepdims=True) + cb_ref[...] # (1, bn)

    # --- 0.5 * x' A'A x: one tiny MXU matvec + VPU reduce ---
    sx = jnp.dot(symA_ref[...], xt.astype(symA_ref.dtype),
                 preferred_element_type=jnp.float32)                    # (D, bn)
    quad = 0.5 * jnp.sum(sx * xt, axis=0, keepdims=True)                # (1, bn)

    out_ref[...] = (term_w + quad + cx).astype(out_ref.dtype)


# ---------------------------------------------------------------------------
# Tiling chooser: big lane-dense tiles, >= 2 (ideally even) grid steps.
# ---------------------------------------------------------------------------
def _round_up(v, m):
    return ((v + m - 1) // m) * m


def _choose_tiling(nex, target_block_n):
    """Return (block_n, num_blocks, nex_padded).

    block_n is a multiple of 128 (lane-dense x tile + output stores). When the
    batch allows it we keep >= 2 grid steps -- and nudge the step count to be
    even -- so v7x's two TensorCores both get work; on v5e/v6e only the tile
    size matters.
    """
    target = max(128, (int(target_block_n) // 128) * 128)
    half = _round_up(nex, 256) // 2                    # multiple of 128
    bn = min(target, max(128, half))
    nb = -(-nex // bn)
    if nb > 2 and nb % 2 == 1:                         # prefer even step count
        bn_even = min(target, _round_up(-(-nex // (nb + 1)), 128))
        nb_even = -(-nex // bn_even)
        if nb_even % 2 == 0:
            bn, nb = bn_even, nb_even
    return bn, nb, bn * nb


# ---------------------------------------------------------------------------
# Wrapper: time concat, batch padding, layout plumbing, BlockSpecs, grid.
# ---------------------------------------------------------------------------
def phi_forward(t, x, params, *, nTh, use_t=True, block_n=2048,
                compute_dtype=jnp.float32):
    """block_n is a *target* tile width; the actual tile is auto-chosen
    (multiple of 128, >=2 grid steps when the batch is big enough)."""
    nex, _ = x.shape
    if use_t:
        x = jnp.concatenate([x, jnp.full((nex, 1), t, dtype=x.dtype)], axis=1)
    D = x.shape[1]

    bn, num_blocks, nex_p = _choose_tiling(nex, block_n)

    # Layout plumbing: one fused transpose+pad+cast pass over x (cheap XLA op,
    # done once per call, not per grid step).
    # TODO(synk): pass x row-major and contract on D inside the kernel
    # (lax.dot_general) to drop this extra HBM pass entirely (matters most on
    # v5e's lower HBM bandwidth).
    xT = jnp.pad(x.astype(jnp.float32).T, ((0, 0), (0, nex_p - nex)))

    W0, b0 = params["W0"], params["b0"]              # (m, D), (1, m)
    Wh, bh = params["Wh"], params["bh"]              # (nTh-1, m, m), (nTh-1, 1, m)
    wvec, cw, cb = params["w"], params["cw"], params["cb"]
    m = W0.shape[0]

    W0c = W0.astype(compute_dtype)                   # used as-is: W0 @ xT
    Whc = Wh.astype(compute_dtype)                   # used as-is: Wi @ featT
    b0c = b0.T.astype(jnp.float32)                   # (m, 1)
    bhc = jnp.transpose(bh, (0, 2, 1)).astype(jnp.float32)   # (nTh-1, m, 1)
    wcol = wvec.T.astype(jnp.float32)                # (m, 1)
    cwcol = cw.T.astype(jnp.float32)                 # (D, 1)
    cbf = cb.astype(jnp.float32)                     # (1, 1)
    symA = jnp.dot(params["A"].T, params["A"]).astype(compute_dtype)  # (D, D)

    grid = (num_blocks,)

    def bcast_spec(shape):
        # Grid-invariant (broadcast) operand: same full block every step.
        # (Single-buffering via pl.Buffered(1) skipped: negligible at this size.)
        return pl.BlockSpec(shape, lambda i: (0,) * len(shape))

    # Advisory cost estimate for XLA's scheduler.
    flops = int(2 * nex_p * (D * m + (nTh - 1) * m * m + D * D)
                + 6 * nex_p * (nTh * m + D))
    transcendentals = int(2 * nex_p * m * nTh)                 # exp + log1p
    weight_bytes = sum(int(a.size) * a.dtype.itemsize
                       for a in (W0c, b0c, Whc, bhc, symA, wcol, cwcol, cbf))
    bytes_accessed = int(xT.size * 4 + nex_p * 4 + weight_bytes)

    out = pl.pallas_call(
        functools.partial(phi_kernel, nTh=nTh),
        out_shape=jax.ShapeDtypeStruct((1, nex_p), jnp.float32),
        grid=grid,
        in_specs=[
            pl.BlockSpec((D, bn), lambda i: (0, i)),           # x tile (lanes)
            bcast_spec(W0c.shape),
            bcast_spec(b0c.shape),
            bcast_spec(Whc.shape),
            bcast_spec(bhc.shape),
            bcast_spec(symA.shape),
            bcast_spec(wcol.shape),
            bcast_spec(cwcol.shape),
            bcast_spec(cbf.shape),
        ],
        # Sublane block dim equals the full dim (1) -> clean lane-dense vst.
        out_specs=pl.BlockSpec((1, bn), lambda i: (0, i)),
        compiler_params=pltpu.CompilerParams(
            dimension_semantics=("parallel",)),
        cost_estimate=pl.CostEstimate(
            flops=flops,
            transcendentals=transcendentals,
            bytes_accessed=bytes_accessed),
    )(xT, W0c, b0c, Whc, bhc, symA, wcol, cwcol, cbf)

    # (1, nex_p) slab -> (nex, 1) column; drop padded entries.
    return out.reshape(nex_p, 1)[:nex]


# ---------------------------------------------------------------------------
# Pure-JAX reference (mirrors the PyTorch forward exactly)
# ---------------------------------------------------------------------------
def phi_reference(t, x, params, *, nTh, use_t=True):
    nex, _ = x.shape
    if use_t:
        x = jnp.concatenate([x, jnp.full((nex, 1), t, dtype=x.dtype)], axis=1)
    h = 1.0 / (nTh - 1)
    symA = params["A"].T @ params["A"]

    def act(v):  # exact PyTorch antiderivTanh form
        av = jnp.abs(v)
        return av + jnp.log(1.0 + jnp.exp(-2.0 * av))

    feat = act(x @ params["W0"].T + params["b0"])
    for i in range(1, nTh):
        feat = feat + h * act(feat @ params["Wh"][i - 1].T + params["bh"][i - 1])
    term_w = feat @ params["w"].T
    quad = 0.5 * jnp.sum((x @ symA) * x, axis=1, keepdims=True)
    cx = x @ params["cw"].T + params["cb"]
    return term_w + quad + cx


# ---------------------------------------------------------------------------
# Deterministic parameter construction (matches Phi.__init__ shapes/inits)
# ---------------------------------------------------------------------------
def init_params(key, d, m, nTh, use_t=True, r=10):
    D = d + int(use_t)
    r = min(r, D)
    k_a, k_w0, k_b0, k_wh, k_bh = jax.random.split(key, 5)

    # A: xavier_uniform_((r, D))
    bound_a = math.sqrt(6.0 / (r + D))
    A = jax.random.uniform(k_a, (r, D), jnp.float32, -bound_a, bound_a)

    # layers[0]: Linear(D, m)
    b0w = 1.0 / math.sqrt(D)
    W0 = jax.random.uniform(k_w0, (m, D), jnp.float32, -b0w, b0w)
    b0 = jax.random.uniform(k_b0, (1, m), jnp.float32, -b0w, b0w)

    # layers[1] (deep-copied to layers[2..nTh-1], as in PyTorch __init__)
    b1w = 1.0 / math.sqrt(m)
    W1 = jax.random.uniform(k_wh, (m, m), jnp.float32, -b1w, b1w)
    b1 = jax.random.uniform(k_bh, (1, m), jnp.float32, -b1w, b1w)
    Wh = jnp.tile(W1[None], (nTh - 1, 1, 1))     # (nTh-1, m, m)
    bh = jnp.tile(b1[None], (nTh - 1, 1, 1))     # (nTh-1, 1, m)

    # w.weight = ones; c.weight = zeros; c.bias = zeros  (as in Phi.__init__)
    w = jnp.ones((1, m), jnp.float32)
    cw = jnp.zeros((1, D), jnp.float32)
    cb = jnp.zeros((1, 1), jnp.float32)

    return dict(A=A, W0=W0, b0=b0, Wh=Wh, bh=bh, w=w, cw=cw, cb=cb)


if __name__ == "__main__":
    # nex not a multiple of the tile width to exercise batch padding; large
    # enough that the tiling chooser picks a big lane-dense tile and exactly
    # 2 grid steps (v7x-friendly even step count).
    nex, d, m, nTh = 3000, 4, 32, 3
    use_t = True
    t = 0.5

    key = jax.random.PRNGKey(0)
    k_params, k_x = jax.random.split(key)
    params = init_params(k_params, d, m, nTh, use_t=use_t)
    x = jax.random.normal(k_x, (nex, d), jnp.float32)

    ref = phi_reference(t, x, params, nTh=nTh, use_t=use_t)

    # f32 path (exact MXU-operand precision).
    out = phi_forward(t, x, params, nTh=nTh, use_t=use_t, block_n=2048,
                      compute_dtype=jnp.float32)
    out = jax.block_until_ready(out)
    assert out.shape == (nex, 1)
    assert jnp.allclose(out, ref, rtol=1e-4, atol=1e-4)

    # bf16 MXU path (weights / matmul operands bf16, activations + accumulation
    # stay f32 -> safe on v5e too). Looser tolerance per the perf review.
    out_bf16 = phi_forward(t, x, params, nTh=nTh, use_t=use_t, block_n=2048,
                           compute_dtype=jnp.bfloat16)
    out_bf16 = jax.block_until_ready(out_bf16)
    assert jnp.allclose(out_bf16, ref, rtol=3e-2, atol=3e-2)

    print("KERNEL_OK")
</pallas_src>

<mosaic_0001>
module attributes {stable_mosaic.version = 11 : i64} {
  func.func @phi_kernel(%arg0: i32, %arg1: memref<5x1536xf32, #tpu.memory_space<vmem>>, %arg2: memref<32x5xf32, #tpu.memory_space<vmem>>, %arg3: memref<32x1xf32, #tpu.memory_space<vmem>>, %arg4: memref<2x32x32xf32, #tpu.memory_space<vmem>>, %arg5: memref<2x32x1xf32, #tpu.memory_space<vmem>>, %arg6: memref<5x5xf32, #tpu.memory_space<vmem>>, %arg7: memref<32x1xf32, #tpu.memory_space<vmem>>, %arg8: memref<5x1xf32, #tpu.memory_space<vmem>>, %arg9: memref<1x1xf32, #tpu.memory_space<vmem>>, %arg10: memref<1x1536xf32, #tpu.memory_space<vmem>>) attributes {dimension_semantics = [#tpu.dimension_semantics<parallel>], iteration_bounds = array<i64: 2>, scalar_prefetch = 0 : i64, scratch_operands = 0 : i64, tpu.core_type = #tpu.core_type<tc>, window_params = [{transform_indices = @transform_0, window_bounds = array<i64: 5, 1536>}, {pipeline_mode = #tpu.pipeline_mode<synchronous>, transform_indices = @transform_1, window_bounds = array<i64: 32, 5>}, {pipeline_mode = #tpu.pipeline_mode<synchronous>, transform_indices = @transform_2, window_bounds = array<i64: 32, 1>}, {pipeline_mode = #tpu.pipeline_mode<synchronous>, transform_indices = @transform_3, window_bounds = array<i64: 2, 32, 32>}, {pipeline_mode = #tpu.pipeline_mode<synchronous>, transform_indices = @transform_4, window_bounds = array<i64: 2, 32, 1>}, {pipeline_mode = #tpu.pipeline_mode<synchronous>, transform_indices = @transform_5, window_bounds = array<i64: 5, 5>}, {pipeline_mode = #tpu.pipeline_mode<synchronous>, transform_indices = @transform_6, window_bounds = array<i64: 32, 1>}, {pipeline_mode = #tpu.pipeline_mode<synchronous>, transform_indices = @transform_7, window_bounds = array<i64: 5, 1>}, {pipeline_mode = #tpu.pipeline_mode<synchronous>, transform_indices = @transform_8, window_bounds = array<i64: 1, 1>}, {transform_indices = @transform_9, window_bounds = array<i64: 1, 1536>}]} {
    %c0 = arith.constant 0 : index
    %c0_0 = arith.constant 0 : index
    %0 = vector.load %arg1[%c0, %c0_0] : memref<5x1536xf32, #tpu.memory_space<vmem>>, vector<5x1536xf32>
    %c0_1 = arith.constant 0 : index
    %c0_2 = arith.constant 0 : index
    %1 = vector.load %arg2[%c0_1, %c0_2] : memref<32x5xf32, #tpu.memory_space<vmem>>, vector<32x5xf32>
    %cst = arith.constant dense<0.000000e+00> : vector<32x1536xf32>
    %2 = tpu.matmul %1, %0, %cst {dimension_numbers = #tpu.dot_dimension_numbers<[1], [0], [0], [1], [0, 0, 1, 1], [], []>} : vector<32x5xf32>, vector<5x1536xf32>, vector<32x1536xf32> -> vector<32x1536xf32>
    %c0_3 = arith.constant 0 : index
    %c0_4 = arith.constant 0 : index
    %3 = vector.load %arg3[%c0_3, %c0_4] : memref<32x1xf32, #tpu.memory_space<vmem>>, vector<32x1xf32>
    %4 = vector.broadcast %3 : vector<32x1xf32> to vector<32x1536xf32>
    %5 = arith.addf %2, %4 : vector<32x1536xf32>
    %6 = math.absf %5 : vector<32x1536xf32>
    %cst_5 = arith.constant -2.000000e+00 : f32
    %7 = vector.broadcast %cst_5 : f32 to vector<32x1536xf32>
    %8 = arith.mulf %7, %6 : vector<32x1536xf32>
    %9 = math.exp %8 : vector<32x1536xf32>
    %10 = math.log1p %9 : vector<32x1536xf32>
    %11 = arith.addf %6, %10 : vector<32x1536xf32>
    %c0_6 = arith.constant 0 : index
    %c0_7 = arith.constant 0 : index
    %c0_8 = arith.constant 0 : index
    %12 = vector.load %arg4[%c0_6, %c0_7, %c0_8] : memref<2x32x32xf32, #tpu.memory_space<vmem>>, vector<1x32x32xf32>
    %13 = vector.shape_cast %12 : vector<1x32x32xf32> to vector<32x32xf32>
    %cst_9 = arith.constant dense<0.000000e+00> : vector<32x1536xf32>
    %14 = tpu.matmul %13, %11, %cst_9 {dimension_numbers = #tpu.dot_dimension_numbers<[1], [0], [0], [1], [0, 0, 1, 1], [], []>} : vector<32x32xf32>, vector<32x1536xf32>, vector<32x1536xf32> -> vector<32x1536xf32>
    %c0_10 = arith.constant 0 : index
    %c0_11 = arith.constant 0 : index
    %c0_12 = arith.constant 0 : index
    %15 = vector.load %arg5[%c0_10, %c0_11, %c0_12] : memref<2x32x1xf32, #tpu.memory_space<vmem>>, vector<1x32x1xf32>
    %16 = vector.shape_cast %15 : vector<1x32x1xf32> to vector<32x1xf32>
    %17 = vector.broadcast %16 : vector<32x1xf32> to vector<32x1536xf32>
    %18 = arith.addf %14, %17 : vector<32x1536xf32>
    %19 = math.absf %18 : vector<32x1536xf32>
    %cst_13 = arith.constant -2.000000e+00 : f32
    %20 = vector.broadcast %cst_13 : f32 to vector<32x1536xf32>
    %21 = arith.mulf %20, %19 : vector<32x1536xf32>
    %22 = math.exp %21 : vector<32x1536xf32>
    %23 = math.log1p %22 : vector<32x1536xf32>
    %24 = arith.addf %19, %23 : vector<32x1536xf32>
    %cst_14 = arith.constant 5.000000e-01 : f32
    %25 = vector.broadcast %cst_14 : f32 to vector<32x1536xf32>
    %26 = arith.mulf %25, %24 : vector<32x1536xf32>
    %27 = arith.addf %11, %26 : vector<32x1536xf32>
    %c1 = arith.constant 1 : index
    %c0_15 = arith.constant 0 : index
    %c0_16 = arith.constant 0 : index
    %28 = vector.load %arg4[%c1, %c0_15, %c0_16] : memref<2x32x32xf32, #tpu.memory_space<vmem>>, vector<1x32x32xf32>
    %29 = vector.shape_cast %28 : vector<1x32x32xf32> to vector<32x32xf32>
    %cst_17 = arith.constant dense<0.000000e+00> : vector<32x1536xf32>
    %30 = tpu.matmul %29, %27, %cst_17 {dimension_numbers = #tpu.dot_dimension_numbers<[1], [0], [0], [1], [0, 0, 1, 1], [], []>} : vector<32x32xf32>, vector<32x1536xf32>, vector<32x1536xf32> -> vector<32x1536xf32>
    %c1_18 = arith.constant 1 : index
    %c0_19 = arith.constant 0 : index
    %c0_20 = arith.constant 0 : index
    %31 = vector.load %arg5[%c1_18, %c0_19, %c0_20] : memref<2x32x1xf32, #tpu.memory_space<vmem>>, vector<1x32x1xf32>
    %32 = vector.shape_cast %31 : vector<1x32x1xf32> to vector<32x1xf32>
    %33 = vector.broadcast %32 : vector<32x1xf32> to vector<32x1536xf32>
    %34 = arith.addf %30, %33 : vector<32x1536xf32>
    %35 = math.absf %34 : vector<32x1536xf32>
    %cst_21 = arith.constant -2.000000e+00 : f32
    %36 = vector.broadcast %cst_21 : f32 to vector<32x1536xf32>
    %37 = arith.mulf %36, %35 : vector<32x1536xf32>
    %38 = math.exp %37 : vector<32x1536xf32>
    %39 = math.log1p %38 : vector<32x1536xf32>
    %40 = arith.addf %35, %39 : vector<32x1536xf32>
    %cst_22 = arith.constant 5.000000e-01 : f32
    %41 = vector.broadcast %cst_22 : f32 to vector<32x1536xf32>
    %42 = arith.mulf %41, %40 : vector<32x1536xf32>
    %43 = arith.addf %27, %42 : vector<32x1536xf32>
    %c0_23 = arith.constant 0 : index
    %c0_24 = arith.constant 0 : index
    %44 = vector.load %arg7[%c0_23, %c0_24] : memref<32x1xf32, #tpu.memory_space<vmem>>, vector<32x1xf32>
    %45 = vector.broadcast %44 : vector<32x1xf32> to vector<32x1536xf32>
    %46 = arith.mulf %43, %45 : vector<32x1536xf32>
    %cst_25 = arith.constant dense<0.000000e+00> : vector<1536xf32>
    %47 = vector.multi_reduction <add>, %46, %cst_25 [0] : vector<32x1536xf32> to vector<1536xf32>
    %48 = vector.shape_cast %47 : vector<1536xf32> to vector<1x1536xf32>
    %c0_26 = arith.constant 0 : index
    %c0_27 = arith.constant 0 : index
    %49 = vector.load %arg8[%c0_26, %c0_27] : memref<5x1xf32, #tpu.memory_space<vmem>>, vector<5x1xf32>
    %50 = vector.broadcast %49 : vector<5x1xf32> to vector<5x1536xf32>
    %51 = arith.mulf %0, %50 : vector<5x1536xf32>
    %cst_28 = arith.constant dense<0.000000e+00> : vector<1536xf32>
    %52 = vector.multi_reduction <add>, %51, %cst_28 [0] : vector<5x1536xf32> to vector<1536xf32>
    %53 = vector.shape_cast %52 : vector<1536xf32> to vector<1x1536xf32>
    %c0_29 = arith.constant 0 : index
    %c0_30 = arith.constant 0 : index
    %54 = vector.load %arg9[%c0_29, %c0_30] : memref<1x1xf32, #tpu.memory_space<vmem>>, vector<1x1xf32>
    %55 = vector.broadcast %54 : vector<1x1xf32> to vector<1x1536xf32>
    %56 = arith.addf %53, %55 : vector<1x1536xf32>
    %c0_31 = arith.constant 0 : index
    %c0_32 = arith.constant 0 : index
    %57 = vector.load %arg6[%c0_31, %c0_32] : memref<5x5xf32, #tpu.memory_space<vmem>>, vector<5x5xf32>
    %cst_33 = arith.constant dense<0.000000e+00> : vector<5x1536xf32>
    %58 = tpu.matmul %57, %0, %cst_33 {dimension_numbers = #tpu.dot_dimension_numbers<[1], [0], [0], [1], [0, 0, 1, 1], [], []>} : vector<5x5xf32>, vector<5x1536xf32>, vector<5x1536xf32> -> vector<5x1536xf32>
    %59 = arith.mulf %58, %0 : vector<5x1536xf32>
    %cst_34 = arith.constant dense<0.000000e+00> : vector<1536xf32>
    %60 = vector.multi_reduction <add>, %59, %cst_34 [0] : vector<5x1536xf32> to vector<1536xf32>
    %61 = vector.shape_cast %60 : vector<1536xf32> to vector<1x1536xf32>
    %cst_35 = arith.constant 5.000000e-01 : f32
    %62 = vector.broadcast %cst_35 : f32 to vector<1x1536xf32>
    %63 = arith.mulf %62, %61 : vector<1x1536xf32>
    %64 = arith.addf %48, %63 : vector<1x1536xf32>
    %65 = arith.addf %64, %56 : vector<1x1536xf32>
    %c0_36 = arith.constant 0 : index
    %c0_37 = arith.constant 0 : index
    %66 = vector.load %arg10[%c0_36, %c0_37] : memref<1x1536xf32, #tpu.memory_space<vmem>>, vector<1x1536xf32>
    tpu.vector_store %arg10[%c0_36, %c0_37], %65 {strides = array<i32>} : memref<1x1536xf32, #tpu.memory_space<vmem>>, vector<1x1536xf32>,
    return
  }
  func.func @transform_0(%arg0: i32) -> (i32, i32) {
    %c0_i32 = arith.constant 0 : i32
    %c0_i32_0 = arith.constant 0 : i32
    return %c0_i32, %arg0 : i32, i32
  }
  func.func @transform_1(%arg0: i32) -> (i32, i32) {
    %c0_i32 = arith.constant 0 : i32
    %c0_i32_0 = arith.constant 0 : i32
    %c0_i32_1 = arith.constant 0 : i32
    return %c0_i32, %c0_i32_0 : i32, i32
  }
  func.func @transform_2(%arg0: i32) -> (i32, i32) {
    %c0_i32 = arith.constant 0 : i32
    %c0_i32_0 = arith.constant 0 : i32
    %c0_i32_1 = arith.constant 0 : i32
    return %c0_i32, %c0_i32_0 : i32, i32
  }
  func.func @transform_3(%arg0: i32) -> (i32, i32, i32) {
    %c0_i32 = arith.constant 0 : i32
    %c0_i32_0 = arith.constant 0 : i32
    %c0_i32_1 = arith.constant 0 : i32
    %c0_i32_2 = arith.constant 0 : i32
    return %c0_i32, %c0_i32_0, %c0_i32_1 : i32, i32, i32
  }
  func.func @transform_4(%arg0: i32) -> (i32, i32, i32) {
    %c0_i32 = arith.constant 0 : i32
    %c0_i32_0 = arith.constant 0 : i32
    %c0_i32_1 = arith.constant 0 : i32
    %c0_i32_2 = arith.constant 0 : i32
    return %c0_i32, %c0_i32_0, %c0_i32_1 : i32, i32, i32
  }
  func.func @transform_5(%arg0: i32) -> (i32, i32) {
    %c0_i32 = arith.constant 0 : i32
    %c0_i32_0 = arith.constant 0 : i32
    %c0_i32_1 = arith.constant 0 : i32
    return %c0_i32, %c0_i32_0 : i32, i32
  }
  func.func @transform_6(%arg0: i32) -> (i32, i32) {
    %c0_i32 = arith.constant 0 : i32
    %c0_i32_0 = arith.constant 0 : i32
    %c0_i32_1 = arith.constant 0 : i32
    return %c0_i32, %c0_i32_0 : i32, i32
  }
  func.func @transform_7(%arg0: i32) -> (i32, i32) {
    %c0_i32 = arith.constant 0 : i32
    %c0_i32_0 = arith.constant 0 : i32
    %c0_i32_1 = arith.constant 0 : i32
    return %c0_i32, %c0_i32_0 : i32, i32
  }
  func.func @transform_8(%arg0: i32) -> (i32, i32) {
    %c0_i32 = arith.constant 0 : i32
    %c0_i32_0 = arith.constant 0 : i32
    %c0_i32_1 = arith.constant 0 : i32
    return %c0_i32, %c0_i32_0 : i32, i32
  }
  func.func @transform_9(%arg0: i32) -> (i32, i32) {
    %c0_i32 = arith.constant 0 : i32
    %c0_i32_0 = arith.constant 0 : i32
    return %c0_i32, %arg0 : i32, i32
  }
}

</mosaic_0001>

<llo_original>
// kernel: tpu_custom_call.1
$region0: #{tpu_custom_call.1}
  #allocation0 [shape = 'u32[]', space=smem, size = 0x4, offset = 0x4, fixed_abs, tag = 'smem constant byte address 0x4 - core index']
  #allocation1 [shape = 'u32[144,128]{1,0:T(1,128)}', space=vmem, size = 0x12000, scoped, tag = 'internal scratch']
  #allocation2 [shape = 'f32[1,1]{1,0:T(1,128)S(1)}', space=vmem, size = 0x200, scoped, tag = 'scoped memory for tpu_custom_call.1']
  %s0 = inlined_call_operand.hbm [shape: f32[5,3072], index: 0, kind: input, shape index: {}]
  %s1 = inlined_call_operand.vmem [shape: f32[32,5], index: 1, kind: input, shape index: {}]
  %s2 = inlined_call_operand.vmem [shape: f32[32,1], index: 2, kind: input, shape index: {}]
  %s3 = inlined_call_operand.vmem [shape: f32[2,32,32], index: 3, kind: input, shape index: {}]
  %s4 = inlined_call_operand.vmem [shape: f32[2,32,1], index: 4, kind: input, shape index: {}]
  %s5 = inlined_call_operand.vmem [shape: f32[5,5], index: 5, kind: input, shape index: {}]
  %s6 = inlined_call_operand.vmem [shape: f32[32,1], index: 6, kind: input, shape index: {}]
  %s7 = inlined_call_operand.vmem [shape: f32[5,1], index: 7, kind: input, shape index: {}]
  %s8 = inlined_call_operand.<no memory space> [shape: f32[1,1], index: 8, kind: input, shape index: {}]
  %s9 = inlined_call_operand.hbm [shape: f32[1,3072], index: 9, kind: output, shape index: {}]
  %s10 = sld [smem:[#allocation0]]
  $region73: #{tpu_custom_call.1} parent=0
    _
  %s12 = ssub.s32 1, %s10
  %s13 = scalar_select 0, %s12, %s10
  %v14 = vstv %s8
  %15 = vst [vmem:[#allocation2] sm:$0x1] %v14
  $region1: #{tpu_custom_call.1} parent=0
    #allocation3 [shape = 'u8[98304]{0}', space=vmem, size = 0x18000, scoped, tag = 'input window, operand 0']
    #allocation4 [shape = 's32[2]{0}', space=sflag, size = 0x8, scoped, tag = 'scoped memory for tpu_custom_call.1']
    #allocation5 [shape = 's32[2]{0}', space=sflag, size = 0x8, scoped, tag = 'scoped memory for tpu_custom_call.1']
    #allocation6 [shape = 'u8[12288]{0}', space=vmem, size = 0x3000, scoped, tag = 'output window, operand 0']
    %16 = vsyncpa [#allocation4], 0
    %s17 = scalar_lea.sflag [#allocation4], 1
    %18 = vsyncpa %s17, 0
    %19 = vsyncpa [#allocation5], 0
    %s20 = scalar_lea.sflag [#allocation5], 1
    %21 = vsyncpa %s20, 0
    loop: start=0, step=1, limit=4
    $region2: #{tpu_custom_call.1} parent=1 // loop_pre_header
      _
    $region3: #{tpu_custom_call.1} parent=1 // loop_header
      %s23 = sphi 0, %s27
      %p24 = scmp.ge.s32.totalorder %s23, 4
      %s33 = sphi 0, %s35
      %s36 = sphi 0, %s33
      %s37 = sphi 0, %s36
      %s53 = sphi 0, %s37
      %s57 = sphi 0, %s57
      %s59 = sphi 0, %s57
      %s60 = sphi 0, %s59
      %s74 = sphi 0, %s60
      %s78 = sphi 0, %s78
      %s80 = sphi 0, %s78
      %s81 = sphi 0, %s80
      %s95 = sphi 0, %s81
      %s99 = sphi 0, %s99
      %s101 = sphi 0, %s99
      %s102 = sphi 0, %s101
      %s116 = sphi 0, %s102
      %s120 = sphi 0, %s120
      %s122 = sphi 0, %s120
      %s123 = sphi 0, %s122
      %s137 = sphi 0, %s123
      %s141 = sphi 0, %s141
      %s143 = sphi 0, %s141
      %s144 = sphi 0, %s143
      %s158 = sphi 0, %s144
      %s162 = sphi 0, %s162
      %s164 = sphi 0, %s162
      %s165 = sphi 0, %s164
      %s179 = sphi 0, %s165
      %s183 = sphi 0, %s183
      %s185 = sphi 0, %s183
      %s186 = sphi 0, %s185
      %s200 = sphi 0, %s186
      %s204 = sphi 0, %s204
      %s206 = sphi 0, %s204
      %s207 = sphi 0, %s206
      %s221 = sphi 0, %s207
      %s227 = sphi 0, %s229
      %s230 = sphi 0, %s227
      %s231 = sphi 0, %s230
      %s247 = sphi 0, %s231
    $region4: #{tpu_custom_call.1} parent=1 // loop_header_branch
      %26 = sbr.rel (%p24) target = $region8
    $region5: #{tpu_custom_call.1} parent=1 // loop_body
      %s28 = ssub.s32 %s23, 1
      %s29 = ssub.s32 %s23, 2
      %s30 = sadd.s32 %s23, 1
      %s31 = ssub.s32 %s23, %s30
      %p32 = scmp.eq.s32.totalorder %s31, 0
      %s34 = sadd.s32 %s33, 1
      %s35 = scalar_select %p32, %s33, %s34
      %p38 = pneg %p32
      %p39 = scmp.eq.s32.totalorder %s23, 1
      %p40 = por %p38, %p39
      %p41 = scmp.ne.s32.totalorder %s33, %s36
      %p42 = scmp.eq.s32.totalorder %s23, 0
      %p43 = por %p41, %p42
      %p44 = scmp.ne.s32.totalorder %s33, %s36
      %p45 = scmp.eq.s32.totalorder %s28, 1
      %p46 = por %p44, %p45
      %p47 = scmp.ne.s32.totalorder %s36, %s37
      %p48 = scmp.eq.s32.totalorder %s28, 0
      %p49 = por %p47, %p48
      %p50 = scmp.ne.s32.totalorder %s36, %s37
      %p51 = scmp.eq.s32.totalorder %s29, 1
      %p52 = por %p50, %p51
      %p54 = scmp.ne.s32.totalorder %s37, %s53
      %p55 = scmp.eq.s32.totalorder %s29, 0
      %p56 = por %p54, %p55
      %s58 = sadd.s32 %s57, 1
      %p61 = scmp.eq.s32.totalorder %s23, 1
      %p62 = scmp.ne.s32.totalorder %s57, %s59
      %p63 = scmp.eq.s32.totalorder %s23, 0
      %p64 = por %p62, %p63
      %p65 = scmp.ne.s32.totalorder %s57, %s59
      %p66 = scmp.eq.s32.totalorder %s28, 1
      %p67 = por %p65, %p66
      %p68 = scmp.ne.s32.totalorder %s59, %s60
      %p69 = scmp.eq.s32.totalorder %s28, 0
      %p70 = por %p68, %p69
      %p71 = scmp.ne.s32.totalorder %s59, %s60
      %p72 = scmp.eq.s32.totalorder %s29, 1
      %p73 = por %p71, %p72
      %p75 = scmp.ne.s32.totalorder %s60, %s74
      %p76 = scmp.eq.s32.totalorder %s29, 0
      %p77 = por %p75, %p76
      %s79 = sadd.s32 %s78, 1
      %p82 = scmp.eq.s32.totalorder %s23, 1
      %p83 = scmp.ne.s32.totalorder %s78, %s80
      %p84 = scmp.eq.s32.totalorder %s23, 0
      %p85 = por %p83, %p84
      %p86 = scmp.ne.s32.totalorder %s78, %s80
      %p87 = scmp.eq.s32.totalorder %s28, 1
      %p88 = por %p86, %p87
      %p89 = scmp.ne.s32.totalorder %s80, %s81
      %p90 = scmp.eq.s32.totalorder %s28, 0
      %p91 = por %p89, %p90
      %p92 = scmp.ne.s32.totalorder %s80, %s81
      %p93 = scmp.eq.s32.totalorder %s29, 1
      %p94 = por %p92, %p93
      %p96 = scmp.ne.s32.totalorder %s81, %s95
      %p97 = scmp.eq.s32.totalorder %s29, 0
      %p98 = por %p96, %p97
      %s100 = sadd.s32 %s99, 1
      %p103 = scmp.eq.s32.totalorder %s23, 1
      %p104 = scmp.ne.s32.totalorder %s99, %s101
      %p105 = scmp.eq.s32.totalorder %s23, 0
      %p106 = por %p104, %p105
      %p107 = scmp.ne.s32.totalorder %s99, %s101
      %p108 = scmp.eq.s32.totalorder %s28, 1
      %p109 = por %p107, %p108
      %p110 = scmp.ne.s32.totalorder %s101, %s102
      %p111 = scmp.eq.s32.totalorder %s28, 0
      %p112 = por %p110, %p111
      %p113 = scmp.ne.s32.totalorder %s101, %s102
      %p114 = scmp.eq.s32.totalorder %s29, 1
      %p115 = por %p113, %p114
      %p117 = scmp.ne.s32.totalorder %s102, %s116
      %p118 = scmp.eq.s32.totalorder %s29, 0
      %p119 = por %p117, %p118
      %s121 = sadd.s32 %s120, 1
      %p124 = scmp.eq.s32.totalorder %s23, 1
      %p125 = scmp.ne.s32.totalorder %s120, %s122
      %p126 = scmp.eq.s32.totalorder %s23, 0
      %p127 = por %p125, %p126
      %p128 = scmp.ne.s32.totalorder %s120, %s122
      %p129 = scmp.eq.s32.totalorder %s28, 1
      %p130 = por %p128, %p129
      %p131 = scmp.ne.s32.totalorder %s122, %s123
      %p132 = scmp.eq.s32.totalorder %s28, 0
      %p133 = por %p131, %p132
      %p134 = scmp.ne.s32.totalorder %s122, %s123
      %p135 = scmp.eq.s32.totalorder %s29, 1
      %p136 = por %p134, %p135
      %p138 = scmp.ne.s32.totalorder %s123, %s137
      %p139 = scmp.eq.s32.totalorder %s29, 0
      %p140 = por %p138, %p139
      %s142 = sadd.s32 %s141, 1
      %p145 = scmp.eq.s32.totalorder %s23, 1
      %p146 = scmp.ne.s32.totalorder %s141, %s143
      %p147 = scmp.eq.s32.totalorder %s23, 0
      %p148 = por %p146, %p147
      %p149 = scmp.ne.s32.totalorder %s141, %s143
      %p150 = scmp.eq.s32.totalorder %s28, 1
      %p151 = por %p149, %p150
      %p152 = scmp.ne.s32.totalorder %s143, %s144
      %p153 = scmp.eq.s32.totalorder %s28, 0
      %p154 = por %p152, %p153
      %p155 = scmp.ne.s32.totalorder %s143, %s144
      %p156 = scmp.eq.s32.totalorder %s29, 1
      %p157 = por %p155, %p156
      %p159 = scmp.ne.s32.totalorder %s144, %s158
      %p160 = scmp.eq.s32.totalorder %s29, 0
      %p161 = por %p159, %p160
      %s163 = sadd.s32 %s162, 1
      %p166 = scmp.eq.s32.totalorder %s23, 1
      %p167 = scmp.ne.s32.totalorder %s162, %s164
      %p168 = scmp.eq.s32.totalorder %s23, 0
      %p169 = por %p167, %p168
      %p170 = scmp.ne.s32.totalorder %s162, %s164
      %p171 = scmp.eq.s32.totalorder %s28, 1
      %p172 = por %p170, %p171
      %p173 = scmp.ne.s32.totalorder %s164, %s165
      %p174 = scmp.eq.s32.totalorder %s28, 0
      %p175 = por %p173, %p174
      %p176 = scmp.ne.s32.totalorder %s164, %s165
      %p177 = scmp.eq.s32.totalorder %s29, 1
      %p178 = por %p176, %p177
      %p180 = scmp.ne.s32.totalorder %s165, %s179
      %p181 = scmp.eq.s32.totalorder %s29, 0
      %p182 = por %p180, %p181
      %s184 = sadd.s32 %s183, 1
      %p187 = scmp.eq.s32.totalorder %s23, 1
      %p188 = scmp.ne.s32.totalorder %s183, %s185
      %p189 = scmp.eq.s32.totalorder %s23, 0
      %p190 = por %p188, %p189
      %p191 = scmp.ne.s32.totalorder %s183, %s185
      %p192 = scmp.eq.s32.totalorder %s28, 1
      %p193 = por %p191, %p192
      %p194 = scmp.ne.s32.totalorder %s185, %s186
      %p195 = scmp.eq.s32.totalorder %s28, 0
      %p196 = por %p194, %p195
      %p197 = scmp.ne.s32.totalorder %s185, %s186
      %p198 = scmp.eq.s32.totalorder %s29, 1
      %p199 = por %p197, %p198
      %p201 = scmp.ne.s32.totalorder %s186, %s200
      %p202 = scmp.eq.s32.totalorder %s29, 0
      %p203 = por %p201, %p202
      %s205 = sadd.s32 %s204, 1
      %p208 = scmp.eq.s32.totalorder %s23, 1
      %p209 = scmp.ne.s32.totalorder %s204, %s206
      %p210 = scmp.eq.s32.totalorder %s23, 0
      %p211 = por %p209, %p210
      %p212 = scmp.ne.s32.totalorder %s204, %s206
      %p213 = scmp.eq.s32.totalorder %s28, 1
      %p214 = por %p212, %p213
      %p215 = scmp.ne.s32.totalorder %s206, %s207
      %p216 = scmp.eq.s32.totalorder %s28, 0
      %p217 = por %p215, %p216
      %p218 = scmp.ne.s32.totalorder %s206, %s207
      %p219 = scmp.eq.s32.totalorder %s29, 1
      %p220 = por %p218, %p219
      %p222 = scmp.ne.s32.totalorder %s207, %s221
      %p223 = scmp.eq.s32.totalorder %s29, 0
      %p224 = por %p222, %p223
      %s225 = ssub.s32 %s23, %s30
      %p226 = scmp.eq.s32.totalorder %s225, 0
      %s228 = sadd.s32 %s227, 1
      %s229 = scalar_select %p226, %s227, %s228
      %p232 = pneg %p226
      %p233 = scmp.eq.s32.totalorder %s23, 1
      %p234 = por %p232, %p233
      %p235 = scmp.ne.s32.totalorder %s227, %s230
      %p236 = scmp.eq.s32.totalorder %s23, 0
      %p237 = por %p235, %p236
      %p238 = scmp.ne.s32.totalorder %s227, %s230
      %p239 = scmp.eq.s32.totalorder %s28, 1
      %p240 = por %p238, %p239
      %p241 = scmp.ne.s32.totalorder %s230, %s231
      %p242 = scmp.eq.s32.totalorder %s28, 0
      %p243 = por %p241, %p242
      %p244 = scmp.ne.s32.totalorder %s230, %s231
      %p245 = scmp.eq.s32.totalorder %s29, 1
      %p246 = por %p244, %p245
      %p248 = scmp.ne.s32.totalorder %s231, %s247
      %p249 = scmp.eq.s32.totalorder %s29, 0
      %p250 = por %p248, %p249
      %p251 = scmp.le.s32.totalorder 1, %s23
      %p252 = scmp.lt.s32.totalorder %s23, 3
      %p253 = pnand %p251, %p252
      %p254 = pneg %p253
      // Predicated region
      $region9: #{tpu_custom_call.1} parent=5 // pred_check
        _
      $region10: #{tpu_custom_call.1} parent=5 // pred_check_branch
        %256 = sbr.rel (%p253) target = $region12
      $region11: #{tpu_custom_call.1} parent=5 // pred_region
        %s257 = ssub.s32 %s23, 1
        // Predicated region
        $region13: #{tpu_custom_call.1} parent=11 // pred_check
          %p258 = pneg %p70
        $region14: #{tpu_custom_call.1} parent=11 // pred_check_branch
          %260 = sbr.rel (%p258) target = $region16
        $region15: #{tpu_custom_call.1} parent=11 // pred_region
          _
        $region16: #{tpu_custom_call.1} parent=11 // pred_fallthru
          _
        // Predicated region
        $region17: #{tpu_custom_call.1} parent=11 // pred_check
          %p261 = pneg %p91
        $region18: #{tpu_custom_call.1} parent=11 // pred_check_branch
          %263 = sbr.rel (%p261) target = $region20
        $region19: #{tpu_custom_call.1} parent=11 // pred_region
          _
        $region20: #{tpu_custom_call.1} parent=11 // pred_fallthru
          _
        // Predicated region
        $region21: #{tpu_custom_call.1} parent=11 // pred_check
          %p264 = pneg %p112
        $region22: #{tpu_custom_call.1} parent=11 // pred_check_branch
          %266 = sbr.rel (%p264) target = $region24
        $region23: #{tpu_custom_call.1} parent=11 // pred_region
          _
        $region24: #{tpu_custom_call.1} parent=11 // pred_fallthru
          _
        // Predicated region
        $region25: #{tpu_custom_call.1} parent=11 // pred_check
          %p267 = pneg %p133
        $region26: #{tpu_custom_call.1} parent=11 // pred_check_branch
          %269 = sbr.rel (%p267) target = $region28
        $region27: #{tpu_custom_call.1} parent=11 // pred_region
          _
        $region28: #{tpu_custom_call.1} parent=11 // pred_fallthru
          _
        // Predicated region
        $region29: #{tpu_custom_call.1} parent=11 // pred_check
          %p270 = pneg %p154
        $region30: #{tpu_custom_call.1} parent=11 // pred_check_branch
          %272 = sbr.rel (%p270) target = $region32
        $region31: #{tpu_custom_call.1} parent=11 // pred_region
          _
        $region32: #{tpu_custom_call.1} parent=11 // pred_fallthru
          _
        // Predicated region
        $region33: #{tpu_custom_call.1} parent=11 // pred_check
          %p273 = pneg %p175
        $region34: #{tpu_custom_call.1} parent=11 // pred_check_branch
          %275 = sbr.rel (%p273) target = $region36
        $region35: #{tpu_custom_call.1} parent=11 // pred_region
          _
        $region36: #{tpu_custom_call.1} parent=11 // pred_fallthru
          _
        // Predicated region
        $region37: #{tpu_custom_call.1} parent=11 // pred_check
          %p276 = pneg %p196
        $region38: #{tpu_custom_call.1} parent=11 // pred_check_branch
          %278 = sbr.rel (%p276) target = $region40
        $region39: #{tpu_custom_call.1} parent=11 // pred_region
          _
        $region40: #{tpu_custom_call.1} parent=11 // pred_fallthru
          _
        // Predicated region
        $region41: #{tpu_custom_call.1} parent=11 // pred_check
          %p279 = pneg %p217
        $region42: #{tpu_custom_call.1} parent=11 // pred_check_branch
          %281 = sbr.rel (%p279) target = $region44
        $region43: #{tpu_custom_call.1} parent=11 // pred_region
          _
        $region44: #{tpu_custom_call.1} parent=11 // pred_fallthru
          _
      $region12: #{tpu_custom_call.1} parent=5 // pred_fallthru
        _
      %p282 = scmp.lt.s32.totalorder %s23, 2
      // Predicated region
      $region45: #{tpu_custom_call.1} parent=5 // pred_check
        %p283 = pneg %p282
      $region46: #{tpu_custom_call.1} parent=5 // pred_check_branch
        %285 = sbr.rel (%p283) target = $region48
      $region47: #{tpu_custom_call.1} parent=5 // pred_region
        // Predicated region
        $region49: #{tpu_custom_call.1} parent=47 // pred_check
          %p286 = pneg %p43
        $region50: #{tpu_custom_call.1} parent=47 // pred_check_branch
          %288 = sbr.rel (%p286) target = $region52
        $region51: #{tpu_custom_call.1} parent=47 // pred_region
          %s289 = sand.u32 %s33, 1
          %s290 = scalar_lea.sflag [#allocation4], %s289
          %s291 = sand.u32 %s33, 1
          %s292 = smul.addr %s291, 96
          %s293 = scalar_lea.vmem [#allocation3], %s292
          %s294 = smul.u32 12, %s23
          %s296 = ssub.s32 1536, 1536
          %297 = vsyncadd %s290, %s296
          %s298 = smul.addr %s294, 128
          %s299 = scalar_lea.hbm %s0, %s298
          %s301 = sshll.u32 %s293, 4
          %s302 = int_to_ptr.vmem [resolvable:$true] %s301
          %304 = dma.hbm_to_vmem [thread:$0]  %s299, 1536, %s302, %s290
        $region52: #{tpu_custom_call.1} parent=47 // pred_fallthru
          _
      $region48: #{tpu_custom_call.1} parent=5 // pred_fallthru
        _
      %p305 = scmp.le.s32.totalorder 1, %s23
      %p306 = scmp.lt.s32.totalorder %s23, 3
      %p307 = pnand %p305, %p306
      %p308 = pneg %p307
      // Predicated region
      $region53: #{tpu_custom_call.1} parent=5 // pred_check
        _
      $region54: #{tpu_custom_call.1} parent=5 // pred_check_branch
        %310 = sbr.rel (%p307) target = $region56
      $region55: #{tpu_custom_call.1} parent=5 // pred_region
        %s311 = ssub.s32 %s23, 1
        %s312 = sand.u32 %s36, 1
        %s313 = scalar_lea.sflag [#allocation4], %s312
        %s314 = sand.u32 %s36, 1
        %s315 = smul.addr %s314, 96
        %s316 = scalar_lea.vmem [#allocation3], %s315
        // Predicated region
        $region57: #{tpu_custom_call.1} parent=55 // pred_check
          %p317 = pneg %p49
        $region58: #{tpu_custom_call.1} parent=55 // pred_check_branch
          %319 = sbr.rel (%p317) target = $region60
        $region59: #{tpu_custom_call.1} parent=55 // pred_region
          %320 = dma.done %s313, 1536
        $region60: #{tpu_custom_call.1} parent=55 // pred_fallthru
          _
        %s321 = sand.u32 %s36, 1
        %s322 = scalar_lea.sflag [#allocation4], %s321
        %s323 = sand.u32 %s36, 1
        %s324 = smul.addr %s323, 96
        %s325 = scalar_lea.vmem [#allocation3], %s324
        %p326 = pneg %p49
        %p327 = pneg %p46
        %p328 = pneg %p70
        %p329 = pneg %p67
        %p330 = pneg %p91
        %p331 = pneg %p88
        %p332 = pneg %p112
        %p333 = pneg %p109
        %p334 = pneg %p133
        %p335 = pneg %p130
        %p336 = pneg %p154
        %p337 = pneg %p151
        %p338 = pneg %p175
        %p339 = pneg %p172
        %p340 = pneg %p196
        %p341 = pneg %p193
        %p342 = pneg %p217
        %p343 = pneg %p214
        %p344 = pneg %p243
        %p345 = pneg %p240
        %s346 = sand.u32 %s230, 1
        %s347 = scalar_lea.sflag [#allocation5], %s346
        %s348 = sand.u32 %s230, 1
        %s349 = smul.addr %s348, 12
        %s350 = scalar_lea.vmem [#allocation6], %s349
        %s351 = smul.u32 12, %s28
        %s352 = smul.u32 12, %s28
        %v353 = vld [vmem:[%s316] sm:$0x1f]
        %v354 = vld [vmem:[%s316 + $0x8] sm:$0x1f]
        %v355 = vld [vmem:[%s316 + $0x10] sm:$0x1f]
        %v356 = vld [vmem:[%s316 + $0x18] sm:$0x1f]
        %v357 = vld [vmem:[%s316 + $0x20] sm:$0x1f]
        %v358 = vld [vmem:[%s316 + $0x28] sm:$0x1f]
        %v359 = vld [vmem:[%s316 + $0x30] sm:$0x1f]
        %v360 = vld [vmem:[%s316 + $0x38] sm:$0x1f]
        %v361 = vld [vmem:[%s316 + $0x40] sm:$0x1f]
        %v362 = vld [vmem:[%s316 + $0x48] sm:$0x1f]
        %v363 = vld [vmem:[%s316 + $0x50] sm:$0x1f]
        %v364 = vld [vmem:[%s316 + $0x58] sm:$0x1f]
        %v365 = vld [vmem:[%s1] sm:$0xff]
        %v366 = vld [vmem:[%s1 + $0x8] sm:$0xff]
        %v367 = vld [vmem:[%s1 + $0x10] sm:$0xff]
        %v368 = vld [vmem:[%s1 + $0x18] sm:$0xff]
        %v369 = vld [vmem:[%s2] sm:$0xff]
        %v370 = vld [vmem:[%s2 + $0x8] sm:$0xff]
        %v371 = vld [vmem:[%s2 + $0x10] sm:$0xff]
        %v372 = vld [vmem:[%s2 + $0x18] sm:$0xff]
        %374 = vset.pattern.permute.xlu0 0
        %375 = vperm.xlu0 %374, %v369
        %v376 = vpop.permute.xlu0 %375
        %379 = vset.pattern.permute.xlu0 0
        %380 = vperm.xlu0 %379, %v370
        %v381 = vpop.permute.xlu0 %380
        %384 = vset.pattern.permute.xlu0 0
        %385 = vperm.xlu0 %384, %v371
        %v386 = vpop.permute.xlu0 %385
        %389 = vset.pattern.permute.xlu0 0
        %390 = vperm.xlu0 %389, %v372
        %v391 = vpop.permute.xlu0 %390
        %vm393 = vcmask 39936
        %v395 = vsel %vm393, %v365, 0
        %v398 = vsel %vm393, %v366, 0
        %v401 = vsel %vm393, %v367, 0
        %v404 = vsel %vm393, %v368, 0
        %vm406 = vcmask 1044480
        %v408 = vsel %vm406, %v353, 0
        %v411 = vsel %vm406, %v354, 0
        %v414 = vsel %vm406, %v355, 0
        %v417 = vsel %vm406, %v356, 0
        %v420 = vsel %vm406, %v357, 0
        %v423 = vsel %vm406, %v358, 0
        %v426 = vsel %vm406, %v359, 0
        %v429 = vsel %vm406, %v360, 0
        %v432 = vsel %vm406, %v361, 0
        %v435 = vsel %vm406, %v362, 0
        %v438 = vsel %vm406, %v363, 0
        %v441 = vsel %vm406, %v364, 0
        %443 = vmatprep.subr.mxu0 %v411
        %444 = vmatpush1.msra.mxu0 %v408
        %445 = vmatprep.subr.mxu0 0.0
        %446 = vmatpush1.msra.mxu0 0.0
        %447 = vmatprep.subr.mxu0 0.0
        %448 = vmatpush1.msra.mxu0 0.0
        %449 = vmatprep.subr.mxu0 0.0
        %450 = vmatpush1.msra.mxu0 0.0
        %451 = vmatprep.subr.mxu0 0.0
        %452 = vmatpush1.msra.mxu0 0.0
        %453 = vmatprep.subr.mxu0 0.0
        %454 = vmatpush1.msra.mxu0 0.0
        %455 = vmatprep.subr.mxu0 0.0
        %456 = vmatpush1.msra.mxu0 0.0
        %457 = vmatprep.subr.mxu0 0.0
        %458 = vmatpush1.msra.mxu0 0.0
        %459 = vmatprep.subr.mxu0 0.0
        %460 = vmatpush1.msra.mxu0 0.0
        %461 = vmatprep.subr.mxu0 0.0
        %462 = vmatpush1.msra.mxu0 0.0
        %463 = vmatprep.subr.mxu0 0.0
        %464 = vmatpush1.msra.mxu0 0.0
        %465 = vmatprep.subr.mxu0 0.0
        %466 = vmatpush1.msra.mxu0 0.0
        %467 = vmatprep.subr.mxu0 0.0
        %468 = vmatpush1.msra.mxu0 0.0
        %469 = vmatprep.subr.mxu0 0.0
        %470 = vmatpush1.msra.mxu0 0.0
        %471 = vmatprep.subr.mxu0 0.0
        %472 = vmatpush1.msra.mxu0 0.0
        %473 = vmatprep.subr.mxu0 0.0
        %474 = vmatpush1.msra.mxu0 0.0
        %475 = vmatprep.subr.mxu0 0.0
        %476 = vmatpush1.msra.mxu0 0.0
        %477 = vmatprep.subr.mxu0 0.0
        %478 = vmatpush1.msra.mxu0 0.0
        %479 = vmatprep.subr.mxu0 0.0
        %480 = vmatpush1.msra.mxu0 0.0
        %481 = vmatprep.subr.mxu0 0.0
        %482 = vmatpush1.msra.mxu0 0.0
        %483 = vmatprep.subr.mxu0 0.0
        %484 = vmatpush1.msra.mxu0 0.0
        %485 = vmatprep.subr.mxu0 0.0
        %486 = vmatpush1.msra.mxu0 0.0
        %487 = vmatprep.subr.mxu0 0.0
        %488 = vmatpush1.msra.mxu0 0.0
        %489 = vmatprep.subr.mxu0 0.0
        %490 = vmatpush1.msra.mxu0 0.0
        %491 = vmatprep.subr.mxu0 0.0
        %492 = vmatpush1.msra.mxu0 0.0
        %493 = vmatprep.subr.mxu0 0.0
        %494 = vmatpush1.msra.mxu0 0.0
        %495 = vmatprep.subr.mxu0 0.0
        %496 = vmatpush1.msra.mxu0 0.0
        %497 = vmatprep.subr.mxu0 0.0
        %498 = vmatpush1.msra.mxu0 0.0
        %499 = vmatprep.subr.mxu0 0.0
        %500 = vmatpush1.msra.mxu0 0.0
        %501 = vmatprep.subr.mxu0 0.0
        %502 = vmatpush1.msra.mxu0 0.0
        %503 = vmatprep.subr.mxu0 0.0
        %504 = vmatpush1.msra.mxu0 0.0
        %505 = vmatprep.subr.mxu0 0.0
        %506 = vmatpush1.msra.mxu0 0.0
        %507 = vmatprep.mubr.f32.mxu0 0.0
        %508 = vmatmul.mubr.f32.gmra.mrb[0].mxu0 %v395
        %v509 = vpop.f32.mrb[0].mxu0
        %v510 = vadd.f32 %v376, %v509
        %v511 = vpop.f32.mrb[0].mxu0
        %v512 = vadd.f32 %v376, %v511
        %513 = vmatprep.mubr.f32.mxu0 0.0
        %514 = vmatmul.mubr.f32.gmra.mrb[0].mxu0 %v398
        %v515 = vpop.f32.mrb[0].mxu0
        %v516 = vadd.f32 %v381, %v515
        %v517 = vpop.f32.mrb[0].mxu0
        %v518 = vadd.f32 %v381, %v517
        %519 = vmatprep.mubr.f32.mxu0 0.0
        %520 = vmatmul.mubr.f32.gmra.mrb[0].mxu0 %v401
        %v521 = vpop.f32.mrb[0].mxu0
        %v522 = vadd.f32 %v386, %v521
        %v523 = vpop.f32.mrb[0].mxu0
        %v524 = vadd.f32 %v386, %v523
        %525 = vmatprep.mubr.f32.mxu0 0.0
        %526 = vmatmul.mubr.f32.gmra.mrb[0].mxu0 %v404
        %v527 = vpop.f32.mrb[0].mxu0
        %v528 = vadd.f32 %v391, %v527
        %v529 = vpop.f32.mrb[0].mxu0
        %v530 = vadd.f32 %v391, %v529
        %531 = vdwg.mxu0
        %532 = vmatprep.subr.mxu0 %v417
        %533 = vmatpush1.msra.mxu0 %v414
        %534 = vmatprep.subr.mxu0 0.0
        %535 = vmatpush1.msra.mxu0 0.0
        %536 = vmatprep.subr.mxu0 0.0
        %537 = vmatpush1.msra.mxu0 0.0
        %538 = vmatprep.subr.mxu0 0.0
        %539 = vmatpush1.msra.mxu0 0.0
        %540 = vmatprep.subr.mxu0 0.0
        %541 = vmatpush1.msra.mxu0 0.0
        %542 = vmatprep.subr.mxu0 0.0
        %543 = vmatpush1.msra.mxu0 0.0
        %544 = vmatprep.subr.mxu0 0.0
        %545 = vmatpush1.msra.mxu0 0.0
        %546 = vmatprep.subr.mxu0 0.0
        %547 = vmatpush1.msra.mxu0 0.0
        %548 = vmatprep.subr.mxu0 0.0
        %549 = vmatpush1.msra.mxu0 0.0
        %550 = vmatprep.subr.mxu0 0.0
        %551 = vmatpush1.msra.mxu0 0.0
        %552 = vmatprep.subr.mxu0 0.0
        %553 = vmatpush1.msra.mxu0 0.0
        %554 = vmatprep.subr.mxu0 0.0
        %555 = vmatpush1.msra.mxu0 0.0
        %556 = vmatprep.subr.mxu0 0.0
        %557 = vmatpush1.msra.mxu0 0.0
        %558 = vmatprep.subr.mxu0 0.0
        %559 = vmatpush1.msra.mxu0 0.0
        %560 = vmatprep.subr.mxu0 0.0
        %561 = vmatpush1.msra.mxu0 0.0
        %562 = vmatprep.subr.mxu0 0.0
        %563 = vmatpush1.msra.mxu0 0.0
        %564 = vmatprep.subr.mxu0 0.0
        %565 = vmatpush1.msra.mxu0 0.0
        %566 = vmatprep.subr.mxu0 0.0
        %567 = vmatpush1.msra.mxu0 0.0
        %568 = vmatprep.subr.mxu0 0.0
        %569 = vmatpush1.msra.mxu0 0.0
        %570 = vmatprep.subr.mxu0 0.0
        %571 = vmatpush1.msra.mxu0 0.0
        %572 = vmatprep.subr.mxu0 0.0
        %573 = vmatpush1.msra.mxu0 0.0
        %574 = vmatprep.subr.mxu0 0.0
        %575 = vmatpush1.msra.mxu0 0.0
        %576 = vmatprep.subr.mxu0 0.0
        %577 = vmatpush1.msra.mxu0 0.0
        %578 = vmatprep.subr.mxu0 0.0
        %579 = vmatpush1.msra.mxu0 0.0
        %580 = vmatprep.subr.mxu0 0.0
        %581 = vmatpush1.msra.mxu0 0.0
        %582 = vmatprep.subr.mxu0 0.0
        %583 = vmatpush1.msra.mxu0 0.0
        %584 = vmatprep.subr.mxu0 0.0
        %585 = vmatpush1.msra.mxu0 0.0
        %586 = vmatprep.subr.mxu0 0.0
        %587 = vmatpush1.msra.mxu0 0.0
        %588 = vmatprep.subr.mxu0 0.0
        %589 = vmatpush1.msra.mxu0 0.0
        %590 = vmatprep.subr.mxu0 0.0
        %591 = vmatpush1.msra.mxu0 0.0
        %592 = vmatprep.subr.mxu0 0.0
        %593 = vmatpush1.msra.mxu0 0.0
        %594 = vmatprep.subr.mxu0 0.0
        %595 = vmatpush1.msra.mxu0 0.0
        %596 = vmatprep.mubr.f32.mxu0 0.0
        %597 = vmatmul.mubr.f32.gmra.mrb[0].mxu0 %v395
        %v598 = vpop.f32.mrb[0].mxu0
        %v599 = vadd.f32 %v376, %v598
        %v600 = vpop.f32.mrb[0].mxu0
        %v601 = vadd.f32 %v376, %v600
        %602 = vmatprep.mubr.f32.mxu0 0.0
        %603 = vmatmul.mubr.f32.gmra.mrb[0].mxu0 %v398
        %v604 = vpop.f32.mrb[0].mxu0
        %v605 = vadd.f32 %v381, %v604
        %v606 = vpop.f32.mrb[0].mxu0
        %v607 = vadd.f32 %v381, %v606
        %608 = vmatprep.mubr.f32.mxu0 0.0
        %609 = vmatmul.mubr.f32.gmra.mrb[0].mxu0 %v401
        %v610 = vpop.f32.mrb[0].mxu0
        %v611 = vadd.f32 %v386, %v610
        %v612 = vpop.f32.mrb[0].mxu0
        %v613 = vadd.f32 %v386, %v612
        %614 = vmatprep.mubr.f32.mxu0 0.0
        %615 = vmatmul.mubr.f32.gmra.mrb[0].mxu0 %v404
        %v616 = vpop.f32.mrb[0].mxu0
        %v617 = vadd.f32 %v391, %v616
        %v618 = vpop.f32.mrb[0].mxu0
        %v619 = vadd.f32 %v391, %v618
        %620 = vdwg.mxu0
        %621 = vmatprep.subr.mxu0 %v423
        %622 = vmatpush1.msra.mxu0 %v420
        %623 = vmatprep.subr.mxu0 0.0
        %624 = vmatpush1.msra.mxu0 0.0
        %625 = vmatprep.subr.mxu0 0.0
        %626 = vmatpush1.msra.mxu0 0.0
        %627 = vmatprep.subr.mxu0 0.0
        %628 = vmatpush1.msra.mxu0 0.0
        %629 = vmatprep.subr.mxu0 0.0
        %630 = vmatpush1.msra.mxu0 0.0
        %631 = vmatprep.subr.mxu0 0.0
        %632 = vmatpush1.msra.mxu0 0.0
        %633 = vmatprep.subr.mxu0 0.0
        %634 = vmatpush1.msra.mxu0 0.0
        %635 = vmatprep.subr.mxu0 0.0
        %636 = vmatpush1.msra.mxu0 0.0
        %637 = vmatprep.subr.mxu0 0.0
        %638 = vmatpush1.msra.mxu0 0.0
        %639 = vmatprep.subr.mxu0 0.0
        %640 = vmatpush1.msra.mxu0 0.0
        %641 = vmatprep.subr.mxu0 0.0
        %642 = vmatpush1.msra.mxu0 0.0
        %643 = vmatprep.subr.mxu0 0.0
        %644 = vmatpush1.msra.mxu0 0.0
        %645 = vmatprep.subr.mxu0 0.0
        %646 = vmatpush1.msra.mxu0 0.0
        %647 = vmatprep.subr.mxu0 0.0
        %648 = vmatpush1.msra.mxu0 0.0
        %649 = vmatprep.subr.mxu0 0.0
        %650 = vmatpush1.msra.mxu0 0.0
        %651 = vmatprep.subr.mxu0 0.0
        %652 = vmatpush1.msra.mxu0 0.0
        %653 = vmatprep.subr.mxu0 0.0
        %654 = vmatpush1.msra.mxu0 0.0
        %655 = vmatprep.subr.mxu0 0.0
        %656 = vmatpush1.msra.mxu0 0.0
        %657 = vmatprep.subr.mxu0 0.0
        %658 = vmatpush1.msra.mxu0 0.0
        %659 = vmatprep.subr.mxu0 0.0
        %660 = vmatpush1.msra.mxu0 0.0
        %661 = vmatprep.subr.mxu0 0.0
        %662 = vmatpush1.msra.mxu0 0.0
        %663 = vmatprep.subr.mxu0 0.0
        %664 = vmatpush1.msra.mxu0 0.0
        %665 = vmatprep.subr.mxu0 0.0
        %666 = vmatpush1.msra.mxu0 0.0
        %667 = vmatprep.subr.mxu0 0.0
        %668 = vmatpush1.msra.mxu0 0.0
        %669 = vmatprep.subr.mxu0 0.0
        %670 = vmatpush1.msra.mxu0 0.0
        %671 = vmatprep.subr.mxu0 0.0
        %672 = vmatpush1.msra.mxu0 0.0
        %673 = vmatprep.subr.mxu0 0.0
        %674 = vmatpush1.msra.mxu0 0.0
        %675 = vmatprep.subr.mxu0 0.0
        %676 = vmatpush1.msra.mxu0 0.0
        %677 = vmatprep.subr.mxu0 0.0
        %678 = vmatpush1.msra.mxu0 0.0
        %679 = vmatprep.subr.mxu0 0.0
        %680 = vmatpush1.msra.mxu0 0.0
        %681 = vmatprep.subr.mxu0 0.0
        %682 = vmatpush1.msra.mxu0 0.0
        %683 = vmatprep.subr.mxu0 0.0
        %684 = vmatpush1.msra.mxu0 0.0
        %685 = vmatprep.mubr.f32.mxu0 0.0
        %686 = vmatmul.mubr.f32.gmra.mrb[0].mxu0 %v395
        %v687 = vpop.f32.mrb[0].mxu0
        %v688 = vadd.f32 %v376, %v687
        %v689 = vpop.f32.mrb[0].mxu0
        %v690 = vadd.f32 %v376, %v689
        %691 = vmatprep.mubr.f32.mxu0 0.0
        %692 = vmatmul.mubr.f32.gmra.mrb[0].mxu0 %v398
        %v693 = vpop.f32.mrb[0].mxu0
        %v694 = vadd.f32 %v381, %v693
        %v695 = vpop.f32.mrb[0].mxu0
        %v696 = vadd.f32 %v381, %v695
        %697 = vmatprep.mubr.f32.mxu0 0.0
        %698 = vmatmul.mubr.f32.gmra.mrb[0].mxu0 %v401
        %v699 = vpop.f32.mrb[0].mxu0
        %v700 = vadd.f32 %v386, %v699
        %v701 = vpop.f32.mrb[0].mxu0
        %v702 = vadd.f32 %v386, %v701
        %703 = vmatprep.mubr.f32.mxu0 0.0
        %704 = vmatmul.mubr.f32.gmra.mrb[0].mxu0 %v404
        %v705 = vpop.f32.mrb[0].mxu0
        %v706 = vadd.f32 %v391, %v705
        %v707 = vpop.f32.mrb[0].mxu0
        %v708 = vadd.f32 %v391, %v707
        %709 = vdwg.mxu0
        %710 = vmatprep.subr.mxu0 %v429
        %711 = vmatpush1.msra.mxu0 %v426
        %712 = vmatprep.subr.mxu0 0.0
        %713 = vmatpush1.msra.mxu0 0.0
        %714 = vmatprep.subr.mxu0 0.0
        %715 = vmatpush1.msra.mxu0 0.0
        %716 = vmatprep.subr.mxu0 0.0
        %717 = vmatpush1.msra.mxu0 0.0
        %718 = vmatprep.subr.mxu0 0.0
        %719 = vmatpush1.msra.mxu0 0.0
        %720 = vmatprep.subr.mxu0 0.0
        %721 = vmatpush1.msra.mxu0 0.0
        %722 = vmatprep.subr.mxu0 0.0
        %723 = vmatpush1.msra.mxu0 0.0
        %724 = vmatprep.subr.mxu0 0.0
        %725 = vmatpush1.msra.mxu0 0.0
        %726 = vmatprep.subr.mxu0 0.0
        %727 = vmatpush1.msra.mxu0 0.0
        %728 = vmatprep.subr.mxu0 0.0
        %729 = vmatpush1.msra.mxu0 0.0
        %730 = vmatprep.subr.mxu0 0.0
        %731 = vmatpush1.msra.mxu0 0.0
        %732 = vmatprep.subr.mxu0 0.0
        %733 = vmatpush1.msra.mxu0 0.0
        %734 = vmatprep.subr.mxu0 0.0
        %735 = vmatpush1.msra.mxu0 0.0
        %736 = vmatprep.subr.mxu0 0.0
        %737 = vmatpush1.msra.mxu0 0.0
        %738 = vmatprep.subr.mxu0 0.0
        %739 = vmatpush1.msra.mxu0 0.0
        %740 = vmatprep.subr.mxu0 0.0
        %741 = vmatpush1.msra.mxu0 0.0
        %742 = vmatprep.subr.mxu0 0.0
        %743 = vmatpush1.msra.mxu0 0.0
        %744 = vmatprep.subr.mxu0 0.0
        %745 = vmatpush1.msra.mxu0 0.0
        %746 = vmatprep.subr.mxu0 0.0
        %747 = vmatpush1.msra.mxu0 0.0
        %748 = vmatprep.subr.mxu0 0.0
        %749 = vmatpush1.msra.mxu0 0.0
        %750 = vmatprep.subr.mxu0 0.0
        %751 = vmatpush1.msra.mxu0 0.0
        %752 = vmatprep.subr.mxu0 0.0
        %753 = vmatpush1.msra.mxu0 0.0
        %754 = vmatprep.subr.mxu0 0.0
        %755 = vmatpush1.msra.mxu0 0.0
        %756 = vmatprep.subr.mxu0 0.0
        %757 = vmatpush1.msra.mxu0 0.0
        %758 = vmatprep.subr.mxu0 0.0
        %759 = vmatpush1.msra.mxu0 0.0
        %760 = vmatprep.subr.mxu0 0.0
        %761 = vmatpush1.msra.mxu0 0.0
        %762 = vmatprep.subr.mxu0 0.0
        %763 = vmatpush1.msra.mxu0 0.0
        %764 = vmatprep.subr.mxu0 0.0
        %765 = vmatpush1.msra.mxu0 0.0
        %766 = vmatprep.subr.mxu0 0.0
        %767 = vmatpush1.msra.mxu0 0.0
        %768 = vmatprep.subr.mxu0 0.0
        %769 = vmatpush1.msra.mxu0 0.0
        %770 = vmatprep.subr.mxu0 0.0
        %771 = vmatpush1.msra.mxu0 0.0
        %772 = vmatprep.subr.mxu0 0.0
        %773 = vmatpush1.msra.mxu0 0.0
        %774 = vmatprep.mubr.f32.mxu0 0.0
        %775 = vmatmul.mubr.f32.gmra.mrb[0].mxu0 %v395
        %v776 = vpop.f32.mrb[0].mxu0
        %v777 = vadd.f32 %v376, %v776
        %v778 = vpop.f32.mrb[0].mxu0
        %v779 = vadd.f32 %v376, %v778
        %780 = vmatprep.mubr.f32.mxu0 0.0
        %781 = vmatmul.mubr.f32.gmra.mrb[0].mxu0 %v398
        %v782 = vpop.f32.mrb[0].mxu0
        %v783 = vadd.f32 %v381, %v782
        %v784 = vpop.f32.mrb[0].mxu0
        %v785 = vadd.f32 %v381, %v784
        %786 = vmatprep.mubr.f32.mxu0 0.0
        %787 = vmatmul.mubr.f32.gmra.mrb[0].mxu0 %v401
        %v788 = vpop.f32.mrb[0].mxu0
        %v789 = vadd.f32 %v386, %v788
        %v790 = vpop.f32.mrb[0].mxu0
        %v791 = vadd.f32 %v386, %v790
        %792 = vmatprep.mubr.f32.mxu0 0.0
        %793 = vmatmul.mubr.f32.gmra.mrb[0].mxu0 %v404
        %v794 = vpop.f32.mrb[0].mxu0
        %v795 = vadd.f32 %v391, %v794
        %v796 = vpop.f32.mrb[0].mxu0
        %v797 = vadd.f32 %v391, %v796
        %798 = vdwg.mxu0
        %799 = vmatprep.subr.mxu0 %v435
        %800 = vmatpush1.msra.mxu0 %v432
        %801 = vmatprep.subr.mxu0 0.0
        %802 = vmatpush1.msra.mxu0 0.0
        %803 = vmatprep.subr.mxu0 0.0
        %804 = vmatpush1.msra.mxu0 0.0
        %805 = vmatprep.subr.mxu0 0.0
        %806 = vmatpush1.msra.mxu0 0.0
        %807 = vmatprep.subr.mxu0 0.0
        %808 = vmatpush1.msra.mxu0 0.0
        %809 = vmatprep.subr.mxu0 0.0
        %810 = vmatpush1.msra.mxu0 0.0
        %811 = vmatprep.subr.mxu0 0.0
        %812 = vmatpush1.msra.mxu0 0.0
        %813 = vmatprep.subr.mxu0 0.0
        %814 = vmatpush1.msra.mxu0 0.0
        %815 = vmatprep.subr.mxu0 0.0
        %816 = vmatpush1.msra.mxu0 0.0
        %817 = vmatprep.subr.mxu0 0.0
        %818 = vmatpush1.msra.mxu0 0.0
        %819 = vmatprep.subr.mxu0 0.0
        %820 = vmatpush1.msra.mxu0 0.0
        %821 = vmatprep.subr.mxu0 0.0
        %822 = vmatpush1.msra.mxu0 0.0
        %823 = vmatprep.subr.mxu0 0.0
        %824 = vmatpush1.msra.mxu0 0.0
        %825 = vmatprep.subr.mxu0 0.0
        %826 = vmatpush1.msra.mxu0 0.0
        %827 = vmatprep.subr.mxu0 0.0
        %828 = vmatpush1.msra.mxu0 0.0
        %829 = vmatprep.subr.mxu0 0.0
        %830 = vmatpush1.msra.mxu0 0.0
        %831 = vmatprep.subr.mxu0 0.0
        %832 = vmatpush1.msra.mxu0 0.0
        %833 = vmatprep.subr.mxu0 0.0
        %834 = vmatpush1.msra.mxu0 0.0
        %835 = vmatprep.subr.mxu0 0.0
        %836 = vmatpush1.msra.mxu0 0.0
        %837 = vmatprep.subr.mxu0 0.0
        %838 = vmatpush1.msra.mxu0 0.0
        %839 = vmatprep.subr.mxu0 0.0
        %840 = vmatpush1.msra.mxu0 0.0
        %841 = vmatprep.subr.mxu0 0.0
        %842 = vmatpush1.msra.mxu0 0.0
        %843 = vmatprep.subr.mxu0 0.0
        %844 = vmatpush1.msra.mxu0 0.0
        %845 = vmatprep.subr.mxu0 0.0
        %846 = vmatpush1.msra.mxu0 0.0
        %847 = vmatprep.subr.mxu0 0.0
        %848 = vmatpush1.msra.mxu0 0.0
        %849 = vmatprep.subr.mxu0 0.0
        %850 = vmatpush1.msra.mxu0 0.0
        %851 = vmatprep.subr.mxu0 0.0
        %852 = vmatpush1.msra.mxu0 0.0
        %853 = vmatprep.subr.mxu0 0.0
        %854 = vmatpush1.msra.mxu0 0.0
        %855 = vmatprep.subr.mxu0 0.0
        %856 = vmatpush1.msra.mxu0 0.0
        %857 = vmatprep.subr.mxu0 0.0
        %858 = vmatpush1.msra.mxu0 0.0
        %859 = vmatprep.subr.mxu0 0.0
        %860 = vmatpush1.msra.mxu0 0.0
        %861 = vmatprep.subr.mxu0 0.0
        %862 = vmatpush1.msra.mxu0 0.0
        %863 = vmatprep.mubr.f32.mxu0 0.0
        %864 = vmatmul.mubr.f32.gmra.mrb[0].mxu0 %v395
        %v865 = vpop.f32.mrb[0].mxu0
        %v866 = vadd.f32 %v376, %v865
        %v867 = vpop.f32.mrb[0].mxu0
        %v868 = vadd.f32 %v376, %v867
        %869 = vmatprep.mubr.f32.mxu0 0.0
        %870 = vmatmul.mubr.f32.gmra.mrb[0].mxu0 %v398
        %v871 = vpop.f32.mrb[0].mxu0
        %v872 = vadd.f32 %v381, %v871
        %v873 = vpop.f32.mrb[0].mxu0
        %v874 = vadd.f32 %v381, %v873
        %875 = vmatprep.mubr.f32.mxu0 0.0
        %876 = vmatmul.mubr.f32.gmra.mrb[0].mxu0 %v401
        %v877 = vpop.f32.mrb[0].mxu0
        %v878 = vadd.f32 %v386, %v877
        %v879 = vpop.f32.mrb[0].mxu0
        %v880 = vadd.f32 %v386, %v879
        %881 = vmatprep.mubr.f32.mxu0 0.0
        %882 = vmatmul.mubr.f32.gmra.mrb[0].mxu0 %v404
        %v883 = vpop.f32.mrb[0].mxu0
        %v884 = vadd.f32 %v391, %v883
        %v885 = vpop.f32.mrb[0].mxu0
        %v886 = vadd.f32 %v391, %v885
        %887 = vdwg.mxu0
        %888 = vmatprep.subr.mxu0 %v441
        %889 = vmatpush1.msra.mxu0 %v438
        %890 = vmatprep.subr.mxu0 0.0
        %891 = vmatpush1.msra.mxu0 0.0
        %892 = vmatprep.subr.mxu0 0.0
        %893 = vmatpush1.msra.mxu0 0.0
        %894 = vmatprep.subr.mxu0 0.0
        %895 = vmatpush1.msra.mxu0 0.0
        %896 = vmatprep.subr.mxu0 0.0
        %897 = vmatpush1.msra.mxu0 0.0
        %898 = vmatprep.subr.mxu0 0.0
        %899 = vmatpush1.msra.mxu0 0.0
        %900 = vmatprep.subr.mxu0 0.0
        %901 = vmatpush1.msra.mxu0 0.0
        %902 = vmatprep.subr.mxu0 0.0
        %903 = vmatpush1.msra.mxu0 0.0
        %904 = vmatprep.subr.mxu0 0.0
        %905 = vmatpush1.msra.mxu0 0.0
        %906 = vmatprep.subr.mxu0 0.0
        %907 = vmatpush1.msra.mxu0 0.0
        %908 = vmatprep.subr.mxu0 0.0
        %909 = vmatpush1.msra.mxu0 0.0
        %910 = vmatprep.subr.mxu0 0.0
        %911 = vmatpush1.msra.mxu0 0.0
        %912 = vmatprep.subr.mxu0 0.0
        %913 = vmatpush1.msra.mxu0 0.0
        %914 = vmatprep.subr.mxu0 0.0
        %915 = vmatpush1.msra.mxu0 0.0
        %916 = vmatprep.subr.mxu0 0.0
        %917 = vmatpush1.msra.mxu0 0.0
        %918 = vmatprep.subr.mxu0 0.0
        %919 = vmatpush1.msra.mxu0 0.0
        %920 = vmatprep.subr.mxu0 0.0
        %921 = vmatpush1.msra.mxu0 0.0
        %922 = vmatprep.subr.mxu0 0.0
        %923 = vmatpush1.msra.mxu0 0.0
        %924 = vmatprep.subr.mxu0 0.0
        %925 = vmatpush1.msra.mxu0 0.0
        %926 = vmatprep.subr.mxu0 0.0
        %927 = vmatpush1.msra.mxu0 0.0
        %928 = vmatprep.subr.mxu0 0.0
        %929 = vmatpush1.msra.mxu0 0.0
        %930 = vmatprep.subr.mxu0 0.0
        %931 = vmatpush1.msra.mxu0 0.0
        %932 = vmatprep.subr.mxu0 0.0
        %933 = vmatpush1.msra.mxu0 0.0
        %934 = vmatprep.subr.mxu0 0.0
        %935 = vmatpush1.msra.mxu0 0.0
        %936 = vmatprep.subr.mxu0 0.0
        %937 = vmatpush1.msra.mxu0 0.0
        %938 = vmatprep.subr.mxu0 0.0
        %939 = vmatpush1.msra.mxu0 0.0
        %940 = vmatprep.subr.mxu0 0.0
        %941 = vmatpush1.msra.mxu0 0.0
        %942 = vmatprep.subr.mxu0 0.0
        %943 = vmatpush1.msra.mxu0 0.0
        %944 = vmatprep.subr.mxu0 0.0
        %945 = vmatpush1.msra.mxu0 0.0
        %946 = vmatprep.subr.mxu0 0.0
        %947 = vmatpush1.msra.mxu0 0.0
        %948 = vmatprep.subr.mxu0 0.0
        %949 = vmatpush1.msra.mxu0 0.0
        %950 = vmatprep.subr.mxu0 0.0
        %951 = vmatpush1.msra.mxu0 0.0
        %952 = vmatprep.mubr.f32.mxu0 0.0
        %953 = vmatmul.mubr.f32.gmra.mrb[0].mxu0 %v395
        %v954 = vpop.f32.mrb[0].mxu0
        %v955 = vadd.f32 %v376, %v954
        %v956 = vpop.f32.mrb[0].mxu0
        %v957 = vadd.f32 %v376, %v956
        %958 = vmatprep.mubr.f32.mxu0 0.0
        %959 = vmatmul.mubr.f32.gmra.mrb[0].mxu0 %v398
        %v960 = vpop.f32.mrb[0].mxu0
        %v961 = vadd.f32 %v381, %v960
        %v962 = vpop.f32.mrb[0].mxu0
        %v963 = vadd.f32 %v381, %v962
        %964 = vmatprep.mubr.f32.mxu0 0.0
        %965 = vmatmul.mubr.f32.gmra.mrb[0].mxu0 %v401
        %v966 = vpop.f32.mrb[0].mxu0
        %v967 = vadd.f32 %v386, %v966
        %v968 = vpop.f32.mrb[0].mxu0
        %v969 = vadd.f32 %v386, %v968
        %970 = vmatprep.mubr.f32.mxu0 0.0
        %971 = vmatmul.mubr.f32.gmra.mrb[0].mxu0 %v404
        %v972 = vpop.f32.mrb[0].mxu0
        %v973 = vadd.f32 %v391, %v972
        %v974 = vpop.f32.mrb[0].mxu0
        %v975 = vadd.f32 %v391, %v974
        %976 = vdwg.mxu0
        %v977 = vand.u32 2147483647, %v510
        %v978 = vand.u32 2147483647, %v512
        %v979 = vand.u32 2147483647, %v599
        %v980 = vand.u32 2147483647, %v601
        %v981 = vand.u32 2147483647, %v688
        %v982 = vand.u32 2147483647, %v690
        %v983 = vand.u32 2147483647, %v777
        %v984 = vand.u32 2147483647, %v779
        %v985 = vand.u32 2147483647, %v866
        %v986 = vand.u32 2147483647, %v868
        %v987 = vand.u32 2147483647, %v955
        %v988 = vand.u32 2147483647, %v957
        %v989 = vand.u32 2147483647, %v516
        %v990 = vand.u32 2147483647, %v518
        %v991 = vand.u32 2147483647, %v605
        %v992 = vand.u32 2147483647, %v607
        %v993 = vand.u32 2147483647, %v694
        %v994 = vand.u32 2147483647, %v696
        %v995 = vand.u32 2147483647, %v783
        %v996 = vand.u32 2147483647, %v785
        %v997 = vand.u32 2147483647, %v872
        %v998 = vand.u32 2147483647, %v874
        %v999 = vand.u32 2147483647, %v961
        %v1000 = vand.u32 2147483647, %v963
        %v1001 = vand.u32 2147483647, %v522
        %v1002 = vand.u32 2147483647, %v524
        %v1003 = vand.u32 2147483647, %v611
        %v1004 = vand.u32 2147483647, %v613
        %v1005 = vand.u32 2147483647, %v700
        %v1006 = vand.u32 2147483647, %v702
        %v1007 = vand.u32 2147483647, %v789
        %v1008 = vand.u32 2147483647, %v791
        %v1009 = vand.u32 2147483647, %v878
        %v1010 = vand.u32 2147483647, %v880
        %v1011 = vand.u32 2147483647, %v967
        %v1012 = vand.u32 2147483647, %v969
        %v1013 = vand.u32 2147483647, %v528
        %v1014 = vand.u32 2147483647, %v530
        %v1015 = vand.u32 2147483647, %v617
        %v1016 = vand.u32 2147483647, %v619
        %v1017 = vand.u32 2147483647, %v706
        %v1018 = vand.u32 2147483647, %v708
        %v1019 = vand.u32 2147483647, %v795
        %v1020 = vand.u32 2147483647, %v797
        %v1021 = vand.u32 2147483647, %v884
        %v1022 = vand.u32 2147483647, %v886
        %v1023 = vand.u32 2147483647, %v973
        %v1024 = vand.u32 2147483647, %v975
        %v1025 = vmul.f32 %v977, -2.0
        %v1026 = vmul.f32 %v978, -2.0
        %v1027 = vmul.f32 %v979, -2.0
        %v1028 = vmul.f32 %v980, -2.0
        %v1029 = vmul.f32 %v981, -2.0
        %v1030 = vmul.f32 %v982, -2.0
        %v1031 = vmul.f32 %v983, -2.0
        %v1032 = vmul.f32 %v984, -2.0
        %v1033 = vmul.f32 %v985, -2.0
        %v1034 = vmul.f32 %v986, -2.0
        %v1035 = vmul.f32 %v987, -2.0
        %v1036 = vmul.f32 %v988, -2.0
        %v1037 = vmul.f32 %v989, -2.0
        %v1038 = vmul.f32 %v990, -2.0
        %v1039 = vmul.f32 %v991, -2.0
        %v1040 = vmul.f32 %v992, -2.0
        %v1041 = vmul.f32 %v993, -2.0
        %v1042 = vmul.f32 %v994, -2.0
        %v1043 = vmul.f32 %v995, -2.0
        %v1044 = vmul.f32 %v996, -2.0
        %v1045 = vmul.f32 %v997, -2.0
        %v1046 = vmul.f32 %v998, -2.0
        %v1047 = vmul.f32 %v999, -2.0
        %v1048 = vmul.f32 %v1000, -2.0
        %v1049 = vmul.f32 %v1001, -2.0
        %v1050 = vmul.f32 %v1002, -2.0
        %v1051 = vmul.f32 %v1003, -2.0
        %v1052 = vmul.f32 %v1004, -2.0
        %v1053 = vmul.f32 %v1005, -2.0
        %v1054 = vmul.f32 %v1006, -2.0
        %v1055 = vmul.f32 %v1007, -2.0
        %v1056 = vmul.f32 %v1008, -2.0
        %v1057 = vmul.f32 %v1009, -2.0
        %v1058 = vmul.f32 %v1010, -2.0
        %v1059 = vmul.f32 %v1011, -2.0
        %v1060 = vmul.f32 %v1012, -2.0
        %v1061 = vmul.f32 %v1013, -2.0
        %v1062 = vmul.f32 %v1014, -2.0
        %v1063 = vmul.f32 %v1015, -2.0
        %v1064 = vmul.f32 %v1016, -2.0
        %v1065 = vmul.f32 %v1017, -2.0
        %v1066 = vmul.f32 %v1018, -2.0
        %v1067 = vmul.f32 %v1019, -2.0
        %v1068 = vmul.f32 %v1020, -2.0
        %v1069 = vmul.f32 %v1021, -2.0
        %v1070 = vmul.f32 %v1022, -2.0
        %v1071 = vmul.f32 %v1023, -2.0
        %v1072 = vmul.f32 %v1024, -2.0
        %v1073 = vmul.f32 %v1025, 1.442695
        %v1074 = vpow.pop %v1073
        %v1075 = vmul.f32 %v1026, 1.442695
        %v1076 = vpow.pop %v1075
        %v1077 = vmul.f32 %v1027, 1.442695
        %v1078 = vpow.pop %v1077
        %v1079 = vmul.f32 %v1028, 1.442695
        %v1080 = vpow.pop %v1079
        %v1081 = vmul.f32 %v1029, 1.442695
        %v1082 = vpow.pop %v1081
        %v1083 = vmul.f32 %v1030, 1.442695
        %v1084 = vpow.pop %v1083
        %v1085 = vmul.f32 %v1031, 1.442695
        %v1086 = vpow.pop %v1085
        %v1087 = vmul.f32 %v1032, 1.442695
        %v1088 = vpow.pop %v1087
        %v1089 = vmul.f32 %v1033, 1.442695
        %v1090 = vpow.pop %v1089
        %v1091 = vmul.f32 %v1034, 1.442695
        %v1092 = vpow.pop %v1091
        %v1093 = vmul.f32 %v1035, 1.442695
        %v1094 = vpow.pop %v1093
        %v1095 = vmul.f32 %v1036, 1.442695
        %v1096 = vpow.pop %v1095
        %v1097 = vmul.f32 %v1037, 1.442695
        %v1098 = vpow.pop %v1097
        %v1099 = vmul.f32 %v1038, 1.442695
        %v1100 = vpow.pop %v1099
        %v1101 = vmul.f32 %v1039, 1.442695
        %v1102 = vpow.pop %v1101
        %v1103 = vmul.f32 %v1040, 1.442695
        %v1104 = vpow.pop %v1103
        %v1105 = vmul.f32 %v1041, 1.442695
        %v1106 = vpow.pop %v1105
        %v1107 = vmul.f32 %v1042, 1.442695
        %v1108 = vpow.pop %v1107
        %v1109 = vmul.f32 %v1043, 1.442695
        %v1110 = vpow.pop %v1109
        %v1111 = vmul.f32 %v1044, 1.442695
        %v1112 = vpow.pop %v1111
        %v1113 = vmul.f32 %v1045, 1.442695
        %v1114 = vpow.pop %v1113
        %v1115 = vmul.f32 %v1046, 1.442695
        %v1116 = vpow.pop %v1115
        %v1117 = vmul.f32 %v1047, 1.442695
        %v1118 = vpow.pop %v1117
        %v1119 = vmul.f32 %v1048, 1.442695
        %v1120 = vpow.pop %v1119
        %v1121 = vmul.f32 %v1049, 1.442695
        %v1122 = vpow.pop %v1121
        %v1123 = vmul.f32 %v1050, 1.442695
        %v1124 = vpow.pop %v1123
        %v1125 = vmul.f32 %v1051, 1.442695
        %v1126 = vpow.pop %v1125
        %v1127 = vmul.f32 %v1052, 1.442695
        %v1128 = vpow.pop %v1127
        %v1129 = vmul.f32 %v1053, 1.442695
        %v1130 = vpow.pop %v1129
        %v1131 = vmul.f32 %v1054, 1.442695
        %v1132 = vpow.pop %v1131
        %v1133 = vmul.f32 %v1055, 1.442695
        %v1134 = vpow.pop %v1133
        %v1135 = vmul.f32 %v1056, 1.442695
        %v1136 = vpow.pop %v1135
        %v1137 = vmul.f32 %v1057, 1.442695
        %v1138 = vpow.pop %v1137
        %v1139 = vmul.f32 %v1058, 1.442695
        %v1140 = vpow.pop %v1139
        %v1141 = vmul.f32 %v1059, 1.442695
        %v1142 = vpow.pop %v1141
        %v1143 = vmul.f32 %v1060, 1.442695
        %v1144 = vpow.pop %v1143
        %v1145 = vmul.f32 %v1061, 1.442695
        %v1146 = vpow.pop %v1145
        %v1147 = vmul.f32 %v1062, 1.442695
        %v1148 = vpow.pop %v1147
        %v1149 = vmul.f32 %v1063, 1.442695
        %v1150 = vpow.pop %v1149
        %v1151 = vmul.f32 %v1064, 1.442695
        %v1152 = vpow.pop %v1151
        %v1153 = vmul.f32 %v1065, 1.442695
        %v1154 = vpow.pop %v1153
        %v1155 = vmul.f32 %v1066, 1.442695
        %v1156 = vpow.pop %v1155
        %v1157 = vmul.f32 %v1067, 1.442695
        %v1158 = vpow.pop %v1157
        %v1159 = vmul.f32 %v1068, 1.442695
        %v1160 = vpow.pop %v1159
        %v1161 = vmul.f32 %v1069, 1.442695
        %v1162 = vpow.pop %v1161
        %v1163 = vmul.f32 %v1070, 1.442695
        %v1164 = vpow.pop %v1163
        %v1165 = vmul.f32 %v1071, 1.442695
        %v1166 = vpow.pop %v1165
        %v1167 = vmul.f32 %v1072, 1.442695
        %v1168 = vpow.pop %v1167
        %v1169 = vadd.f32 %v1074, 1.0
        %v1170 = vlog2.pop %v1169
        %v1171 = vmul.f32 %v1170, 0.6931472
        %v1172 = vmul.f32 -0.5, %v1074
        %v1173 = vadd.f32 %v1172, 1.0
        %v1174 = vmul.f32 %v1173, %v1074
        %v1175 = vand.u32 2147483647, %v1074
        %vm1176 = vcmp.lt.f32.partialorder %v1175, 0.0004427343
        %v1177 = vsel %vm1176, %v1174, %v1171
        %v1178 = vadd.f32 %v1076, 1.0
        %v1179 = vlog2.pop %v1178
        %v1180 = vmul.f32 %v1179, 0.6931472
        %v1181 = vmul.f32 -0.5, %v1076
        %v1182 = vadd.f32 %v1181, 1.0
        %v1183 = vmul.f32 %v1182, %v1076
        %v1184 = vand.u32 2147483647, %v1076
        %vm1185 = vcmp.lt.f32.partialorder %v1184, 0.0004427343
        %v1186 = vsel %vm1185, %v1183, %v1180
        %v1187 = vadd.f32 %v1078, 1.0
        %v1188 = vlog2.pop %v1187
        %v1189 = vmul.f32 %v1188, 0.6931472
        %v1190 = vmul.f32 -0.5, %v1078
        %v1191 = vadd.f32 %v1190, 1.0
        %v1192 = vmul.f32 %v1191, %v1078
        %v1193 = vand.u32 2147483647, %v1078
        %vm1194 = vcmp.lt.f32.partialorder %v1193, 0.0004427343
        %v1195 = vsel %vm1194, %v1192, %v1189
        %v1196 = vadd.f32 %v1080, 1.0
        %v1197 = vlog2.pop %v1196
        %v1198 = vmul.f32 %v1197, 0.6931472
        %v1199 = vmul.f32 -0.5, %v1080
        %v1200 = vadd.f32 %v1199, 1.0
        %v1201 = vmul.f32 %v1200, %v1080
        %v1202 = vand.u32 2147483647, %v1080
        %vm1203 = vcmp.lt.f32.partialorder %v1202, 0.0004427343
        %v1204 = vsel %vm1203, %v1201, %v1198
        %v1205 = vadd.f32 %v1082, 1.0
        %v1206 = vlog2.pop %v1205
        %v1207 = vmul.f32 %v1206, 0.6931472
        %v1208 = vmul.f32 -0.5, %v1082
        %v1209 = vadd.f32 %v1208, 1.0
        %v1210 = vmul.f32 %v1209, %v1082
        %v1211 = vand.u32 2147483647, %v1082
        %vm1212 = vcmp.lt.f32.partialorder %v1211, 0.0004427343
        %v1213 = vsel %vm1212, %v1210, %v1207
        %v1214 = vadd.f32 %v1084, 1.0
        %v1215 = vlog2.pop %v1214
        %v1216 = vmul.f32 %v1215, 0.6931472
        %v1217 = vmul.f32 -0.5, %v1084
        %v1218 = vadd.f32 %v1217, 1.0
        %v1219 = vmul.f32 %v1218, %v1084
        %v1220 = vand.u32 2147483647, %v1084
        %vm1221 = vcmp.lt.f32.partialorder %v1220, 0.0004427343
        %v1222 = vsel %vm1221, %v1219, %v1216
        %v1223 = vadd.f32 %v1086, 1.0
        %v1224 = vlog2.pop %v1223
        %v1225 = vmul.f32 %v1224, 0.6931472
        %v1226 = vmul.f32 -0.5, %v1086
        %v1227 = vadd.f32 %v1226, 1.0
        %v1228 = vmul.f32 %v1227, %v1086
        %v1229 = vand.u32 2147483647, %v1086
        %vm1230 = vcmp.lt.f32.partialorder %v1229, 0.0004427343
        %v1231 = vsel %vm1230, %v1228, %v1225
        %v1232 = vadd.f32 %v1088, 1.0
        %v1233 = vlog2.pop %v1232
        %v1234 = vmul.f32 %v1233, 0.6931472
        %v1235 = vmul.f32 -0.5, %v1088
        %v1236 = vadd.f32 %v1235, 1.0
        %v1237 = vmul.f32 %v1236, %v1088
        %v1238 = vand.u32 2147483647, %v1088
        %vm1239 = vcmp.lt.f32.partialorder %v1238, 0.0004427343
        %v1240 = vsel %vm1239, %v1237, %v1234
        %v1241 = vadd.f32 %v1090, 1.0
        %v1242 = vlog2.pop %v1241
        %v1243 = vmul.f32 %v1242, 0.6931472
        %v1244 = vmul.f32 -0.5, %v1090
        %v1245 = vadd.f32 %v1244, 1.0
        %v1246 = vmul.f32 %v1245, %v1090
        %v1247 = vand.u32 2147483647, %v1090
        %vm1248 = vcmp.lt.f32.partialorder %v1247, 0.0004427343
        %v1249 = vsel %vm1248, %v1246, %v1243
        %v1250 = vadd.f32 %v1092, 1.0
        %v1251 = vlog2.pop %v1250
        %v1252 = vmul.f32 %v1251, 0.6931472
        %v1253 = vmul.f32 -0.5, %v1092
        %v1254 = vadd.f32 %v1253, 1.0
        %v1255 = vmul.f32 %v1254, %v1092
        %v1256 = vand.u32 2147483647, %v1092
        %vm1257 = vcmp.lt.f32.partialorder %v1256, 0.0004427343
        %v1258 = vsel %vm1257, %v1255, %v1252
        %v1259 = vadd.f32 %v1094, 1.0
        %v1260 = vlog2.pop %v1259
        %v1261 = vmul.f32 %v1260, 0.6931472
        %v1262 = vmul.f32 -0.5, %v1094
        %v1263 = vadd.f32 %v1262, 1.0
        %v1264 = vmul.f32 %v1263, %v1094
        %v1265 = vand.u32 2147483647, %v1094
        %vm1266 = vcmp.lt.f32.partialorder %v1265, 0.0004427343
        %v1267 = vsel %vm1266, %v1264, %v1261
        %v1268 = vadd.f32 %v1096, 1.0
        %v1269 = vlog2.pop %v1268
        %v1270 = vmul.f32 %v1269, 0.6931472
        %v1271 = vmul.f32 -0.5, %v1096
        %v1272 = vadd.f32 %v1271, 1.0
        %v1273 = vmul.f32 %v1272, %v1096
        %v1274 = vand.u32 2147483647, %v1096
        %vm1275 = vcmp.lt.f32.partialorder %v1274, 0.0004427343
        %v1276 = vsel %vm1275, %v1273, %v1270
        %v1277 = vadd.f32 %v1098, 1.0
        %v1278 = vlog2.pop %v1277
        %v1279 = vmul.f32 %v1278, 0.6931472
        %v1280 = vmul.f32 -0.5, %v1098
        %v1281 = vadd.f32 %v1280, 1.0
        %v1282 = vmul.f32 %v1281, %v1098
        %v1283 = vand.u32 2147483647, %v1098
        %vm1284 = vcmp.lt.f32.partialorder %v1283, 0.0004427343
        %v1285 = vsel %vm1284, %v1282, %v1279
        %v1286 = vadd.f32 %v1100, 1.0
        %v1287 = vlog2.pop %v1286
        %v1288 = vmul.f32 %v1287, 0.6931472
        %v1289 = vmul.f32 -0.5, %v1100
        %v1290 = vadd.f32 %v1289, 1.0
        %v1291 = vmul.f32 %v1290, %v1100
        %v1292 = vand.u32 2147483647, %v1100
        %vm1293 = vcmp.lt.f32.partialorder %v1292, 0.0004427343
        %v1294 = vsel %vm1293, %v1291, %v1288
        %v1295 = vadd.f32 %v1102, 1.0
        %v1296 = vlog2.pop %v1295
        %v1297 = vmul.f32 %v1296, 0.6931472
        %v1298 = vmul.f32 -0.5, %v1102
        %v1299 = vadd.f32 %v1298, 1.0
        %v1300 = vmul.f32 %v1299, %v1102
        %v1301 = vand.u32 2147483647, %v1102
        %vm1302 = vcmp.lt.f32.partialorder %v1301, 0.0004427343
        %v1303 = vsel %vm1302, %v1300, %v1297
        %v1304 = vadd.f32 %v1104, 1.0
        %v1305 = vlog2.pop %v1304
        %v1306 = vmul.f32 %v1305, 0.6931472
        %v1307 = vmul.f32 -0.5, %v1104
        %v1308 = vadd.f32 %v1307, 1.0
        %v1309 = vmul.f32 %v1308, %v1104
        %v1310 = vand.u32 2147483647, %v1104
        %vm1311 = vcmp.lt.f32.partialorder %v1310, 0.0004427343
        %v1312 = vsel %vm1311, %v1309, %v1306
        %v1313 = vadd.f32 %v1106, 1.0
        %v1314 = vlog2.pop %v1313
        %v1315 = vmul.f32 %v1314, 0.6931472
        %v1316 = vmul.f32 -0.5, %v1106
        %v1317 = vadd.f32 %v1316, 1.0
        %v1318 = vmul.f32 %v1317, %v1106
        %v1319 = vand.u32 2147483647, %v1106
        %vm1320 = vcmp.lt.f32.partialorder %v1319, 0.0004427343
        %v1321 = vsel %vm1320, %v1318, %v1315
        %v1322 = vadd.f32 %v1108, 1.0
        %v1323 = vlog2.pop %v1322
        %v1324 = vmul.f32 %v1323, 0.6931472
        %v1325 = vmul.f32 -0.5, %v1108
        %v1326 = vadd.f32 %v1325, 1.0
        %v1327 = vmul.f32 %v1326, %v1108
        %v1328 = vand.u32 2147483647, %v1108
        %vm1329 = vcmp.lt.f32.partialorder %v1328, 0.0004427343
        %v1330 = vsel %vm1329, %v1327, %v1324
        %v1331 = vadd.f32 %v1110, 1.0
        %v1332 = vlog2.pop %v1331
        %v1333 = vmul.f32 %v1332, 0.6931472
        %v1334 = vmul.f32 -0.5, %v1110
        %v1335 = vadd.f32 %v1334, 1.0
        %v1336 = vmul.f32 %v1335, %v1110
        %v1337 = vand.u32 2147483647, %v1110
        %vm1338 = vcmp.lt.f32.partialorder %v1337, 0.0004427343
        %v1339 = vsel %vm1338, %v1336, %v1333
        %v1340 = vadd.f32 %v1112, 1.0
        %v1341 = vlog2.pop %v1340
        %v1342 = vmul.f32 %v1341, 0.6931472
        %v1343 = vmul.f32 -0.5, %v1112
        %v1344 = vadd.f32 %v1343, 1.0
        %v1345 = vmul.f32 %v1344, %v1112
        %v1346 = vand.u32 2147483647, %v1112
        %vm1347 = vcmp.lt.f32.partialorder %v1346, 0.0004427343
        %v1348 = vsel %vm1347, %v1345, %v1342
        %v1349 = vadd.f32 %v1114, 1.0
        %v1350 = vlog2.pop %v1349
        %v1351 = vmul.f32 %v1350, 0.6931472
        %v1352 = vmul.f32 -0.5, %v1114
        %v1353 = vadd.f32 %v1352, 1.0
        %v1354 = vmul.f32 %v1353, %v1114
        %v1355 = vand.u32 2147483647, %v1114
        %vm1356 = vcmp.lt.f32.partialorder %v1355, 0.0004427343
        %v1357 = vsel %vm1356, %v1354, %v1351
        %v1358 = vadd.f32 %v1116, 1.0
        %v1359 = vlog2.pop %v1358
        %v1360 = vmul.f32 %v1359, 0.6931472
        %v1361 = vmul.f32 -0.5, %v1116
        %v1362 = vadd.f32 %v1361, 1.0
        %v1363 = vmul.f32 %v1362, %v1116
        %v1364 = vand.u32 2147483647, %v1116
        %vm1365 = vcmp.lt.f32.partialorder %v1364, 0.0004427343
        %v1366 = vsel %vm1365, %v1363, %v1360
        %v1367 = vadd.f32 %v1118, 1.0
        %v1368 = vlog2.pop %v1367
        %v1369 = vmul.f32 %v1368, 0.6931472
        %v1370 = vmul.f32 -0.5, %v1118
        %v1371 = vadd.f32 %v1370, 1.0
        %v1372 = vmul.f32 %v1371, %v1118
        %v1373 = vand.u32 2147483647, %v1118
        %vm1374 = vcmp.lt.f32.partialorder %v1373, 0.0004427343
        %v1375 = vsel %vm1374, %v1372, %v1369
        %v1376 = vadd.f32 %v1120, 1.0
        %v1377 = vlog2.pop %v1376
        %v1378 = vmul.f32 %v1377, 0.6931472
        %v1379 = vmul.f32 -0.5, %v1120
        %v1380 = vadd.f32 %v1379, 1.0
        %v1381 = vmul.f32 %v1380, %v1120
        %v1382 = vand.u32 2147483647, %v1120
        %vm1383 = vcmp.lt.f32.partialorder %v1382, 0.0004427343
        %v1384 = vsel %vm1383, %v1381, %v1378
        %v1385 = vadd.f32 %v1122, 1.0
        %v1386 = vlog2.pop %v1385
        %v1387 = vmul.f32 %v1386, 0.6931472
        %v1388 = vmul.f32 -0.5, %v1122
        %v1389 = vadd.f32 %v1388, 1.0
        %v1390 = vmul.f32 %v1389, %v1122
        %v1391 = vand.u32 2147483647, %v1122
        %vm1392 = vcmp.lt.f32.partialorder %v1391, 0.0004427343
        %v1393 = vsel %vm1392, %v1390, %v1387
        %v1394 = vadd.f32 %v1124, 1.0
        %v1395 = vlog2.pop %v1394
        %v1396 = vmul.f32 %v1395, 0.6931472
        %v1397 = vmul.f32 -0.5, %v1124
        %v1398 = vadd.f32 %v1397, 1.0
        %v1399 = vmul.f32 %v1398, %v1124
        %v1400 = vand.u32 2147483647, %v1124
        %vm1401 = vcmp.lt.f32.partialorder %v1400, 0.0004427343
        %v1402 = vsel %vm1401, %v1399, %v1396
        %v1403 = vadd.f32 %v1126, 1.0
        %v1404 = vlog2.pop %v1403
        %v1405 = vmul.f32 %v1404, 0.6931472
        %v1406 = vmul.f32 -0.5, %v1126
        %v1407 = vadd.f32 %v1406, 1.0
        %v1408 = vmul.f32 %v1407, %v1126
        %v1409 = vand.u32 2147483647, %v1126
        %vm1410 = vcmp.lt.f32.partialorder %v1409, 0.0004427343
        %v1411 = vsel %vm1410, %v1408, %v1405
        %v1412 = vadd.f32 %v1128, 1.0
        %v1413 = vlog2.pop %v1412
        %v1414 = vmul.f32 %v1413, 0.6931472
        %v1415 = vmul.f32 -0.5, %v1128
        %v1416 = vadd.f32 %v1415, 1.0
        %v1417 = vmul.f32 %v1416, %v1128
        %v1418 = vand.u32 2147483647, %v1128
        %vm1419 = vcmp.lt.f32.partialorder %v1418, 0.0004427343
        %v1420 = vsel %vm1419, %v1417, %v1414
        %v1421 = vadd.f32 %v1130, 1.0
        %v1422 = vlog2.pop %v1421
        %v1423 = vmul.f32 %v1422, 0.6931472
        %v1424 = vmul.f32 -0.5, %v1130
        %v1425 = vadd.f32 %v1424, 1.0
        %v1426 = vmul.f32 %v1425, %v1130
        %v1427 = vand.u32 2147483647, %v1130
        %vm1428 = vcmp.lt.f32.partialorder %v1427, 0.0004427343
        %v1429 = vsel %vm1428, %v1426, %v1423
        %v1430 = vadd.f32 %v1132, 1.0
        %v1431 = vlog2.pop %v1430
        %v1432 = vmul.f32 %v1431, 0.6931472
        %v1433 = vmul.f32 -0.5, %v1132
        %v1434 = vadd.f32 %v1433, 1.0
        %v1435 = vmul.f32 %v1434, %v1132
        %v1436 = vand.u32 2147483647, %v1132
        %vm1437 = vcmp.lt.f32.partialorder %v1436, 0.0004427343
        %v1438 = vsel %vm1437, %v1435, %v1432
        %v1439 = vadd.f32 %v1134, 1.0
        %v1440 = vlog2.pop %v1439
        %v1441 = vmul.f32 %v1440, 0.6931472
        %v1442 = vmul.f32 -0.5, %v1134
        %v1443 = vadd.f32 %v1442, 1.0
        %v1444 = vmul.f32 %v1443, %v1134
        %v1445 = vand.u32 2147483647, %v1134
        %vm1446 = vcmp.lt.f32.partialorder %v1445, 0.0004427343
        %v1447 = vsel %vm1446, %v1444, %v1441
        %v1448 = vadd.f32 %v1136, 1.0
        %v1449 = vlog2.pop %v1448
        %v1450 = vmul.f32 %v1449, 0.6931472
        %v1451 = vmul.f32 -0.5, %v1136
        %v1452 = vadd.f32 %v1451, 1.0
        %v1453 = vmul.f32 %v1452, %v1136
        %v1454 = vand.u32 2147483647, %v1136
        %vm1455 = vcmp.lt.f32.partialorder %v1454, 0.0004427343
        %v1456 = vsel %vm1455, %v1453, %v1450
        %v1457 = vadd.f32 %v1138, 1.0
        %v1458 = vlog2.pop %v1457
        %v1459 = vmul.f32 %v1458, 0.6931472
        %v1460 = vmul.f32 -0.5, %v1138
        %v1461 = vadd.f32 %v1460, 1.0
        %v1462 = vmul.f32 %v1461, %v1138
        %v1463 = vand.u32 2147483647, %v1138
        %vm1464 = vcmp.lt.f32.partialorder %v1463, 0.0004427343
        %v1465 = vsel %vm1464, %v1462, %v1459
        %v1466 = vadd.f32 %v1140, 1.0
        %v1467 = vlog2.pop %v1466
        %v1468 = vmul.f32 %v1467, 0.6931472
        %v1469 = vmul.f32 -0.5, %v1140
        %v1470 = vadd.f32 %v1469, 1.0
        %v1471 = vmul.f32 %v1470, %v1140
        %v1472 = vand.u32 2147483647, %v1140
        %vm1473 = vcmp.lt.f32.partialorder %v1472, 0.0004427343
        %v1474 = vsel %vm1473, %v1471, %v1468
        %v1475 = vadd.f32 %v1142, 1.0
        %v1476 = vlog2.pop %v1475
        %v1477 = vmul.f32 %v1476, 0.6931472
        %v1478 = vmul.f32 -0.5, %v1142
        %v1479 = vadd.f32 %v1478, 1.0
        %v1480 = vmul.f32 %v1479, %v1142
        %v1481 = vand.u32 2147483647, %v1142
        %vm1482 = vcmp.lt.f32.partialorder %v1481, 0.0004427343
        %v1483 = vsel %vm1482, %v1480, %v1477
        %v1484 = vadd.f32 %v1144, 1.0
        %v1485 = vlog2.pop %v1484
        %v1486 = vmul.f32 %v1485, 0.6931472
        %v1487 = vmul.f32 -0.5, %v1144
        %v1488 = vadd.f32 %v1487, 1.0
        %v1489 = vmul.f32 %v1488, %v1144
        %v1490 = vand.u32 2147483647, %v1144
        %vm1491 = vcmp.lt.f32.partialorder %v1490, 0.0004427343
        %v1492 = vsel %vm1491, %v1489, %v1486
        %v1493 = vadd.f32 %v1146, 1.0
        %v1494 = vlog2.pop %v1493
        %v1495 = vmul.f32 %v1494, 0.6931472
        %v1496 = vmul.f32 -0.5, %v1146
        %v1497 = vadd.f32 %v1496, 1.0
        %v1498 = vmul.f32 %v1497, %v1146
        %v1499 = vand.u32 2147483647, %v1146
        %vm1500 = vcmp.lt.f32.partialorder %v1499, 0.0004427343
        %v1501 = vsel %vm1500, %v1498, %v1495
        %v1502 = vadd.f32 %v1148, 1.0
        %v1503 = vlog2.pop %v1502
        %v1504 = vmul.f32 %v1503, 0.6931472
        %v1505 = vmul.f32 -0.5, %v1148
        %v1506 = vadd.f32 %v1505, 1.0
        %v1507 = vmul.f32 %v1506, %v1148
        %v1508 = vand.u32 2147483647, %v1148
        %vm1509 = vcmp.lt.f32.partialorder %v1508, 0.0004427343
        %v1510 = vsel %vm1509, %v1507, %v1504
        %v1511 = vadd.f32 %v1150, 1.0
        %v1512 = vlog2.pop %v1511
        %v1513 = vmul.f32 %v1512, 0.6931472
        %v1514 = vmul.f32 -0.5, %v1150
        %v1515 = vadd.f32 %v1514, 1.0
        %v1516 = vmul.f32 %v1515, %v1150
        %v1517 = vand.u32 2147483647, %v1150
        %vm1518 = vcmp.lt.f32.partialorder %v1517, 0.0004427343
        %v1519 = vsel %vm1518, %v1516, %v1513
        %v1520 = vadd.f32 %v1152, 1.0
        %v1521 = vlog2.pop %v1520
        %v1522 = vmul.f32 %v1521, 0.6931472
        %v1523 = vmul.f32 -0.5, %v1152
        %v1524 = vadd.f32 %v1523, 1.0
        %v1525 = vmul.f32 %v1524, %v1152
        %v1526 = vand.u32 2147483647, %v1152
        %vm1527 = vcmp.lt.f32.partialorder %v1526, 0.0004427343
        %v1528 = vsel %vm1527, %v1525, %v1522
        %v1529 = vadd.f32 %v1154, 1.0
        %v1530 = vlog2.pop %v1529
        %v1531 = vmul.f32 %v1530, 0.6931472
        %v1532 = vmul.f32 -0.5, %v1154
        %v1533 = vadd.f32 %v1532, 1.0
        %v1534 = vmul.f32 %v1533, %v1154
        %v1535 = vand.u32 2147483647, %v1154
        %vm1536 = vcmp.lt.f32.partialorder %v1535, 0.0004427343
        %v1537 = vsel %vm1536, %v1534, %v1531
        %v1538 = vadd.f32 %v1156, 1.0
        %v1539 = vlog2.pop %v1538
        %v1540 = vmul.f32 %v1539, 0.6931472
        %v1541 = vmul.f32 -0.5, %v1156
        %v1542 = vadd.f32 %v1541, 1.0
        %v1543 = vmul.f32 %v1542, %v1156
        %v1544 = vand.u32 2147483647, %v1156
        %vm1545 = vcmp.lt.f32.partialorder %v1544, 0.0004427343
        %v1546 = vsel %vm1545, %v1543, %v1540
        %v1547 = vadd.f32 %v1158, 1.0
        %v1548 = vlog2.pop %v1547
        %v1549 = vmul.f32 %v1548, 0.6931472
        %v1550 = vmul.f32 -0.5, %v1158
        %v1551 = vadd.f32 %v1550, 1.0
        %v1552 = vmul.f32 %v1551, %v1158
        %v1553 = vand.u32 2147483647, %v1158
        %vm1554 = vcmp.lt.f32.partialorder %v1553, 0.0004427343
        %v1555 = vsel %vm1554, %v1552, %v1549
        %v1556 = vadd.f32 %v1160, 1.0
        %v1557 = vlog2.pop %v1556
        %v1558 = vmul.f32 %v1557, 0.6931472
        %v1559 = vmul.f32 -0.5, %v1160
        %v1560 = vadd.f32 %v1559, 1.0
        %v1561 = vmul.f32 %v1560, %v1160
        %v1562 = vand.u32 2147483647, %v1160
        %vm1563 = vcmp.lt.f32.partialorder %v1562, 0.0004427343
        %v1564 = vsel %vm1563, %v1561, %v1558
        %v1565 = vadd.f32 %v1162, 1.0
        %v1566 = vlog2.pop %v1565
        %v1567 = vmul.f32 %v1566, 0.6931472
        %v1568 = vmul.f32 -0.5, %v1162
        %v1569 = vadd.f32 %v1568, 1.0
        %v1570 = vmul.f32 %v1569, %v1162
        %v1571 = vand.u32 2147483647, %v1162
        %vm1572 = vcmp.lt.f32.partialorder %v1571, 0.0004427343
        %v1573 = vsel %vm1572, %v1570, %v1567
        %v1574 = vadd.f32 %v1164, 1.0
        %v1575 = vlog2.pop %v1574
        %v1576 = vmul.f32 %v1575, 0.6931472
        %v1577 = vmul.f32 -0.5, %v1164
        %v1578 = vadd.f32 %v1577, 1.0
        %v1579 = vmul.f32 %v1578, %v1164
        %v1580 = vand.u32 2147483647, %v1164
        %vm1581 = vcmp.lt.f32.partialorder %v1580, 0.0004427343
        %v1582 = vsel %vm1581, %v1579, %v1576
        %v1583 = vadd.f32 %v1166, 1.0
        %v1584 = vlog2.pop %v1583
        %v1585 = vmul.f32 %v1584, 0.6931472
        %v1586 = vmul.f32 -0.5, %v1166
        %v1587 = vadd.f32 %v1586, 1.0
        %v1588 = vmul.f32 %v1587, %v1166
        %v1589 = vand.u32 2147483647, %v1166
        %vm1590 = vcmp.lt.f32.partialorder %v1589, 0.0004427343
        %v1591 = vsel %vm1590, %v1588, %v1585
        %v1592 = vadd.f32 %v1168, 1.0
        %v1593 = vlog2.pop %v1592
        %v1594 = vmul.f32 %v1593, 0.6931472
        %v1595 = vmul.f32 -0.5, %v1168
        %v1596 = vadd.f32 %v1595, 1.0
        %v1597 = vmul.f32 %v1596, %v1168
        %v1598 = vand.u32 2147483647, %v1168
        %vm1599 = vcmp.lt.f32.partialorder %v1598, 0.0004427343
        %v1600 = vsel %vm1599, %v1597, %v1594
        %v1601 = vadd.f32 %v977, %v1177
        %v1602 = vadd.f32 %v978, %v1186
        %v1603 = vadd.f32 %v979, %v1195
        %v1604 = vadd.f32 %v980, %v1204
        %v1605 = vadd.f32 %v981, %v1213
        %v1606 = vadd.f32 %v982, %v1222
        %v1607 = vadd.f32 %v983, %v1231
        %v1608 = vadd.f32 %v984, %v1240
        %v1609 = vadd.f32 %v985, %v1249
        %v1610 = vadd.f32 %v986, %v1258
        %v1611 = vadd.f32 %v987, %v1267
        %v1612 = vadd.f32 %v988, %v1276
        %v1613 = vadd.f32 %v989, %v1285
        %v1614 = vadd.f32 %v990, %v1294
        %v1615 = vadd.f32 %v991, %v1303
        %v1616 = vadd.f32 %v992, %v1312
        %v1617 = vadd.f32 %v993, %v1321
        %v1618 = vadd.f32 %v994, %v1330
        %v1619 = vadd.f32 %v995, %v1339
        %v1620 = vadd.f32 %v996, %v1348
        %v1621 = vadd.f32 %v997, %v1357
        %v1622 = vadd.f32 %v998, %v1366
        %v1623 = vadd.f32 %v999, %v1375
        %v1624 = vadd.f32 %v1000, %v1384
        %v1625 = vadd.f32 %v1001, %v1393
        %v1626 = vadd.f32 %v1002, %v1402
        %v1627 = vadd.f32 %v1003, %v1411
        %v1628 = vadd.f32 %v1004, %v1420
        %v1629 = vadd.f32 %v1005, %v1429
        %v1630 = vadd.f32 %v1006, %v1438
        %v1631 = vadd.f32 %v1007, %v1447
        %v1632 = vadd.f32 %v1008, %v1456
        %v1633 = vadd.f32 %v1009, %v1465
        %v1634 = vadd.f32 %v1010, %v1474
        %v1635 = vadd.f32 %v1011, %v1483
        %v1636 = vadd.f32 %v1012, %v1492
        %v1637 = vadd.f32 %v1013, %v1501
        %v1638 = vadd.f32 %v1014, %v1510
        %v1639 = vadd.f32 %v1015, %v1519
        %v1640 = vadd.f32 %v1016, %v1528
        %v1641 = vadd.f32 %v1017, %v1537
        %v1642 = vadd.f32 %v1018, %v1546
        %v1643 = vadd.f32 %v1019, %v1555
        %v1644 = vadd.f32 %v1020, %v1564
        %v1645 = vadd.f32 %v1021, %v1573
        %v1646 = vadd.f32 %v1022, %v1582
        %v1647 = vadd.f32 %v1023, %v1591
        %v1648 = vadd.f32 %v1024, %v1600
        %v1649 = vld [vmem:[%s3] sm:$0xff]
        %v1650 = vld [vmem:[%s3 + $0x8] sm:$0xff]
        %v1651 = vld [vmem:[%s3 + $0x10] sm:$0xff]
        %v1652 = vld [vmem:[%s3 + $0x18] sm:$0xff]
        %v1653 = vld [vmem:[%s4] sm:$0xff]
        %v1654 = vld [vmem:[%s4 + $0x8] sm:$0xff]
        %v1655 = vld [vmem:[%s4 + $0x10] sm:$0xff]
        %v1656 = vld [vmem:[%s4 + $0x18] sm:$0xff]
        %1658 = vset.pattern.permute.xlu0 0
        %1659 = vperm.xlu0 %1658, %v1653
        %v1660 = vpop.permute.xlu0 %1659
        %1663 = vset.pattern.permute.xlu0 0
        %1664 = vperm.xlu0 %1663, %v1654
        %v1665 = vpop.permute.xlu0 %1664
        %1668 = vset.pattern.permute.xlu0 0
        %1669 = vperm.xlu0 %1668, %v1655
        %v1670 = vpop.permute.xlu0 %1669
        %1673 = vset.pattern.permute.xlu0 0
        %1674 = vperm.xlu0 %1673, %v1656
        %v1675 = vpop.permute.xlu0 %1674
        %vm1677 = vcmask 261120
        %v1679 = vsel %vm1677, %v1649, 0
        %v1682 = vsel %vm1677, %v1650, 0
        %v1685 = vsel %vm1677, %v1651, 0
        %v1688 = vsel %vm1677, %v1652, 0
        %1690 = vmatprep.subr.mxu0 %v1602
        %1691 = vmatpush1.msra.mxu0 %v1601
        %1692 = vmatprep.subr.mxu0 %v1614
        %1693 = vmatpush1.msra.mxu0 %v1613
        %1694 = vmatprep.subr.mxu0 %v1626
        %1695 = vmatpush1.msra.mxu0 %v1625
        %1696 = vmatprep.subr.mxu0 %v1638
        %1697 = vmatpush1.msra.mxu0 %v1637
        %1698 = vmatprep.subr.mxu0 0.0
        %1699 = vmatpush1.msra.mxu0 0.0
        %1700 = vmatprep.subr.mxu0 0.0
        %1701 = vmatpush1.msra.mxu0 0.0
        %1702 = vmatprep.subr.mxu0 0.0
        %1703 = vmatpush1.msra.mxu0 0.0
        %1704 = vmatprep.subr.mxu0 0.0
        %1705 = vmatpush1.msra.mxu0 0.0
        %1706 = vmatprep.subr.mxu0 0.0
        %1707 = vmatpush1.msra.mxu0 0.0
        %1708 = vmatprep.subr.mxu0 0.0
        %1709 = vmatpush1.msra.mxu0 0.0
        %1710 = vmatprep.subr.mxu0 0.0
        %1711 = vmatpush1.msra.mxu0 0.0
        %1712 = vmatprep.subr.mxu0 0.0
        %1713 = vmatpush1.msra.mxu0 0.0
        %1714 = vmatprep.subr.mxu0 0.0
        %1715 = vmatpush1.msra.mxu0 0.0
        %1716 = vmatprep.subr.mxu0 0.0
        %1717 = vmatpush1.msra.mxu0 0.0
        %1718 = vmatprep.subr.mxu0 0.0
        %1719 = vmatpush1.msra.mxu0 0.0
        %1720 = vmatprep.subr.mxu0 0.0
        %1721 = vmatpush1.msra.mxu0 0.0
        %1722 = vmatprep.subr.mxu0 0.0
        %1723 = vmatpush1.msra.mxu0 0.0
        %1724 = vmatprep.subr.mxu0 0.0
        %1725 = vmatpush1.msra.mxu0 0.0
        %1726 = vmatprep.subr.mxu0 0.0
        %1727 = vmatpush1.msra.mxu0 0.0
        %1728 = vmatprep.subr.mxu0 0.0
        %1729 = vmatpush1.msra.mxu0 0.0
        %1730 = vmatprep.subr.mxu0 0.0
        %1731 = vmatpush1.msra.mxu0 0.0
        %1732 = vmatprep.subr.mxu0 0.0
        %1733 = vmatpush1.msra.mxu0 0.0
        %1734 = vmatprep.subr.mxu0 0.0
        %1735 = vmatpush1.msra.mxu0 0.0
        %1736 = vmatprep.subr.mxu0 0.0
        %1737 = vmatpush1.msra.mxu0 0.0
        %1738 = vmatprep.subr.mxu0 0.0
        %1739 = vmatpush1.msra.mxu0 0.0
        %1740 = vmatprep.subr.mxu0 0.0
        %1741 = vmatpush1.msra.mxu0 0.0
        %1742 = vmatprep.subr.mxu0 0.0
        %1743 = vmatpush1.msra.mxu0 0.0
        %1744 = vmatprep.subr.mxu0 0.0
        %1745 = vmatpush1.msra.mxu0 0.0
        %1746 = vmatprep.subr.mxu0 0.0
        %1747 = vmatpush1.msra.mxu0 0.0
        %1748 = vmatprep.subr.mxu0 0.0
        %1749 = vmatpush1.msra.mxu0 0.0
        %1750 = vmatprep.subr.mxu0 0.0
        %1751 = vmatpush1.msra.mxu0 0.0
        %1752 = vmatprep.subr.mxu0 0.0
        %1753 = vmatpush1.msra.mxu0 0.0
        %1754 = vmatprep.mubr.f32.mxu0 0.0
        %1755 = vmatmul.mubr.f32.gmra.mrb[0].mxu0 %v1679
        %v1756 = vpop.f32.mrb[0].mxu0
        %v1757 = vadd.f32 %v1660, %v1756
        %v1758 = vpop.f32.mrb[0].mxu0
        %v1759 = vadd.f32 %v1660, %v1758
        %1760 = vmatprep.mubr.f32.mxu0 0.0
        %1761 = vmatmul.mubr.f32.gmra.mrb[0].mxu0 %v1682
        %v1762 = vpop.f32.mrb[0].mxu0
        %v1763 = vadd.f32 %v1665, %v1762
        %v1764 = vpop.f32.mrb[0].mxu0
        %v1765 = vadd.f32 %v1665, %v1764
        %1766 = vmatprep.mubr.f32.mxu0 0.0
        %1767 = vmatmul.mubr.f32.gmra.mrb[0].mxu0 %v1685
        %v1768 = vpop.f32.mrb[0].mxu0
        %v1769 = vadd.f32 %v1670, %v1768
        %v1770 = vpop.f32.mrb[0].mxu0
        %v1771 = vadd.f32 %v1670, %v1770
        %1772 = vmatprep.mubr.f32.mxu0 0.0
        %1773 = vmatmul.mubr.f32.gmra.mrb[0].mxu0 %v1688
        %v1774 = vpop.f32.mrb[0].mxu0
        %v1775 = vadd.f32 %v1675, %v1774
        %v1776 = vpop.f32.mrb[0].mxu0
        %v1777 = vadd.f32 %v1675, %v1776
        %1778 = vdwg.mxu0
        %1779 = vmatprep.subr.mxu0 %v1604
        %1780 = vmatpush1.msra.mxu0 %v1603
        %1781 = vmatprep.subr.mxu0 %v1616
        %1782 = vmatpush1.msra.mxu0 %v1615
        %1783 = vmatprep.subr.mxu0 %v1628
        %1784 = vmatpush1.msra.mxu0 %v1627
        %1785 = vmatprep.subr.mxu0 %v1640
        %1786 = vmatpush1.msra.mxu0 %v1639
        %1787 = vmatprep.subr.mxu0 0.0
        %1788 = vmatpush1.msra.mxu0 0.0
        %1789 = vmatprep.subr.mxu0 0.0
        %1790 = vmatpush1.msra.mxu0 0.0
        %1791 = vmatprep.subr.mxu0 0.0
        %1792 = vmatpush1.msra.mxu0 0.0
        %1793 = vmatprep.subr.mxu0 0.0
        %1794 = vmatpush1.msra.mxu0 0.0
        %1795 = vmatprep.subr.mxu0 0.0
        %1796 = vmatpush1.msra.mxu0 0.0
        %1797 = vmatprep.subr.mxu0 0.0
        %1798 = vmatpush1.msra.mxu0 0.0
        %1799 = vmatprep.subr.mxu0 0.0
        %1800 = vmatpush1.msra.mxu0 0.0
        %1801 = vmatprep.subr.mxu0 0.0
        %1802 = vmatpush1.msra.mxu0 0.0
        %1803 = vmatprep.subr.mxu0 0.0
        %1804 = vmatpush1.msra.mxu0 0.0
        %1805 = vmatprep.subr.mxu0 0.0
        %1806 = vmatpush1.msra.mxu0 0.0
        %1807 = vmatprep.subr.mxu0 0.0
        %1808 = vmatpush1.msra.mxu0 0.0
        %1809 = vmatprep.subr.mxu0 0.0
        %1810 = vmatpush1.msra.mxu0 0.0
        %1811 = vmatprep.subr.mxu0 0.0
        %1812 = vmatpush1.msra.mxu0 0.0
        %1813 = vmatprep.subr.mxu0 0.0
        %1814 = vmatpush1.msra.mxu0 0.0
        %1815 = vmatprep.subr.mxu0 0.0
        %1816 = vmatpush1.msra.mxu0 0.0
        %1817 = vmatprep.subr.mxu0 0.0
        %1818 = vmatpush1.msra.mxu0 0.0
        %1819 = vmatprep.subr.mxu0 0.0
        %1820 = vmatpush1.msra.mxu0 0.0
        %1821 = vmatprep.subr.mxu0 0.0
        %1822 = vmatpush1.msra.mxu0 0.0
        %1823 = vmatprep.subr.mxu0 0.0
        %1824 = vmatpush1.msra.mxu0 0.0
        %1825 = vmatprep.subr.mxu0 0.0
        %1826 = vmatpush1.msra.mxu0 0.0
        %1827 = vmatprep.subr.mxu0 0.0
        %1828 = vmatpush1.msra.mxu0 0.0
        %1829 = vmatprep.subr.mxu0 0.0
        %1830 = vmatpush1.msra.mxu0 0.0
        %1831 = vmatprep.subr.mxu0 0.0
        %1832 = vmatpush1.msra.mxu0 0.0
        %1833 = vmatprep.subr.mxu0 0.0
        %1834 = vmatpush1.msra.mxu0 0.0
        %1835 = vmatprep.subr.mxu0 0.0
        %1836 = vmatpush1.msra.mxu0 0.0
        %1837 = vmatprep.subr.mxu0 0.0
        %1838 = vmatpush1.msra.mxu0 0.0
        %1839 = vmatprep.subr.mxu0 0.0
        %1840 = vmatpush1.msra.mxu0 0.0
        %1841 = vmatprep.subr.mxu0 0.0
        %1842 = vmatpush1.msra.mxu0 0.0
        %1843 = vmatprep.mubr.f32.mxu0 0.0
        %1844 = vmatmul.mubr.f32.gmra.mrb[0].mxu0 %v1679
        %v1845 = vpop.f32.mrb[0].mxu0
        %v1846 = vadd.f32 %v1660, %v1845
        %v1847 = vpop.f32.mrb[0].mxu0
        %v1848 = vadd.f32 %v1660, %v1847
        %1849 = vmatprep.mubr.f32.mxu0 0.0
        %1850 = vmatmul.mubr.f32.gmra.mrb[0].mxu0 %v1682
        %v1851 = vpop.f32.mrb[0].mxu0
        %v1852 = vadd.f32 %v1665, %v1851
        %v1853 = vpop.f32.mrb[0].mxu0
        %v1854 = vadd.f32 %v1665, %v1853
        %1855 = vmatprep.mubr.f32.mxu0 0.0
        %1856 = vmatmul.mubr.f32.gmra.mrb[0].mxu0 %v1685
        %v1857 = vpop.f32.mrb[0].mxu0
        %v1858 = vadd.f32 %v1670, %v1857
        %v1859 = vpop.f32.mrb[0].mxu0
        %v1860 = vadd.f32 %v1670, %v1859
        %1861 = vmatprep.mubr.f32.mxu0 0.0
        %1862 = vmatmul.mubr.f32.gmra.mrb[0].mxu0 %v1688
        %v1863 = vpop.f32.mrb[0].mxu0
        %v1864 = vadd.f32 %v1675, %v1863
        %v1865 = vpop.f32.mrb[0].mxu0
        %v1866 = vadd.f32 %v1675, %v1865
        %1867 = vdwg.mxu0
        %1868 = vmatprep.subr.mxu0 %v1606
        %1869 = vmatpush1.msra.mxu0 %v1605
        %1870 = vmatprep.subr.mxu0 %v1618
        %1871 = vmatpush1.msra.mxu0 %v1617
        %1872 = vmatprep.subr.mxu0 %v1630
        %1873 = vmatpush1.msra.mxu0 %v1629
        %1874 = vmatprep.subr.mxu0 %v1642
        %1875 = vmatpush1.msra.mxu0 %v1641
        %1876 = vmatprep.subr.mxu0 0.0
        %1877 = vmatpush1.msra.mxu0 0.0
        %1878 = vmatprep.subr.mxu0 0.0
        %1879 = vmatpush1.msra.mxu0 0.0
        %1880 = vmatprep.subr.mxu0 0.0
        %1881 = vmatpush1.msra.mxu0 0.0
        %1882 = vmatprep.subr.mxu0 0.0
        %1883 = vmatpush1.msra.mxu0 0.0
        %1884 = vmatprep.subr.mxu0 0.0
        %1885 = vmatpush1.msra.mxu0 0.0
        %1886 = vmatprep.subr.mxu0 0.0
        %1887 = vmatpush1.msra.mxu0 0.0
        %1888 = vmatprep.subr.mxu0 0.0
        %1889 = vmatpush1.msra.mxu0 0.0
        %1890 = vmatprep.subr.mxu0 0.0
        %1891 = vmatpush1.msra.mxu0 0.0
        %1892 = vmatprep.subr.mxu0 0.0
        %1893 = vmatpush1.msra.mxu0 0.0
        %1894 = vmatprep.subr.mxu0 0.0
        %1895 = vmatpush1.msra.mxu0 0.0
        %1896 = vmatprep.subr.mxu0 0.0
        %1897 = vmatpush1.msra.mxu0 0.0
        %1898 = vmatprep.subr.mxu0 0.0
        %1899 = vmatpush1.msra.mxu0 0.0
        %1900 = vmatprep.subr.mxu0 0.0
        %1901 = vmatpush1.msra.mxu0 0.0
        %1902 = vmatprep.subr.mxu0 0.0
        %1903 = vmatpush1.msra.mxu0 0.0
        %1904 = vmatprep.subr.mxu0 0.0
        %1905 = vmatpush1.msra.mxu0 0.0
        %1906 = vmatprep.subr.mxu0 0.0
        %1907 = vmatpush1.msra.mxu0 0.0
        %1908 = vmatprep.subr.mxu0 0.0
        %1909 = vmatpush1.msra.mxu0 0.0
        %1910 = vmatprep.subr.mxu0 0.0
        %1911 = vmatpush1.msra.mxu0 0.0
        %1912 = vmatprep.subr.mxu0 0.0
        %1913 = vmatpush1.msra.mxu0 0.0
        %1914 = vmatprep.subr.mxu0 0.0
        %1915 = vmatpush1.msra.mxu0 0.0
        %1916 = vmatprep.subr.mxu0 0.0
        %1917 = vmatpush1.msra.mxu0 0.0
        %1918 = vmatprep.subr.mxu0 0.0
        %1919 = vmatpush1.msra.mxu0 0.0
        %1920 = vmatprep.subr.mxu0 0.0
        %1921 = vmatpush1.msra.mxu0 0.0
        %1922 = vmatprep.subr.mxu0 0.0
        %1923 = vmatpush1.msra.mxu0 0.0
        %1924 = vmatprep.subr.mxu0 0.0
        %1925 = vmatpush1.msra.mxu0 0.0
        %1926 = vmatprep.subr.mxu0 0.0
        %1927 = vmatpush1.msra.mxu0 0.0
        %1928 = vmatprep.subr.mxu0 0.0
        %1929 = vmatpush1.msra.mxu0 0.0
        %1930 = vmatprep.subr.mxu0 0.0
        %1931 = vmatpush1.msra.mxu0 0.0
        %1932 = vmatprep.mubr.f32.mxu0 0.0
        %1933 = vmatmul.mubr.f32.gmra.mrb[0].mxu0 %v1679
        %v1934 = vpop.f32.mrb[0].mxu0
        %v1935 = vadd.f32 %v1660, %v1934
        %v1936 = vpop.f32.mrb[0].mxu0
        %v1937 = vadd.f32 %v1660, %v1936
        %1938 = vmatprep.mubr.f32.mxu0 0.0
        %1939 = vmatmul.mubr.f32.gmra.mrb[0].mxu0 %v1682
        %v1940 = vpop.f32.mrb[0].mxu0
        %v1941 = vadd.f32 %v1665, %v1940
        %v1942 = vpop.f32.mrb[0].mxu0
        %v1943 = vadd.f32 %v1665, %v1942
        %1944 = vmatprep.mubr.f32.mxu0 0.0
        %1945 = vmatmul.mubr.f32.gmra.mrb[0].mxu0 %v1685
        %v1946 = vpop.f32.mrb[0].mxu0
        %v1947 = vadd.f32 %v1670, %v1946
        %v1948 = vpop.f32.mrb[0].mxu0
        %v1949 = vadd.f32 %v1670, %v1948
        %1950 = vmatprep.mubr.f32.mxu0 0.0
        %1951 = vmatmul.mubr.f32.gmra.mrb[0].mxu0 %v1688
        %v1952 = vpop.f32.mrb[0].mxu0
        %v1953 = vadd.f32 %v1675, %v1952
        %v1954 = vpop.f32.mrb[0].mxu0
        %v1955 = vadd.f32 %v1675, %v1954
        %1956 = vdwg.mxu0
        %1957 = vmatprep.subr.mxu0 %v1608
        %1958 = vmatpush1.msra.mxu0 %v1607
        %1959 = vmatprep.subr.mxu0 %v1620
        %1960 = vmatpush1.msra.mxu0 %v1619
        %1961 = vmatprep.subr.mxu0 %v1632
        %1962 = vmatpush1.msra.mxu0 %v1631
        %1963 = vmatprep.subr.mxu0 %v1644
        %1964 = vmatpush1.msra.mxu0 %v1643
        %1965 = vmatprep.subr.mxu0 0.0
        %1966 = vmatpush1.msra.mxu0 0.0
        %1967 = vmatprep.subr.mxu0 0.0
        %1968 = vmatpush1.msra.mxu0 0.0
        %1969 = vmatprep.subr.mxu0 0.0
        %1970 = vmatpush1.msra.mxu0 0.0
        %1971 = vmatprep.subr.mxu0 0.0
        %1972 = vmatpush1.msra.mxu0 0.0
        %1973 = vmatprep.subr.mxu0 0.0
        %1974 = vmatpush1.msra.mxu0 0.0
        %1975 = vmatprep.subr.mxu0 0.0
        %1976 = vmatpush1.msra.mxu0 0.0
        %1977 = vmatprep.subr.mxu0 0.0
        %1978 = vmatpush1.msra.mxu0 0.0
        %1979 = vmatprep.subr.mxu0 0.0
        %1980 = vmatpush1.msra.mxu0 0.0
        %1981 = vmatprep.subr.mxu0 0.0
        %1982 = vmatpush1.msra.mxu0 0.0
        %1983 = vmatprep.subr.mxu0 0.0
        %1984 = vmatpush1.msra.mxu0 0.0
        %1985 = vmatprep.subr.mxu0 0.0
        %1986 = vmatpush1.msra.mxu0 0.0
        %1987 = vmatprep.subr.mxu0 0.0
        %1988 = vmatpush1.msra.mxu0 0.0
        %1989 = vmatprep.subr.mxu0 0.0
        %1990 = vmatpush1.msra.mxu0 0.0
        %1991 = vmatprep.subr.mxu0 0.0
        %1992 = vmatpush1.msra.mxu0 0.0
        %1993 = vmatprep.subr.mxu0 0.0
        %1994 = vmatpush1.msra.mxu0 0.0
        %1995 = vmatprep.subr.mxu0 0.0
        %1996 = vmatpush1.msra.mxu0 0.0
        %1997 = vmatprep.subr.mxu0 0.0
        %1998 = vmatpush1.msra.mxu0 0.0
        %1999 = vmatprep.subr.mxu0 0.0
        %2000 = vmatpush1.msra.mxu0 0.0
        %2001 = vmatprep.subr.mxu0 0.0
        %2002 = vmatpush1.msra.mxu0 0.0
        %2003 = vmatprep.subr.mxu0 0.0
        %2004 = vmatpush1.msra.mxu0 0.0
        %2005 = vmatprep.subr.mxu0 0.0
        %2006 = vmatpush1.msra.mxu0 0.0
        %2007 = vmatprep.subr.mxu0 0.0
        %2008 = vmatpush1.msra.mxu0 0.0
        %2009 = vmatprep.subr.mxu0 0.0
        %2010 = vmatpush1.msra.mxu0 0.0
        %2011 = vmatprep.subr.mxu0 0.0
        %2012 = vmatpush1.msra.mxu0 0.0
        %2013 = vmatprep.subr.mxu0 0.0
        %2014 = vmatpush1.msra.mxu0 0.0
        %2015 = vmatprep.subr.mxu0 0.0
        %2016 = vmatpush1.msra.mxu0 0.0
        %2017 = vmatprep.subr.mxu0 0.0
        %2018 = vmatpush1.msra.mxu0 0.0
        %2019 = vmatprep.subr.mxu0 0.0
        %2020 = vmatpush1.msra.mxu0 0.0
        %2021 = vmatprep.mubr.f32.mxu0 0.0
        %2022 = vmatmul.mubr.f32.gmra.mrb[0].mxu0 %v1679
        %v2023 = vpop.f32.mrb[0].mxu0
        %v2024 = vadd.f32 %v1660, %v2023
        %v2025 = vpop.f32.mrb[0].mxu0
        %v2026 = vadd.f32 %v1660, %v2025
        %2027 = vmatprep.mubr.f32.mxu0 0.0
        %2028 = vmatmul.mubr.f32.gmra.mrb[0].mxu0 %v1682
        %v2029 = vpop.f32.mrb[0].mxu0
        %v2030 = vadd.f32 %v1665, %v2029
        %v2031 = vpop.f32.mrb[0].mxu0
        %v2032 = vadd.f32 %v1665, %v2031
        %2033 = vmatprep.mubr.f32.mxu0 0.0
        %2034 = vmatmul.mubr.f32.gmra.mrb[0].mxu0 %v1685
        %v2035 = vpop.f32.mrb[0].mxu0
        %v2036 = vadd.f32 %v1670, %v2035
        %v2037 = vpop.f32.mrb[0].mxu0
        %v2038 = vadd.f32 %v1670, %v2037
        %2039 = vmatprep.mubr.f32.mxu0 0.0
        %2040 = vmatmul.mubr.f32.gmra.mrb[0].mxu0 %v1688
        %v2041 = vpop.f32.mrb[0].mxu0
        %v2042 = vadd.f32 %v1675, %v2041
        %v2043 = vpop.f32.mrb[0].mxu0
        %v2044 = vadd.f32 %v1675, %v2043
        %2045 = vdwg.mxu0
        %2046 = vmatprep.subr.mxu0 %v1610
        %2047 = vmatpush1.msra.mxu0 %v1609
        %2048 = vmatprep.subr.mxu0 %v1622
        %2049 = vmatpush1.msra.mxu0 %v1621
        %2050 = vmatprep.subr.mxu0 %v1634
        %2051 = vmatpush1.msra.mxu0 %v1633
        %2052 = vmatprep.subr.mxu0 %v1646
        %2053 = vmatpush1.msra.mxu0 %v1645
        %2054 = vmatprep.subr.mxu0 0.0
        %2055 = vmatpush1.msra.mxu0 0.0
        %2056 = vmatprep.subr.mxu0 0.0
        %2057 = vmatpush1.msra.mxu0 0.0
        %2058 = vmatprep.subr.mxu0 0.0
        %2059 = vmatpush1.msra.mxu0 0.0
        %2060 = vmatprep.subr.mxu0 0.0
        %2061 = vmatpush1.msra.mxu0 0.0
        %2062 = vmatprep.subr.mxu0 0.0
        %2063 = vmatpush1.msra.mxu0 0.0
        %2064 = vmatprep.subr.mxu0 0.0
        %2065 = vmatpush1.msra.mxu0 0.0
        %2066 = vmatprep.subr.mxu0 0.0
        %2067 = vmatpush1.msra.mxu0 0.0
        %2068 = vmatprep.subr.mxu0 0.0
        %2069 = vmatpush1.msra.mxu0 0.0
        %2070 = vmatprep.subr.mxu0 0.0
        %2071 = vmatpush1.msra.mxu0 0.0
        %2072 = vmatprep.subr.mxu0 0.0
        %2073 = vmatpush1.msra.mxu0 0.0
        %2074 = vmatprep.subr.mxu0 0.0
        %2075 = vmatpush1.msra.mxu0 0.0
        %2076 = vmatprep.subr.mxu0 0.0
        %2077 = vmatpush1.msra.mxu0 0.0
        %2078 = vmatprep.subr.mxu0 0.0
        %2079 = vmatpush1.msra.mxu0 0.0
        %2080 = vmatprep.subr.mxu0 0.0
        %2081 = vmatpush1.msra.mxu0 0.0
        %2082 = vmatprep.subr.mxu0 0.0
        %2083 = vmatpush1.msra.mxu0 0.0
        %2084 = vmatprep.subr.mxu0 0.0
        %2085 = vmatpush1.msra.mxu0 0.0
        %2086 = vmatprep.subr.mxu0 0.0
        %2087 = vmatpush1.msra.mxu0 0.0
        %2088 = vmatprep.subr.mxu0 0.0
        %2089 = vmatpush1.msra.mxu0 0.0
        %2090 = vmatprep.subr.mxu0 0.0
        %2091 = vmatpush1.msra.mxu0 0.0
        %2092 = vmatprep.subr.mxu0 0.0
        %2093 = vmatpush1.msra.mxu0 0.0
        %2094 = vmatprep.subr.mxu0 0.0
        %2095 = vmatpush1.msra.mxu0 0.0
        %2096 = vmatprep.subr.mxu0 0.0
        %2097 = vmatpush1.msra.mxu0 0.0
        %2098 = vmatprep.subr.mxu0 0.0
        %2099 = vmatpush1.msra.mxu0 0.0
        %2100 = vmatprep.subr.mxu0 0.0
        %2101 = vmatpush1.msra.mxu0 0.0
        %2102 = vmatprep.subr.mxu0 0.0
        %2103 = vmatpush1.msra.mxu0 0.0
        %2104 = vmatprep.subr.mxu0 0.0
        %2105 = vmatpush1.msra.mxu0 0.0
        %2106 = vmatprep.subr.mxu0 0.0
        %2107 = vmatpush1.msra.mxu0 0.0
        %2108 = vmatprep.subr.mxu0 0.0
        %2109 = vmatpush1.msra.mxu0 0.0
        %2110 = vmatprep.mubr.f32.mxu0 0.0
        %2111 = vmatmul.mubr.f32.gmra.mrb[0].mxu0 %v1679
        %v2112 = vpop.f32.mrb[0].mxu0
        %v2113 = vadd.f32 %v1660, %v2112
        %v2114 = vpop.f32.mrb[0].mxu0
        %v2115 = vadd.f32 %v1660, %v2114
        %2116 = vmatprep.mubr.f32.mxu0 0.0
        %2117 = vmatmul.mubr.f32.gmra.mrb[0].mxu0 %v1682
        %v2118 = vpop.f32.mrb[0].mxu0
        %v2119 = vadd.f32 %v1665, %v2118
        %v2120 = vpop.f32.mrb[0].mxu0
        %v2121 = vadd.f32 %v1665, %v2120
        %2122 = vmatprep.mubr.f32.mxu0 0.0
        %2123 = vmatmul.mubr.f32.gmra.mrb[0].mxu0 %v1685
        %v2124 = vpop.f32.mrb[0].mxu0
        %v2125 = vadd.f32 %v1670, %v2124
        %v2126 = vpop.f32.mrb[0].mxu0
        %v2127 = vadd.f32 %v1670, %v2126
        %2128 = vmatprep.mubr.f32.mxu0 0.0
        %2129 = vmatmul.mubr.f32.gmra.mrb[0].mxu0 %v1688
        %v2130 = vpop.f32.mrb[0].mxu0
        %v2131 = vadd.f32 %v1675, %v2130
        %v2132 = vpop.f32.mrb[0].mxu0
        %v2133 = vadd.f32 %v1675, %v2132
        %2134 = vdwg.mxu0
        %2135 = vmatprep.subr.mxu0 %v1612
        %2136 = vmatpush1.msra.mxu0 %v1611
        %2137 = vmatprep.subr.mxu0 %v1624
        %2138 = vmatpush1.msra.mxu0 %v1623
        %2139 = vmatprep.subr.mxu0 %v1636
        %2140 = vmatpush1.msra.mxu0 %v1635
        %2141 = vmatprep.subr.mxu0 %v1648
        %2142 = vmatpush1.msra.mxu0 %v1647
        %2143 = vmatprep.subr.mxu0 0.0
        %2144 = vmatpush1.msra.mxu0 0.0
        %2145 = vmatprep.subr.mxu0 0.0
        %2146 = vmatpush1.msra.mxu0 0.0
        %2147 = vmatprep.subr.mxu0 0.0
        %2148 = vmatpush1.msra.mxu0 0.0
        %2149 = vmatprep.subr.mxu0 0.0
        %2150 = vmatpush1.msra.mxu0 0.0
        %2151 = vmatprep.subr.mxu0 0.0
        %2152 = vmatpush1.msra.mxu0 0.0
        %2153 = vmatprep.subr.mxu0 0.0
        %2154 = vmatpush1.msra.mxu0 0.0
        %2155 = vmatprep.subr.mxu0 0.0
        %2156 = vmatpush1.msra.mxu0 0.0
        %2157 = vmatprep.subr.mxu0 0.0
        %2158 = vmatpush1.msra.mxu0 0.0
        %2159 = vmatprep.subr.mxu0 0.0
        %2160 = vmatpush1.msra.mxu0 0.0
        %2161 = vmatprep.subr.mxu0 0.0
        %2162 = vmatpush1.msra.mxu0 0.0
        %2163 = vmatprep.subr.mxu0 0.0
        %2164 = vmatpush1.msra.mxu0 0.0
        %2165 = vmatprep.subr.mxu0 0.0
        %2166 = vmatpush1.msra.mxu0 0.0
        %2167 = vmatprep.subr.mxu0 0.0
        %2168 = vmatpush1.msra.mxu0 0.0
        %2169 = vmatprep.subr.mxu0 0.0
        %2170 = vmatpush1.msra.mxu0 0.0
        %2171 = vmatprep.subr.mxu0 0.0
        %2172 = vmatpush1.msra.mxu0 0.0
        %2173 = vmatprep.subr.mxu0 0.0
        %2174 = vmatpush1.msra.mxu0 0.0
        %2175 = vmatprep.subr.mxu0 0.0
        %2176 = vmatpush1.msra.mxu0 0.0
        %2177 = vmatprep.subr.mxu0 0.0
        %2178 = vmatpush1.msra.mxu0 0.0
        %2179 = vmatprep.subr.mxu0 0.0
        %2180 = vmatpush1.msra.mxu0 0.0
        %2181 = vmatprep.subr.mxu0 0.0
        %2182 = vmatpush1.msra.mxu0 0.0
        %2183 = vmatprep.subr.mxu0 0.0
        %2184 = vmatpush1.msra.mxu0 0.0
        %2185 = vmatprep.subr.mxu0 0.0
        %2186 = vmatpush1.msra.mxu0 0.0
        %2187 = vmatprep.subr.mxu0 0.0
        %2188 = vmatpush1.msra.mxu0 0.0
        %2189 = vmatprep.subr.mxu0 0.0
        %2190 = vmatpush1.msra.mxu0 0.0
        %2191 = vmatprep.subr.mxu0 0.0
        %2192 = vmatpush1.msra.mxu0 0.0
        %2193 = vmatprep.subr.mxu0 0.0
        %2194 = vmatpush1.msra.mxu0 0.0
        %2195 = vmatprep.subr.mxu0 0.0
        %2196 = vmatpush1.msra.mxu0 0.0
        %2197 = vmatprep.subr.mxu0 0.0
        %2198 = vmatpush1.msra.mxu0 0.0
        %2199 = vmatprep.mubr.f32.mxu0 0.0
        %2200 = vmatmul.mubr.f32.gmra.mrb[0].mxu0 %v1679
        %v2201 = vpop.f32.mrb[0].mxu0
        %v2202 = vadd.f32 %v1660, %v2201
        %v2203 = vpop.f32.mrb[0].mxu0
        %v2204 = vadd.f32 %v1660, %v2203
        %2205 = vmatprep.mubr.f32.mxu0 0.0
        %2206 = vmatmul.mubr.f32.gmra.mrb[0].mxu0 %v1682
        %v2207 = vpop.f32.mrb[0].mxu0
        %v2208 = vadd.f32 %v1665, %v2207
        %v2209 = vpop.f32.mrb[0].mxu0
        %v2210 = vadd.f32 %v1665, %v2209
        %2211 = vmatprep.mubr.f32.mxu0 0.0
        %2212 = vmatmul.mubr.f32.gmra.mrb[0].mxu0 %v1685
        %v2213 = vpop.f32.mrb[0].mxu0
        %v2214 = vadd.f32 %v1670, %v2213
        %v2215 = vpop.f32.mrb[0].mxu0
        %v2216 = vadd.f32 %v1670, %v2215
        %2217 = vmatprep.mubr.f32.mxu0 0.0
        %2218 = vmatmul.mubr.f32.gmra.mrb[0].mxu0 %v1688
        %v2219 = vpop.f32.mrb[0].mxu0
        %v2220 = vadd.f32 %v1675, %v2219
        %v2221 = vpop.f32.mrb[0].mxu0
        %v2222 = vadd.f32 %v1675, %v2221
        %2223 = vdwg.mxu0
        %v2224 = vand.u32 2147483647, %v1757
        %v2225 = vand.u32 2147483647, %v1759
        %v2226 = vand.u32 2147483647, %v1846
        %v2227 = vand.u32 2147483647, %v1848
        %v2228 = vand.u32 2147483647, %v1935
        %v2229 = vand.u32 2147483647, %v1937
        %v2230 = vand.u32 2147483647, %v2024
        %v2231 = vand.u32 2147483647, %v2026
        %v2232 = vand.u32 2147483647, %v2113
        %v2233 = vand.u32 2147483647, %v2115
        %v2234 = vand.u32 2147483647, %v2202
        %v2235 = vand.u32 2147483647, %v2204
        %v2236 = vand.u32 2147483647, %v1763
        %v2237 = vand.u32 2147483647, %v1765
        %v2238 = vand.u32 2147483647, %v1852
        %v2239 = vand.u32 2147483647, %v1854
        %v2240 = vand.u32 2147483647, %v1941
        %v2241 = vand.u32 2147483647, %v1943
        %v2242 = vand.u32 2147483647, %v2030
        %v2243 = vand.u32 2147483647, %v2032
        %v2244 = vand.u32 2147483647, %v2119
        %v2245 = vand.u32 2147483647, %v2121
        %v2246 = vand.u32 2147483647, %v2208
        %v2247 = vand.u32 2147483647, %v2210
        %v2248 = vand.u32 2147483647, %v1769
        %v2249 = vand.u32 2147483647, %v1771
        %v2250 = vand.u32 2147483647, %v1858
        %v2251 = vand.u32 2147483647, %v1860
        %v2252 = vand.u32 2147483647, %v1947
        %v2253 = vand.u32 2147483647, %v1949
        %v2254 = vand.u32 2147483647, %v2036
        %v2255 = vand.u32 2147483647, %v2038
        %v2256 = vand.u32 2147483647, %v2125
        %v2257 = vand.u32 2147483647, %v2127
        %v2258 = vand.u32 2147483647, %v2214
        %v2259 = vand.u32 2147483647, %v2216
        %v2260 = vand.u32 2147483647, %v1775
        %v2261 = vand.u32 2147483647, %v1777
        %v2262 = vand.u32 2147483647, %v1864
        %v2263 = vand.u32 2147483647, %v1866
        %v2264 = vand.u32 2147483647, %v1953
        %v2265 = vand.u32 2147483647, %v1955
        %v2266 = vand.u32 2147483647, %v2042
        %v2267 = vand.u32 2147483647, %v2044
        %v2268 = vand.u32 2147483647, %v2131
        %v2269 = vand.u32 2147483647, %v2133
        %v2270 = vand.u32 2147483647, %v2220
        %v2271 = vand.u32 2147483647, %v2222
        %v2272 = vmul.f32 %v2224, -2.0
        %v2273 = vmul.f32 %v2225, -2.0
        %v2274 = vmul.f32 %v2226, -2.0
        %v2275 = vmul.f32 %v2227, -2.0
        %v2276 = vmul.f32 %v2228, -2.0
        %v2277 = vmul.f32 %v2229, -2.0
        %v2278 = vmul.f32 %v2230, -2.0
        %v2279 = vmul.f32 %v2231, -2.0
        %v2280 = vmul.f32 %v2232, -2.0
        %v2281 = vmul.f32 %v2233, -2.0
        %v2282 = vmul.f32 %v2234, -2.0
        %v2283 = vmul.f32 %v2235, -2.0
        %v2284 = vmul.f32 %v2236, -2.0
        %v2285 = vmul.f32 %v2237, -2.0
        %v2286 = vmul.f32 %v2238, -2.0
        %v2287 = vmul.f32 %v2239, -2.0
        %v2288 = vmul.f32 %v2240, -2.0
        %v2289 = vmul.f32 %v2241, -2.0
        %v2290 = vmul.f32 %v2242, -2.0
        %v2291 = vmul.f32 %v2243, -2.0
        %v2292 = vmul.f32 %v2244, -2.0
        %v2293 = vmul.f32 %v2245, -2.0
        %v2294 = vmul.f32 %v2246, -2.0
        %v2295 = vmul.f32 %v2247, -2.0
        %v2296 = vmul.f32 %v2248, -2.0
        %v2297 = vmul.f32 %v2249, -2.0
        %v2298 = vmul.f32 %v2250, -2.0
        %v2299 = vmul.f32 %v2251, -2.0
        %v2300 = vmul.f32 %v2252, -2.0
        %v2301 = vmul.f32 %v2253, -2.0
        %v2302 = vmul.f32 %v2254, -2.0
        %v2303 = vmul.f32 %v2255, -2.0
        %v2304 = vmul.f32 %v2256, -2.0
        %v2305 = vmul.f32 %v2257, -2.0
        %v2306 = vmul.f32 %v2258, -2.0
        %v2307 = vmul.f32 %v2259, -2.0
        %v2308 = vmul.f32 %v2260, -2.0
        %v2309 = vmul.f32 %v2261, -2.0
        %v2310 = vmul.f32 %v2262, -2.0
        %v2311 = vmul.f32 %v2263, -2.0
        %v2312 = vmul.f32 %v2264, -2.0
        %v2313 = vmul.f32 %v2265, -2.0
        %v2314 = vmul.f32 %v2266, -2.0
        %v2315 = vmul.f32 %v2267, -2.0
        %v2316 = vmul.f32 %v2268, -2.0
        %v2317 = vmul.f32 %v2269, -2.0
        %v2318 = vmul.f32 %v2270, -2.0
        %v2319 = vmul.f32 %v2271, -2.0
        %v2320 = vmul.f32 %v2272, 1.442695
        %v2321 = vpow.pop %v2320
        %v2322 = vmul.f32 %v2273, 1.442695
        %v2323 = vpow.pop %v2322
        %v2324 = vmul.f32 %v2274, 1.442695
        %v2325 = vpow.pop %v2324
        %v2326 = vmul.f32 %v2275, 1.442695
        %v2327 = vpow.pop %v2326
        %v2328 = vmul.f32 %v2276, 1.442695
        %v2329 = vpow.pop %v2328
        %v2330 = vmul.f32 %v2277, 1.442695
        %v2331 = vpow.pop %v2330
        %v2332 = vmul.f32 %v2278, 1.442695
        %v2333 = vpow.pop %v2332
        %v2334 = vmul.f32 %v2279, 1.442695
        %v2335 = vpow.pop %v2334
        %v2336 = vmul.f32 %v2280, 1.442695
        %v2337 = vpow.pop %v2336
        %v2338 = vmul.f32 %v2281, 1.442695
        %v2339 = vpow.pop %v2338
        %v2340 = vmul.f32 %v2282, 1.442695
        %v2341 = vpow.pop %v2340
        %v2342 = vmul.f32 %v2283, 1.442695
        %v2343 = vpow.pop %v2342
        %v2344 = vmul.f32 %v2284, 1.442695
        %v2345 = vpow.pop %v2344
        %v2346 = vmul.f32 %v2285, 1.442695
        %v2347 = vpow.pop %v2346
        %v2348 = vmul.f32 %v2286, 1.442695
        %v2349 = vpow.pop %v2348
        %v2350 = vmul.f32 %v2287, 1.442695
        %v2351 = vpow.pop %v2350
        %v2352 = vmul.f32 %v2288, 1.442695
        %v2353 = vpow.pop %v2352
        %v2354 = vmul.f32 %v2289, 1.442695
        %v2355 = vpow.pop %v2354
        %v2356 = vmul.f32 %v2290, 1.442695
        %v2357 = vpow.pop %v2356
        %v2358 = vmul.f32 %v2291, 1.442695
        %v2359 = vpow.pop %v2358
        %v2360 = vmul.f32 %v2292, 1.442695
        %v2361 = vpow.pop %v2360
        %v2362 = vmul.f32 %v2293, 1.442695
        %v2363 = vpow.pop %v2362
        %v2364 = vmul.f32 %v2294, 1.442695
        %v2365 = vpow.pop %v2364
        %v2366 = vmul.f32 %v2295, 1.442695
        %v2367 = vpow.pop %v2366
        %v2368 = vmul.f32 %v2296, 1.442695
        %v2369 = vpow.pop %v2368
        %v2370 = vmul.f32 %v2297, 1.442695
        %v2371 = vpow.pop %v2370
        %v2372 = vmul.f32 %v2298, 1.442695
        %v2373 = vpow.pop %v2372
        %v2374 = vmul.f32 %v2299, 1.442695
        %v2375 = vpow.pop %v2374
        %v2376 = vmul.f32 %v2300, 1.442695
        %v2377 = vpow.pop %v2376
        %v2378 = vmul.f32 %v2301, 1.442695
        %v2379 = vpow.pop %v2378
        %v2380 = vmul.f32 %v2302, 1.442695
        %v2381 = vpow.pop %v2380
        %v2382 = vmul.f32 %v2303, 1.442695
        %v2383 = vpow.pop %v2382
        %v2384 = vmul.f32 %v2304, 1.442695
        %v2385 = vpow.pop %v2384
        %v2386 = vmul.f32 %v2305, 1.442695
        %v2387 = vpow.pop %v2386
        %v2388 = vmul.f32 %v2306, 1.442695
        %v2389 = vpow.pop %v2388
        %v2390 = vmul.f32 %v2307, 1.442695
        %v2391 = vpow.pop %v2390
        %v2392 = vmul.f32 %v2308, 1.442695
        %v2393 = vpow.pop %v2392
        %v2394 = vmul.f32 %v2309, 1.442695
        %v2395 = vpow.pop %v2394
        %v2396 = vmul.f32 %v2310, 1.442695
        %v2397 = vpow.pop %v2396
        %v2398 = vmul.f32 %v2311, 1.442695
        %v2399 = vpow.pop %v2398
        %v2400 = vmul.f32 %v2312, 1.442695
        %v2401 = vpow.pop %v2400
        %v2402 = vmul.f32 %v2313, 1.442695
        %v2403 = vpow.pop %v2402
        %v2404 = vmul.f32 %v2314, 1.442695
        %v2405 = vpow.pop %v2404
        %v2406 = vmul.f32 %v2315, 1.442695
        %v2407 = vpow.pop %v2406
        %v2408 = vmul.f32 %v2316, 1.442695
        %v2409 = vpow.pop %v2408
        %v2410 = vmul.f32 %v2317, 1.442695
        %v2411 = vpow.pop %v2410
        %v2412 = vmul.f32 %v2318, 1.442695
        %v2413 = vpow.pop %v2412
        %v2414 = vmul.f32 %v2319, 1.442695
        %v2415 = vpow.pop %v2414
        %v2416 = vadd.f32 %v2321, 1.0
        %v2417 = vlog2.pop %v2416
        %v2418 = vmul.f32 %v2417, 0.6931472
        %v2419 = vmul.f32 -0.5, %v2321
        %v2420 = vadd.f32 %v2419, 1.0
        %v2421 = vmul.f32 %v2420, %v2321
        %v2422 = vand.u32 2147483647, %v2321
        %vm2423 = vcmp.lt.f32.partialorder %v2422, 0.0004427343
        %v2424 = vsel %vm2423, %v2421, %v2418
        %v2425 = vadd.f32 %v2323, 1.0
        %v2426 = vlog2.pop %v2425
        %v2427 = vmul.f32 %v2426, 0.6931472
        %v2428 = vmul.f32 -0.5, %v2323
        %v2429 = vadd.f32 %v2428, 1.0
        %v2430 = vmul.f32 %v2429, %v2323
        %v2431 = vand.u32 2147483647, %v2323
        %vm2432 = vcmp.lt.f32.partialorder %v2431, 0.0004427343
        %v2433 = vsel %vm2432, %v2430, %v2427
        %v2434 = vadd.f32 %v2325, 1.0
        %v2435 = vlog2.pop %v2434
        %v2436 = vmul.f32 %v2435, 0.6931472
        %v2437 = vmul.f32 -0.5, %v2325
        %v2438 = vadd.f32 %v2437, 1.0
        %v2439 = vmul.f32 %v2438, %v2325
        %v2440 = vand.u32 2147483647, %v2325
        %vm2441 = vcmp.lt.f32.partialorder %v2440, 0.0004427343
        %v2442 = vsel %vm2441, %v2439, %v2436
        %v2443 = vadd.f32 %v2327, 1.0
        %v2444 = vlog2.pop %v2443
        %v2445 = vmul.f32 %v2444, 0.6931472
        %v2446 = vmul.f32 -0.5, %v2327
        %v2447 = vadd.f32 %v2446, 1.0
        %v2448 = vmul.f32 %v2447, %v2327
        %v2449 = vand.u32 2147483647, %v2327
        %vm2450 = vcmp.lt.f32.partialorder %v2449, 0.0004427343
        %v2451 = vsel %vm2450, %v2448, %v2445
        %v2452 = vadd.f32 %v2329, 1.0
        %v2453 = vlog2.pop %v2452
        %v2454 = vmul.f32 %v2453, 0.6931472
        %v2455 = vmul.f32 -0.5, %v2329
        %v2456 = vadd.f32 %v2455, 1.0
        %v2457 = vmul.f32 %v2456, %v2329
        %v2458 = vand.u32 2147483647, %v2329
        %vm2459 = vcmp.lt.f32.partialorder %v2458, 0.0004427343
        %v2460 = vsel %vm2459, %v2457, %v2454
        %v2461 = vadd.f32 %v2331, 1.0
        %v2462 = vlog2.pop %v2461
        %v2463 = vmul.f32 %v2462, 0.6931472
        %v2464 = vmul.f32 -0.5, %v2331
        %v2465 = vadd.f32 %v2464, 1.0
        %v2466 = vmul.f32 %v2465, %v2331
        %v2467 = vand.u32 2147483647, %v2331
        %vm2468 = vcmp.lt.f32.partialorder %v2467, 0.0004427343
        %v2469 = vsel %vm2468, %v2466, %v2463
        %v2470 = vadd.f32 %v2333, 1.0
        %v2471 = vlog2.pop %v2470
        %v2472 = vmul.f32 %v2471, 0.6931472
        %v2473 = vmul.f32 -0.5, %v2333
        %v2474 = vadd.f32 %v2473, 1.0
        %v2475 = vmul.f32 %v2474, %v2333
        %v2476 = vand.u32 2147483647, %v2333
        %vm2477 = vcmp.lt.f32.partialorder %v2476, 0.0004427343
        %v2478 = vsel %vm2477, %v2475, %v2472
        %v2479 = vadd.f32 %v2335, 1.0
        %v2480 = vlog2.pop %v2479
        %v2481 = vmul.f32 %v2480, 0.6931472
        %v2482 = vmul.f32 -0.5, %v2335
        %v2483 = vadd.f32 %v2482, 1.0
        %v2484 = vmul.f32 %v2483, %v2335
        %v2485 = vand.u32 2147483647, %v2335
        %vm2486 = vcmp.lt.f32.partialorder %v2485, 0.0004427343
        %v2487 = vsel %vm2486, %v2484, %v2481
        %v2488 = vadd.f32 %v2337, 1.0
        %v2489 = vlog2.pop %v2488
        %v2490 = vmul.f32 %v2489, 0.6931472
        %v2491 = vmul.f32 -0.5, %v2337
        %v2492 = vadd.f32 %v2491, 1.0
        %v2493 = vmul.f32 %v2492, %v2337
        %v2494 = vand.u32 2147483647, %v2337
        %vm2495 = vcmp.lt.f32.partialorder %v2494, 0.0004427343
        %v2496 = vsel %vm2495, %v2493, %v2490
        %v2497 = vadd.f32 %v2339, 1.0
        %v2498 = vlog2.pop %v2497
        %v2499 = vmul.f32 %v2498, 0.6931472
        %v2500 = vmul.f32 -0.5, %v2339
        %v2501 = vadd.f32 %v2500, 1.0
        %v2502 = vmul.f32 %v2501, %v2339
        %v2503 = vand.u32 2147483647, %v2339
        %vm2504 = vcmp.lt.f32.partialorder %v2503, 0.0004427343
        %v2505 = vsel %vm2504, %v2502, %v2499
        %v2506 = vadd.f32 %v2341, 1.0
        %v2507 = vlog2.pop %v2506
        %v2508 = vmul.f32 %v2507, 0.6931472
        %v2509 = vmul.f32 -0.5, %v2341
        %v2510 = vadd.f32 %v2509, 1.0
        %v2511 = vmul.f32 %v2510, %v2341
        %v2512 = vand.u32 2147483647, %v2341
        %vm2513 = vcmp.lt.f32.partialorder %v2512, 0.0004427343
        %v2514 = vsel %vm2513, %v2511, %v2508
        %v2515 = vadd.f32 %v2343, 1.0
        %v2516 = vlog2.pop %v2515
        %v2517 = vmul.f32 %v2516, 0.6931472
        %v2518 = vmul.f32 -0.5, %v2343
        %v2519 = vadd.f32 %v2518, 1.0
        %v2520 = vmul.f32 %v2519, %v2343
        %v2521 = vand.u32 2147483647, %v2343
        %vm2522 = vcmp.lt.f32.partialorder %v2521, 0.0004427343
        %v2523 = vsel %vm2522, %v2520, %v2517
        %v2524 = vadd.f32 %v2345, 1.0
        %v2525 = vlog2.pop %v2524
        %v2526 = vmul.f32 %v2525, 0.6931472
        %v2527 = vmul.f32 -0.5, %v2345
        %v2528 = vadd.f32 %v2527, 1.0
        %v2529 = vmul.f32 %v2528, %v2345
        %v2530 = vand.u32 2147483647, %v2345
        %vm2531 = vcmp.lt.f32.partialorder %v2530, 0.0004427343
        %v2532 = vsel %vm2531, %v2529, %v2526
        %v2533 = vadd.f32 %v2347, 1.0
        %v2534 = vlog2.pop %v2533
        %v2535 = vmul.f32 %v2534, 0.6931472
        %v2536 = vmul.f32 -0.5, %v2347
        %v2537 = vadd.f32 %v2536, 1.0
        %v2538 = vmul.f32 %v2537, %v2347
        %v2539 = vand.u32 2147483647, %v2347
        %vm2540 = vcmp.lt.f32.partialorder %v2539, 0.0004427343
        %v2541 = vsel %vm2540, %v2538, %v2535
        %v2542 = vadd.f32 %v2349, 1.0
        %v2543 = vlog2.pop %v2542
        %v2544 = vmul.f32 %v2543, 0.6931472
        %v2545 = vmul.f32 -0.5, %v2349
        %v2546 = vadd.f32 %v2545, 1.0
        %v2547 = vmul.f32 %v2546, %v2349
        %v2548 = vand.u32 2147483647, %v2349
        %vm2549 = vcmp.lt.f32.partialorder %v2548, 0.0004427343
        %v2550 = vsel %vm2549, %v2547, %v2544
        %v2551 = vadd.f32 %v2351, 1.0
        %v2552 = vlog2.pop %v2551
        %v2553 = vmul.f32 %v2552, 0.6931472
        %v2554 = vmul.f32 -0.5, %v2351
        %v2555 = vadd.f32 %v2554, 1.0
        %v2556 = vmul.f32 %v2555, %v2351
        %v2557 = vand.u32 2147483647, %v2351
        %vm2558 = vcmp.lt.f32.partialorder %v2557, 0.0004427343
        %v2559 = vsel %vm2558, %v2556, %v2553
        %v2560 = vadd.f32 %v2353, 1.0
        %v2561 = vlog2.pop %v2560
        %v2562 = vmul.f32 %v2561, 0.6931472
        %v2563 = vmul.f32 -0.5, %v2353
        %v2564 = vadd.f32 %v2563, 1.0
        %v2565 = vmul.f32 %v2564, %v2353
        %v2566 = vand.u32 2147483647, %v2353
        %vm2567 = vcmp.lt.f32.partialorder %v2566, 0.0004427343
        %v2568 = vsel %vm2567, %v2565, %v2562
        %v2569 = vadd.f32 %v2355, 1.0
        %v2570 = vlog2.pop %v2569
        %v2571 = vmul.f32 %v2570, 0.6931472
        %v2572 = vmul.f32 -0.5, %v2355
        %v2573 = vadd.f32 %v2572, 1.0
        %v2574 = vmul.f32 %v2573, %v2355
        %v2575 = vand.u32 2147483647, %v2355
        %vm2576 = vcmp.lt.f32.partialorder %v2575, 0.0004427343
        %v2577 = vsel %vm2576, %v2574, %v2571
        %v2578 = vadd.f32 %v2357, 1.0
        %v2579 = vlog2.pop %v2578
        %v2580 = vmul.f32 %v2579, 0.6931472
        %v2581 = vmul.f32 -0.5, %v2357
        %v2582 = vadd.f32 %v2581, 1.0
        %v2583 = vmul.f32 %v2582, %v2357
        %v2584 = vand.u32 2147483647, %v2357
        %vm2585 = vcmp.lt.f32.partialorder %v2584, 0.0004427343
        %v2586 = vsel %vm2585, %v2583, %v2580
        %v2587 = vadd.f32 %v2359, 1.0
        %v2588 = vlog2.pop %v2587
        %v2589 = vmul.f32 %v2588, 0.6931472
        %v2590 = vmul.f32 -0.5, %v2359
        %v2591 = vadd.f32 %v2590, 1.0
        %v2592 = vmul.f32 %v2591, %v2359
        %v2593 = vand.u32 2147483647, %v2359
        %vm2594 = vcmp.lt.f32.partialorder %v2593, 0.0004427343
        %v2595 = vsel %vm2594, %v2592, %v2589
        %v2596 = vadd.f32 %v2361, 1.0
        %v2597 = vlog2.pop %v2596
        %v2598 = vmul.f32 %v2597, 0.6931472
        %v2599 = vmul.f32 -0.5, %v2361
        %v2600 = vadd.f32 %v2599, 1.0
        %v2601 = vmul.f32 %v2600, %v2361
        %v2602 = vand.u32 2147483647, %v2361
        %vm2603 = vcmp.lt.f32.partialorder %v2602, 0.0004427343
        %v2604 = vsel %vm2603, %v2601, %v2598
        %v2605 = vadd.f32 %v2363, 1.0
        %v2606 = vlog2.pop %v2605
        %v2607 = vmul.f32 %v2606, 0.6931472
        %v2608 = vmul.f32 -0.5, %v2363
        %v2609 = vadd.f32 %v2608, 1.0
        %v2610 = vmul.f32 %v2609, %v2363
        %v2611 = vand.u32 2147483647, %v2363
        %vm2612 = vcmp.lt.f32.partialorder %v2611, 0.0004427343
        %v2613 = vsel %vm2612, %v2610, %v2607
        %v2614 = vadd.f32 %v2365, 1.0
        %v2615 = vlog2.pop %v2614
        %v2616 = vmul.f32 %v2615, 0.6931472
        %v2617 = vmul.f32 -0.5, %v2365
        %v2618 = vadd.f32 %v2617, 1.0
        %v2619 = vmul.f32 %v2618, %v2365
        %v2620 = vand.u32 2147483647, %v2365
        %vm2621 = vcmp.lt.f32.partialorder %v2620, 0.0004427343
        %v2622 = vsel %vm2621, %v2619, %v2616
        %v2623 = vadd.f32 %v2367, 1.0
        %v2624 = vlog2.pop %v2623
        %v2625 = vmul.f32 %v2624, 0.6931472
        %v2626 = vmul.f32 -0.5, %v2367
        %v2627 = vadd.f32 %v2626, 1.0
        %v2628 = vmul.f32 %v2627, %v2367
        %v2629 = vand.u32 2147483647, %v2367
        %vm2630 = vcmp.lt.f32.partialorder %v2629, 0.0004427343
        %v2631 = vsel %vm2630, %v2628, %v2625
        %v2632 = vadd.f32 %v2369, 1.0
        %v2633 = vlog2.pop %v2632
        %v2634 = vmul.f32 %v2633, 0.6931472
        %v2635 = vmul.f32 -0.5, %v2369
        %v2636 = vadd.f32 %v2635, 1.0
        %v2637 = vmul.f32 %v2636, %v2369
        %v2638 = vand.u32 2147483647, %v2369
        %vm2639 = vcmp.lt.f32.partialorder %v2638, 0.0004427343
        %v2640 = vsel %vm2639, %v2637, %v2634
        %v2641 = vadd.f32 %v2371, 1.0
        %v2642 = vlog2.pop %v2641
        %v2643 = vmul.f32 %v2642, 0.6931472
        %v2644 = vmul.f32 -0.5, %v2371
        %v2645 = vadd.f32 %v2644, 1.0
        %v2646 = vmul.f32 %v2645, %v2371
        %v2647 = vand.u32 2147483647, %v2371
        %vm2648 = vcmp.lt.f32.partialorder %v2647, 0.0004427343
        %v2649 = vsel %vm2648, %v2646, %v2643
        %v2650 = vadd.f32 %v2373, 1.0
        %v2651 = vlog2.pop %v2650
        %v2652 = vmul.f32 %v2651, 0.6931472
        %v2653 = vmul.f32 -0.5, %v2373
        %v2654 = vadd.f32 %v2653, 1.0
        %v2655 = vmul.f32 %v2654, %v2373
        %v2656 = vand.u32 2147483647, %v2373
        %vm2657 = vcmp.lt.f32.partialorder %v2656, 0.0004427343
        %v2658 = vsel %vm2657, %v2655, %v2652
        %v2659 = vadd.f32 %v2375, 1.0
        %v2660 = vlog2.pop %v2659
        %v2661 = vmul.f32 %v2660, 0.6931472
        %v2662 = vmul.f32 -0.5, %v2375
        %v2663 = vadd.f32 %v2662, 1.0
        %v2664 = vmul.f32 %v2663, %v2375
        %v2665 = vand.u32 2147483647, %v2375
        %vm2666 = vcmp.lt.f32.partialorder %v2665, 0.0004427343
        %v2667 = vsel %vm2666, %v2664, %v2661
        %v2668 = vadd.f32 %v2377, 1.0
        %v2669 = vlog2.pop %v2668
        %v2670 = vmul.f32 %v2669, 0.6931472
        %v2671 = vmul.f32 -0.5, %v2377
        %v2672 = vadd.f32 %v2671, 1.0
        %v2673 = vmul.f32 %v2672, %v2377
        %v2674 = vand.u32 2147483647, %v2377
        %vm2675 = vcmp.lt.f32.partialorder %v2674, 0.0004427343
        %v2676 = vsel %vm2675, %v2673, %v2670
        %v2677 = vadd.f32 %v2379, 1.0
        %v2678 = vlog2.pop %v2677
        %v2679 = vmul.f32 %v2678, 0.6931472
        %v2680 = vmul.f32 -0.5, %v2379
        %v2681 = vadd.f32 %v2680, 1.0
        %v2682 = vmul.f32 %v2681, %v2379
        %v2683 = vand.u32 2147483647, %v2379
        %vm2684 = vcmp.lt.f32.partialorder %v2683, 0.0004427343
        %v2685 = vsel %vm2684, %v2682, %v2679
        %v2686 = vadd.f32 %v2381, 1.0
        %v2687 = vlog2.pop %v2686
        %v2688 = vmul.f32 %v2687, 0.6931472
        %v2689 = vmul.f32 -0.5, %v2381
        %v2690 = vadd.f32 %v2689, 1.0
        %v2691 = vmul.f32 %v2690, %v2381
        %v2692 = vand.u32 2147483647, %v2381
        %vm2693 = vcmp.lt.f32.partialorder %v2692, 0.0004427343
        %v2694 = vsel %vm2693, %v2691, %v2688
        %v2695 = vadd.f32 %v2383, 1.0
        %v2696 = vlog2.pop %v2695
        %v2697 = vmul.f32 %v2696, 0.6931472
        %v2698 = vmul.f32 -0.5, %v2383
        %v2699 = vadd.f32 %v2698, 1.0
        %v2700 = vmul.f32 %v2699, %v2383
        %v2701 = vand.u32 2147483647, %v2383
        %vm2702 = vcmp.lt.f32.partialorder %v2701, 0.0004427343
        %v2703 = vsel %vm2702, %v2700, %v2697
        %v2704 = vadd.f32 %v2385, 1.0
        %v2705 = vlog2.pop %v2704
        %v2706 = vmul.f32 %v2705, 0.6931472
        %v2707 = vmul.f32 -0.5, %v2385
        %v2708 = vadd.f32 %v2707, 1.0
        %v2709 = vmul.f32 %v2708, %v2385
        %v2710 = vand.u32 2147483647, %v2385
        %vm2711 = vcmp.lt.f32.partialorder %v2710, 0.0004427343
        %v2712 = vsel %vm2711, %v2709, %v2706
        %v2713 = vadd.f32 %v2387, 1.0
        %v2714 = vlog2.pop %v2713
        %v2715 = vmul.f32 %v2714, 0.6931472
        %v2716 = vmul.f32 -0.5, %v2387
        %v2717 = vadd.f32 %v2716, 1.0
        %v2718 = vmul.f32 %v2717, %v2387
        %v2719 = vand.u32 2147483647, %v2387
        %vm2720 = vcmp.lt.f32.partialorder %v2719, 0.0004427343
        %v2721 = vsel %vm2720, %v2718, %v2715
        %v2722 = vadd.f32 %v2389, 1.0
        %v2723 = vlog2.pop %v2722
        %v2724 = vmul.f32 %v2723, 0.6931472
        %v2725 = vmul.f32 -0.5, %v2389
        %v2726 = vadd.f32 %v2725, 1.0
        %v2727 = vmul.f32 %v2726, %v2389
        %v2728 = vand.u32 2147483647, %v2389
        %vm2729 = vcmp.lt.f32.partialorder %v2728, 0.0004427343
        %v2730 = vsel %vm2729, %v2727, %v2724
        %v2731 = vadd.f32 %v2391, 1.0
        %v2732 = vlog2.pop %v2731
        %v2733 = vmul.f32 %v2732, 0.6931472
        %v2734 = vmul.f32 -0.5, %v2391
        %v2735 = vadd.f32 %v2734, 1.0
        %v2736 = vmul.f32 %v2735, %v2391
        %v2737 = vand.u32 2147483647, %v2391
        %vm2738 = vcmp.lt.f32.partialorder %v2737, 0.0004427343
        %v2739 = vsel %vm2738, %v2736, %v2733
        %v2740 = vadd.f32 %v2393, 1.0
        %v2741 = vlog2.pop %v2740
        %v2742 = vmul.f32 %v2741, 0.6931472
        %v2743 = vmul.f32 -0.5, %v2393
        %v2744 = vadd.f32 %v2743, 1.0
        %v2745 = vmul.f32 %v2744, %v2393
        %v2746 = vand.u32 2147483647, %v2393
        %vm2747 = vcmp.lt.f32.partialorder %v2746, 0.0004427343
        %v2748 = vsel %vm2747, %v2745, %v2742
        %v2749 = vadd.f32 %v2395, 1.0
        %v2750 = vlog2.pop %v2749
        %v2751 = vmul.f32 %v2750, 0.6931472
        %v2752 = vmul.f32 -0.5, %v2395
        %v2753 = vadd.f32 %v2752, 1.0
        %v2754 = vmul.f32 %v2753, %v2395
        %v2755 = vand.u32 2147483647, %v2395
        %vm2756 = vcmp.lt.f32.partialorder %v2755, 0.0004427343
        %v2757 = vsel %vm2756, %v2754, %v2751
        %v2758 = vadd.f32 %v2397, 1.0
        %v2759 = vlog2.pop %v2758
        %v2760 = vmul.f32 %v2759, 0.6931472
        %v2761 = vmul.f32 -0.5, %v2397
        %v2762 = vadd.f32 %v2761, 1.0
        %v2763 = vmul.f32 %v2762, %v2397
        %v2764 = vand.u32 2147483647, %v2397
        %vm2765 = vcmp.lt.f32.partialorder %v2764, 0.0004427343
        %v2766 = vsel %vm2765, %v2763, %v2760
        %v2767 = vadd.f32 %v2399, 1.0
        %v2768 = vlog2.pop %v2767
        %v2769 = vmul.f32 %v2768, 0.6931472
        %v2770 = vmul.f32 -0.5, %v2399
        %v2771 = vadd.f32 %v2770, 1.0
        %v2772 = vmul.f32 %v2771, %v2399
        %v2773 = vand.u32 2147483647, %v2399
        %vm2774 = vcmp.lt.f32.partialorder %v2773, 0.0004427343
        %v2775 = vsel %vm2774, %v2772, %v2769
        %v2776 = vadd.f32 %v2401, 1.0
        %v2777 = vlog2.pop %v2776
        %v2778 = vmul.f32 %v2777, 0.6931472
        %v2779 = vmul.f32 -0.5, %v2401
        %v2780 = vadd.f32 %v2779, 1.0
        %v2781 = vmul.f32 %v2780, %v2401
        %v2782 = vand.u32 2147483647, %v2401
        %vm2783 = vcmp.lt.f32.partialorder %v2782, 0.0004427343
        %v2784 = vsel %vm2783, %v2781, %v2778
        %v2785 = vadd.f32 %v2403, 1.0
        %v2786 = vlog2.pop %v2785
        %v2787 = vmul.f32 %v2786, 0.6931472
        %v2788 = vmul.f32 -0.5, %v2403
        %v2789 = vadd.f32 %v2788, 1.0
        %v2790 = vmul.f32 %v2789, %v2403
        %v2791 = vand.u32 2147483647, %v2403
        %vm2792 = vcmp.lt.f32.partialorder %v2791, 0.0004427343
        %v2793 = vsel %vm2792, %v2790, %v2787
        %v2794 = vadd.f32 %v2405, 1.0
        %v2795 = vlog2.pop %v2794
        %v2796 = vmul.f32 %v2795, 0.6931472
        %v2797 = vmul.f32 -0.5, %v2405
        %v2798 = vadd.f32 %v2797, 1.0
        %v2799 = vmul.f32 %v2798, %v2405
        %v2800 = vand.u32 2147483647, %v2405
        %vm2801 = vcmp.lt.f32.partialorder %v2800, 0.0004427343
        %v2802 = vsel %vm2801, %v2799, %v2796
        %v2803 = vadd.f32 %v2407, 1.0
        %v2804 = vlog2.pop %v2803
        %v2805 = vmul.f32 %v2804, 0.6931472
        %v2806 = vmul.f32 -0.5, %v2407
        %v2807 = vadd.f32 %v2806, 1.0
        %v2808 = vmul.f32 %v2807, %v2407
        %v2809 = vand.u32 2147483647, %v2407
        %vm2810 = vcmp.lt.f32.partialorder %v2809, 0.0004427343
        %v2811 = vsel %vm2810, %v2808, %v2805
        %v2812 = vadd.f32 %v2409, 1.0
        %v2813 = vlog2.pop %v2812
        %v2814 = vmul.f32 %v2813, 0.6931472
        %v2815 = vmul.f32 -0.5, %v2409
        %v2816 = vadd.f32 %v2815, 1.0
        %v2817 = vmul.f32 %v2816, %v2409
        %v2818 = vand.u32 2147483647, %v2409
        %vm2819 = vcmp.lt.f32.partialorder %v2818, 0.0004427343
        %v2820 = vsel %vm2819, %v2817, %v2814
        %v2821 = vadd.f32 %v2411, 1.0
        %v2822 = vlog2.pop %v2821
        %v2823 = vmul.f32 %v2822, 0.6931472
        %v2824 = vmul.f32 -0.5, %v2411
        %v2825 = vadd.f32 %v2824, 1.0
        %v2826 = vmul.f32 %v2825, %v2411
        %v2827 = vand.u32 2147483647, %v2411
        %vm2828 = vcmp.lt.f32.partialorder %v2827, 0.0004427343
        %v2829 = vsel %vm2828, %v2826, %v2823
        %v2830 = vadd.f32 %v2413, 1.0
        %v2831 = vlog2.pop %v2830
        %v2832 = vmul.f32 %v2831, 0.6931472
        %v2833 = vmul.f32 -0.5, %v2413
        %v2834 = vadd.f32 %v2833, 1.0
        %v2835 = vmul.f32 %v2834, %v2413
        %v2836 = vand.u32 2147483647, %v2413
        %vm2837 = vcmp.lt.f32.partialorder %v2836, 0.0004427343
        %v2838 = vsel %vm2837, %v2835, %v2832
        %v2839 = vadd.f32 %v2415, 1.0
        %v2840 = vlog2.pop %v2839
        %v2841 = vmul.f32 %v2840, 0.6931472
        %v2842 = vmul.f32 -0.5, %v2415
        %v2843 = vadd.f32 %v2842, 1.0
        %v2844 = vmul.f32 %v2843, %v2415
        %v2845 = vand.u32 2147483647, %v2415
        %vm2846 = vcmp.lt.f32.partialorder %v2845, 0.0004427343
        %v2847 = vsel %vm2846, %v2844, %v2841
        %v2848 = vadd.f32 %v2224, %v2424
        %v2849 = vadd.f32 %v2225, %v2433
        %v2850 = vadd.f32 %v2226, %v2442
        %v2851 = vadd.f32 %v2227, %v2451
        %v2852 = vadd.f32 %v2228, %v2460
        %v2853 = vadd.f32 %v2229, %v2469
        %v2854 = vadd.f32 %v2230, %v2478
        %v2855 = vadd.f32 %v2231, %v2487
        %v2856 = vadd.f32 %v2232, %v2496
        %v2857 = vadd.f32 %v2233, %v2505
        %v2858 = vadd.f32 %v2234, %v2514
        %v2859 = vadd.f32 %v2235, %v2523
        %v2860 = vadd.f32 %v2236, %v2532
        %v2861 = vadd.f32 %v2237, %v2541
        %v2862 = vadd.f32 %v2238, %v2550
        %v2863 = vadd.f32 %v2239, %v2559
        %v2864 = vadd.f32 %v2240, %v2568
        %v2865 = vadd.f32 %v2241, %v2577
        %v2866 = vadd.f32 %v2242, %v2586
        %v2867 = vadd.f32 %v2243, %v2595
        %v2868 = vadd.f32 %v2244, %v2604
        %v2869 = vadd.f32 %v2245, %v2613
        %v2870 = vadd.f32 %v2246, %v2622
        %v2871 = vadd.f32 %v2247, %v2631
        %v2872 = vadd.f32 %v2248, %v2640
        %v2873 = vadd.f32 %v2249, %v2649
        %v2874 = vadd.f32 %v2250, %v2658
        %v2875 = vadd.f32 %v2251, %v2667
        %v2876 = vadd.f32 %v2252, %v2676
        %v2877 = vadd.f32 %v2253, %v2685
        %v2878 = vadd.f32 %v2254, %v2694
        %v2879 = vadd.f32 %v2255, %v2703
        %v2880 = vadd.f32 %v2256, %v2712
        %v2881 = vadd.f32 %v2257, %v2721
        %v2882 = vadd.f32 %v2258, %v2730
        %v2883 = vadd.f32 %v2259, %v2739
        %v2884 = vadd.f32 %v2260, %v2748
        %v2885 = vadd.f32 %v2261, %v2757
        %v2886 = vadd.f32 %v2262, %v2766
        %v2887 = vadd.f32 %v2263, %v2775
        %v2888 = vadd.f32 %v2264, %v2784
        %v2889 = vadd.f32 %v2265, %v2793
        %v2890 = vadd.f32 %v2266, %v2802
        %v2891 = vadd.f32 %v2267, %v2811
        %v2892 = vadd.f32 %v2268, %v2820
        %v2893 = vadd.f32 %v2269, %v2829
        %v2894 = vadd.f32 %v2270, %v2838
        %v2895 = vadd.f32 %v2271, %v2847
        %v2896 = vmul.f32 %v2848, 0.5
        %v2897 = vmul.f32 %v2849, 0.5
        %v2898 = vmul.f32 %v2850, 0.5
        %v2899 = vmul.f32 %v2851, 0.5
        %v2900 = vmul.f32 %v2852, 0.5
        %v2901 = vmul.f32 %v2853, 0.5
        %v2902 = vmul.f32 %v2854, 0.5
        %v2903 = vmul.f32 %v2855, 0.5
        %v2904 = vmul.f32 %v2856, 0.5
        %v2905 = vmul.f32 %v2857, 0.5
        %v2906 = vmul.f32 %v2858, 0.5
        %v2907 = vmul.f32 %v2859, 0.5
        %v2908 = vmul.f32 %v2860, 0.5
        %v2909 = vmul.f32 %v2861, 0.5
        %v2910 = vmul.f32 %v2862, 0.5
        %v2911 = vmul.f32 %v2863, 0.5
        %v2912 = vmul.f32 %v2864, 0.5
        %v2913 = vmul.f32 %v2865, 0.5
        %v2914 = vmul.f32 %v2866, 0.5
        %v2915 = vmul.f32 %v2867, 0.5
        %v2916 = vmul.f32 %v2868, 0.5
        %v2917 = vmul.f32 %v2869, 0.5
        %v2918 = vmul.f32 %v2870, 0.5
        %v2919 = vmul.f32 %v2871, 0.5
        %v2920 = vmul.f32 %v2872, 0.5
        %v2921 = vmul.f32 %v2873, 0.5
        %v2922 = vmul.f32 %v2874, 0.5
        %v2923 = vmul.f32 %v2875, 0.5
        %v2924 = vmul.f32 %v2876, 0.5
        %v2925 = vmul.f32 %v2877, 0.5
        %v2926 = vmul.f32 %v2878, 0.5
        %v2927 = vmul.f32 %v2879, 0.5
        %v2928 = vmul.f32 %v2880, 0.5
        %v2929 = vmul.f32 %v2881, 0.5
        %v2930 = vmul.f32 %v2882, 0.5
        %v2931 = vmul.f32 %v2883, 0.5
        %v2932 = vmul.f32 %v2884, 0.5
        %v2933 = vmul.f32 %v2885, 0.5
        %v2934 = vmul.f32 %v2886, 0.5
        %v2935 = vmul.f32 %v2887, 0.5
        %v2936 = vmul.f32 %v2888, 0.5
        %v2937 = vmul.f32 %v2889, 0.5
        %v2938 = vmul.f32 %v2890, 0.5
        %v2939 = vmul.f32 %v2891, 0.5
        %v2940 = vmul.f32 %v2892, 0.5
        %v2941 = vmul.f32 %v2893, 0.5
        %v2942 = vmul.f32 %v2894, 0.5
        %v2943 = vmul.f32 %v2895, 0.5
        %v2944 = vadd.f32 %v1601, %v2896
        %v2945 = vadd.f32 %v1602, %v2897
        %v2946 = vadd.f32 %v1603, %v2898
        %v2947 = vadd.f32 %v1604, %v2899
        %v2948 = vadd.f32 %v1605, %v2900
        %v2949 = vadd.f32 %v1606, %v2901
        %v2950 = vadd.f32 %v1607, %v2902
        %v2951 = vadd.f32 %v1608, %v2903
        %v2952 = vadd.f32 %v1609, %v2904
        %v2953 = vadd.f32 %v1610, %v2905
        %v2954 = vadd.f32 %v1611, %v2906
        %v2955 = vadd.f32 %v1612, %v2907
        %v2956 = vadd.f32 %v1613, %v2908
        %v2957 = vadd.f32 %v1614, %v2909
        %v2958 = vadd.f32 %v1615, %v2910
        %v2959 = vadd.f32 %v1616, %v2911
        %v2960 = vadd.f32 %v1617, %v2912
        %v2961 = vadd.f32 %v1618, %v2913
        %v2962 = vadd.f32 %v1619, %v2914
        %v2963 = vadd.f32 %v1620, %v2915
        %v2964 = vadd.f32 %v1621, %v2916
        %v2965 = vadd.f32 %v1622, %v2917
        %v2966 = vadd.f32 %v1623, %v2918
        %v2967 = vadd.f32 %v1624, %v2919
        %v2968 = vadd.f32 %v1625, %v2920
        %v2969 = vadd.f32 %v1626, %v2921
        %v2970 = vadd.f32 %v1627, %v2922
        %v2971 = vadd.f32 %v1628, %v2923
        %v2972 = vadd.f32 %v1629, %v2924
        %v2973 = vadd.f32 %v1630, %v2925
        %v2974 = vadd.f32 %v1631, %v2926
        %v2975 = vadd.f32 %v1632, %v2927
        %v2976 = vadd.f32 %v1633, %v2928
        %v2977 = vadd.f32 %v1634, %v2929
        %v2978 = vadd.f32 %v1635, %v2930
        %v2979 = vadd.f32 %v1636, %v2931
        %v2980 = vadd.f32 %v1637, %v2932
        %v2981 = vadd.f32 %v1638, %v2933
        %v2982 = vadd.f32 %v1639, %v2934
        %v2983 = vadd.f32 %v1640, %v2935
        %v2984 = vadd.f32 %v1641, %v2936
        %v2985 = vadd.f32 %v1642, %v2937
        %v2986 = vadd.f32 %v1643, %v2938
        %v2987 = vadd.f32 %v1644, %v2939
        %v2988 = vadd.f32 %v1645, %v2940
        %v2989 = vadd.f32 %v1646, %v2941
        %v2990 = vadd.f32 %v1647, %v2942
        %v2991 = vadd.f32 %v1648, %v2943
        %s2992 = scalar_lea.vmem %s3, 32
        %v2993 = vld [vmem:[%s2992] sm:$0xff]
        %v2994 = vld [vmem:[%s2992 + $0x8] sm:$0xff]
        %v2995 = vld [vmem:[%s2992 + $0x10] sm:$0xff]
        %v2996 = vld [vmem:[%s2992 + $0x18] sm:$0xff]
        %s2997 = scalar_lea.vmem %s4, 32
        %v2998 = vld [vmem:[%s2997] sm:$0xff]
        %v2999 = vld [vmem:[%s2997 + $0x8] sm:$0xff]
        %v3000 = vld [vmem:[%s2997 + $0x10] sm:$0xff]
        %v3001 = vld [vmem:[%s2997 + $0x18] sm:$0xff]
        %3003 = vset.pattern.permute.xlu0 0
        %3004 = vperm.xlu0 %3003, %v2998
        %v3005 = vpop.permute.xlu0 %3004
        %3008 = vset.pattern.permute.xlu0 0
        %3009 = vperm.xlu0 %3008, %v2999
        %v3010 = vpop.permute.xlu0 %3009
        %3013 = vset.pattern.permute.xlu0 0
        %3014 = vperm.xlu0 %3013, %v3000
        %v3015 = vpop.permute.xlu0 %3014
        %3018 = vset.pattern.permute.xlu0 0
        %3019 = vperm.xlu0 %3018, %v3001
        %v3020 = vpop.permute.xlu0 %3019
        %v3023 = vsel %vm1677, %v2993, 0
        %v3026 = vsel %vm1677, %v2994, 0
        %v3029 = vsel %vm1677, %v2995, 0
        %v3032 = vsel %vm1677, %v2996, 0
        %3034 = vmatprep.subr.mxu0 %v2945
        %3035 = vmatpush1.msra.mxu0 %v2944
        %3036 = vmatprep.subr.mxu0 %v2957
        %3037 = vmatpush1.msra.mxu0 %v2956
        %3038 = vmatprep.subr.mxu0 %v2969
        %3039 = vmatpush1.msra.mxu0 %v2968
        %3040 = vmatprep.subr.mxu0 %v2981
        %3041 = vmatpush1.msra.mxu0 %v2980
        %3042 = vmatprep.subr.mxu0 0.0
        %3043 = vmatpush1.msra.mxu0 0.0
        %3044 = vmatprep.subr.mxu0 0.0
        %3045 = vmatpush1.msra.mxu0 0.0
        %3046 = vmatprep.subr.mxu0 0.0
        %3047 = vmatpush1.msra.mxu0 0.0
        %3048 = vmatprep.subr.mxu0 0.0
        %3049 = vmatpush1.msra.mxu0 0.0
        %3050 = vmatprep.subr.mxu0 0.0
        %3051 = vmatpush1.msra.mxu0 0.0
        %3052 = vmatprep.subr.mxu0 0.0
        %3053 = vmatpush1.msra.mxu0 0.0
        %3054 = vmatprep.subr.mxu0 0.0
        %3055 = vmatpush1.msra.mxu0 0.0
        %3056 = vmatprep.subr.mxu0 0.0
        %3057 = vmatpush1.msra.mxu0 0.0
        %3058 = vmatprep.subr.mxu0 0.0
        %3059 = vmatpush1.msra.mxu0 0.0
        %3060 = vmatprep.subr.mxu0 0.0
        %3061 = vmatpush1.msra.mxu0 0.0
        %3062 = vmatprep.subr.mxu0 0.0
        %3063 = vmatpush1.msra.mxu0 0.0
        %3064 = vmatprep.subr.mxu0 0.0
        %3065 = vmatpush1.msra.mxu0 0.0
        %3066 = vmatprep.subr.mxu0 0.0
        %3067 = vmatpush1.msra.mxu0 0.0
        %3068 = vmatprep.subr.mxu0 0.0
        %3069 = vmatpush1.msra.mxu0 0.0
        %3070 = vmatprep.subr.mxu0 0.0
        %3071 = vmatpush1.msra.mxu0 0.0
        %3072 = vmatprep.subr.mxu0 0.0
        %3073 = vmatpush1.msra.mxu0 0.0
        %3074 = vmatprep.subr.mxu0 0.0
        %3075 = vmatpush1.msra.mxu0 0.0
        %3076 = vmatprep.subr.mxu0 0.0
        %3077 = vmatpush1.msra.mxu0 0.0
        %3078 = vmatprep.subr.mxu0 0.0
        %3079 = vmatpush1.msra.mxu0 0.0
        %3080 = vmatprep.subr.mxu0 0.0
        %3081 = vmatpush1.msra.mxu0 0.0
        %3082 = vmatprep.subr.mxu0 0.0
        %3083 = vmatpush1.msra.mxu0 0.0
        %3084 = vmatprep.subr.mxu0 0.0
        %3085 = vmatpush1.msra.mxu0 0.0
        %3086 = vmatprep.subr.mxu0 0.0
        %3087 = vmatpush1.msra.mxu0 0.0
        %3088 = vmatprep.subr.mxu0 0.0
        %3089 = vmatpush1.msra.mxu0 0.0
        %3090 = vmatprep.subr.mxu0 0.0
        %3091 = vmatpush1.msra.mxu0 0.0
        %3092 = vmatprep.subr.mxu0 0.0
        %3093 = vmatpush1.msra.mxu0 0.0
        %3094 = vmatprep.subr.mxu0 0.0
        %3095 = vmatpush1.msra.mxu0 0.0
        %3096 = vmatprep.subr.mxu0 0.0
        %3097 = vmatpush1.msra.mxu0 0.0
        %3098 = vmatprep.mubr.f32.mxu0 0.0
        %3099 = vmatmul.mubr.f32.gmra.mrb[0].mxu0 %v3023
        %v3100 = vpop.f32.mrb[0].mxu0
        %v3101 = vadd.f32 %v3005, %v3100
        %v3102 = vpop.f32.mrb[0].mxu0
        %v3103 = vadd.f32 %v3005, %v3102
        %3104 = vmatprep.mubr.f32.mxu0 0.0
        %3105 = vmatmul.mubr.f32.gmra.mrb[0].mxu0 %v3026
        %v3106 = vpop.f32.mrb[0].mxu0
        %v3107 = vadd.f32 %v3010, %v3106
        %v3108 = vpop.f32.mrb[0].mxu0
        %v3109 = vadd.f32 %v3010, %v3108
        %3110 = vmatprep.mubr.f32.mxu0 0.0
        %3111 = vmatmul.mubr.f32.gmra.mrb[0].mxu0 %v3029
        %v3112 = vpop.f32.mrb[0].mxu0
        %v3113 = vadd.f32 %v3015, %v3112
        %v3114 = vpop.f32.mrb[0].mxu0
        %v3115 = vadd.f32 %v3015, %v3114
        %3116 = vmatprep.mubr.f32.mxu0 0.0
        %3117 = vmatmul.mubr.f32.gmra.mrb[0].mxu0 %v3032
        %v3118 = vpop.f32.mrb[0].mxu0
        %v3119 = vadd.f32 %v3020, %v3118
        %v3120 = vpop.f32.mrb[0].mxu0
        %v3121 = vadd.f32 %v3020, %v3120
        %3122 = vdwg.mxu0
        %3123 = vmatprep.subr.mxu0 %v2947
        %3124 = vmatpush1.msra.mxu0 %v2946
        %3125 = vmatprep.subr.mxu0 %v2959
        %3126 = vmatpush1.msra.mxu0 %v2958
        %3127 = vmatprep.subr.mxu0 %v2971
        %3128 = vmatpush1.msra.mxu0 %v2970
        %3129 = vmatprep.subr.mxu0 %v2983
        %3130 = vmatpush1.msra.mxu0 %v2982
        %3131 = vmatprep.subr.mxu0 0.0
        %3132 = vmatpush1.msra.mxu0 0.0
        %3133 = vmatprep.subr.mxu0 0.0
        %3134 = vmatpush1.msra.mxu0 0.0
        %3135 = vmatprep.subr.mxu0 0.0
        %3136 = vmatpush1.msra.mxu0 0.0
        %3137 = vmatprep.subr.mxu0 0.0
        %3138 = vmatpush1.msra.mxu0 0.0
        %3139 = vmatprep.subr.mxu0 0.0
        %3140 = vmatpush1.msra.mxu0 0.0
        %3141 = vmatprep.subr.mxu0 0.0
        %3142 = vmatpush1.msra.mxu0 0.0
        %3143 = vmatprep.subr.mxu0 0.0
        %3144 = vmatpush1.msra.mxu0 0.0
        %3145 = vmatprep.subr.mxu0 0.0
        %3146 = vmatpush1.msra.mxu0 0.0
        %3147 = vmatprep.subr.mxu0 0.0
        %3148 = vmatpush1.msra.mxu0 0.0
        %3149 = vmatprep.subr.mxu0 0.0
        %3150 = vmatpush1.msra.mxu0 0.0
        %3151 = vmatprep.subr.mxu0 0.0
        %3152 = vmatpush1.msra.mxu0 0.0
        %3153 = vmatprep.subr.mxu0 0.0
        %3154 = vmatpush1.msra.mxu0 0.0
        %3155 = vmatprep.subr.mxu0 0.0
        %3156 = vmatpush1.msra.mxu0 0.0
        %3157 = vmatprep.subr.mxu0 0.0
        %3158 = vmatpush1.msra.mxu0 0.0
        %3159 = vmatprep.subr.mxu0 0.0
        %3160 = vmatpush1.msra.mxu0 0.0
        %3161 = vmatprep.subr.mxu0 0.0
        %3162 = vmatpush1.msra.mxu0 0.0
        %3163 = vmatprep.subr.mxu0 0.0
        %3164 = vmatpush1.msra.mxu0 0.0
        %3165 = vmatprep.subr.mxu0 0.0
        %3166 = vmatpush1.msra.mxu0 0.0
        %3167 = vmatprep.subr.mxu0 0.0
        %3168 = vmatpush1.msra.mxu0 0.0
        %3169 = vmatprep.subr.mxu0 0.0
        %3170 = vmatpush1.msra.mxu0 0.0
        %3171 = vmatprep.subr.mxu0 0.0
        %3172 = vmatpush1.msra.mxu0 0.0
        %3173 = vmatprep.subr.mxu0 0.0
        %3174 = vmatpush1.msra.mxu0 0.0
        %3175 = vmatprep.subr.mxu0 0.0
        %3176 = vmatpush1.msra.mxu0 0.0
        %3177 = vmatprep.subr.mxu0 0.0
        %3178 = vmatpush1.msra.mxu0 0.0
        %3179 = vmatprep.subr.mxu0 0.0
        %3180 = vmatpush1.msra.mxu0 0.0
        %3181 = vmatprep.subr.mxu0 0.0
        %3182 = vmatpush1.msra.mxu0 0.0
        %3183 = vmatprep.subr.mxu0 0.0
        %3184 = vmatpush1.msra.mxu0 0.0
        %3185 = vmatprep.subr.mxu0 0.0
        %3186 = vmatpush1.msra.mxu0 0.0
        %3187 = vmatprep.mubr.f32.mxu0 0.0
        %3188 = vmatmul.mubr.f32.gmra.mrb[0].mxu0 %v3023
        %v3189 = vpop.f32.mrb[0].mxu0
        %v3190 = vadd.f32 %v3005, %v3189
        %v3191 = vpop.f32.mrb[0].mxu0
        %v3192 = vadd.f32 %v3005, %v3191
        %3193 = vmatprep.mubr.f32.mxu0 0.0
        %3194 = vmatmul.mubr.f32.gmra.mrb[0].mxu0 %v3026
        %v3195 = vpop.f32.mrb[0].mxu0
        %v3196 = vadd.f32 %v3010, %v3195
        %v3197 = vpop.f32.mrb[0].mxu0
        %v3198 = vadd.f32 %v3010, %v3197
        %3199 = vmatprep.mubr.f32.mxu0 0.0
        %3200 = vmatmul.mubr.f32.gmra.mrb[0].mxu0 %v3029
        %v3201 = vpop.f32.mrb[0].mxu0
        %v3202 = vadd.f32 %v3015, %v3201
        %v3203 = vpop.f32.mrb[0].mxu0
        %v3204 = vadd.f32 %v3015, %v3203
        %3205 = vmatprep.mubr.f32.mxu0 0.0
        %3206 = vmatmul.mubr.f32.gmra.mrb[0].mxu0 %v3032
        %v3207 = vpop.f32.mrb[0].mxu0
        %v3208 = vadd.f32 %v3020, %v3207
        %v3209 = vpop.f32.mrb[0].mxu0
        %v3210 = vadd.f32 %v3020, %v3209
        %3211 = vdwg.mxu0
        %3212 = vmatprep.subr.mxu0 %v2949
        %3213 = vmatpush1.msra.mxu0 %v2948
        %3214 = vmatprep.subr.mxu0 %v2961
        %3215 = vmatpush1.msra.mxu0 %v2960
        %3216 = vmatprep.subr.mxu0 %v2973
        %3217 = vmatpush1.msra.mxu0 %v2972
        %3218 = vmatprep.subr.mxu0 %v2985
        %3219 = vmatpush1.msra.mxu0 %v2984
        %3220 = vmatprep.subr.mxu0 0.0
        %3221 = vmatpush1.msra.mxu0 0.0
        %3222 = vmatprep.subr.mxu0 0.0
        %3223 = vmatpush1.msra.mxu0 0.0
        %3224 = vmatprep.subr.mxu0 0.0
        %3225 = vmatpush1.msra.mxu0 0.0
        %3226 = vmatprep.subr.mxu0 0.0
        %3227 = vmatpush1.msra.mxu0 0.0
        %3228 = vmatprep.subr.mxu0 0.0
        %3229 = vmatpush1.msra.mxu0 0.0
        %3230 = vmatprep.subr.mxu0 0.0
        %3231 = vmatpush1.msra.mxu0 0.0
        %3232 = vmatprep.subr.mxu0 0.0
        %3233 = vmatpush1.msra.mxu0 0.0
        %3234 = vmatprep.subr.mxu0 0.0
        %3235 = vmatpush1.msra.mxu0 0.0
        %3236 = vmatprep.subr.mxu0 0.0
        %3237 = vmatpush1.msra.mxu0 0.0
        %3238 = vmatprep.subr.mxu0 0.0
        %3239 = vmatpush1.msra.mxu0 0.0
        %3240 = vmatprep.subr.mxu0 0.0
        %3241 = vmatpush1.msra.mxu0 0.0
        %3242 = vmatprep.subr.mxu0 0.0
        %3243 = vmatpush1.msra.mxu0 0.0
        %3244 = vmatprep.subr.mxu0 0.0
        %3245 = vmatpush1.msra.mxu0 0.0
        %3246 = vmatprep.subr.mxu0 0.0
        %3247 = vmatpush1.msra.mxu0 0.0
        %3248 = vmatprep.subr.mxu0 0.0
        %3249 = vmatpush1.msra.mxu0 0.0
        %3250 = vmatprep.subr.mxu0 0.0
        %3251 = vmatpush1.msra.mxu0 0.0
        %3252 = vmatprep.subr.mxu0 0.0
        %3253 = vmatpush1.msra.mxu0 0.0
        %3254 = vmatprep.subr.mxu0 0.0
        %3255 = vmatpush1.msra.mxu0 0.0
        %3256 = vmatprep.subr.mxu0 0.0
        %3257 = vmatpush1.msra.mxu0 0.0
        %3258 = vmatprep.subr.mxu0 0.0
        %3259 = vmatpush1.msra.mxu0 0.0
        %3260 = vmatprep.subr.mxu0 0.0
        %3261 = vmatpush1.msra.mxu0 0.0
        %3262 = vmatprep.subr.mxu0 0.0
        %3263 = vmatpush1.msra.mxu0 0.0
        %3264 = vmatprep.subr.mxu0 0.0
        %3265 = vmatpush1.msra.mxu0 0.0
        %3266 = vmatprep.subr.mxu0 0.0
        %3267 = vmatpush1.msra.mxu0 0.0
        %3268 = vmatprep.subr.mxu0 0.0
        %3269 = vmatpush1.msra.mxu0 0.0
        %3270 = vmatprep.subr.mxu0 0.0
        %3271 = vmatpush1.msra.mxu0 0.0
        %3272 = vmatprep.subr.mxu0 0.0
        %3273 = vmatpush1.msra.mxu0 0.0
        %3274 = vmatprep.subr.mxu0 0.0
        %3275 = vmatpush1.msra.mxu0 0.0
        %3276 = vmatprep.mubr.f32.mxu0 0.0
        %3277 = vmatmul.mubr.f32.gmra.mrb[0].mxu0 %v3023
        %v3278 = vpop.f32.mrb[0].mxu0
        %v3279 = vadd.f32 %v3005, %v3278
        %v3280 = vpop.f32.mrb[0].mxu0
        %v3281 = vadd.f32 %v3005, %v3280
        %3282 = vmatprep.mubr.f32.mxu0 0.0
        %3283 = vmatmul.mubr.f32.gmra.mrb[0].mxu0 %v3026
        %v3284 = vpop.f32.mrb[0].mxu0
        %v3285 = vadd.f32 %v3010, %v3284
        %v3286 = vpop.f32.mrb[0].mxu0
        %v3287 = vadd.f32 %v3010, %v3286
        %3288 = vmatprep.mubr.f32.mxu0 0.0
        %3289 = vmatmul.mubr.f32.gmra.mrb[0].mxu0 %v3029
        %v3290 = vpop.f32.mrb[0].mxu0
        %v3291 = vadd.f32 %v3015, %v3290
        %v3292 = vpop.f32.mrb[0].mxu0
        %v3293 = vadd.f32 %v3015, %v3292
        %3294 = vmatprep.mubr.f32.mxu0 0.0
        %3295 = vmatmul.mubr.f32.gmra.mrb[0].mxu0 %v3032
        %v3296 = vpop.f32.mrb[0].mxu0
        %v3297 = vadd.f32 %v3020, %v3296
        %v3298 = vpop.f32.mrb[0].mxu0
        %v3299 = vadd.f32 %v3020, %v3298
        %3300 = vdwg.mxu0
        %3301 = vmatprep.subr.mxu0 %v2951
        %3302 = vmatpush1.msra.mxu0 %v2950
        %3303 = vmatprep.subr.mxu0 %v2963
        %3304 = vmatpush1.msra.mxu0 %v2962
        %3305 = vmatprep.subr.mxu0 %v2975
        %3306 = vmatpush1.msra.mxu0 %v2974
        %3307 = vmatprep.subr.mxu0 %v2987
        %3308 = vmatpush1.msra.mxu0 %v2986
        %3309 = vmatprep.subr.mxu0 0.0
        %3310 = vmatpush1.msra.mxu0 0.0
        %3311 = vmatprep.subr.mxu0 0.0
        %3312 = vmatpush1.msra.mxu0 0.0
        %3313 = vmatprep.subr.mxu0 0.0
        %3314 = vmatpush1.msra.mxu0 0.0
        %3315 = vmatprep.subr.mxu0 0.0
        %3316 = vmatpush1.msra.mxu0 0.0
        %3317 = vmatprep.subr.mxu0 0.0
        %3318 = vmatpush1.msra.mxu0 0.0
        %3319 = vmatprep.subr.mxu0 0.0
        %3320 = vmatpush1.msra.mxu0 0.0
        %3321 = vmatprep.subr.mxu0 0.0
        %3322 = vmatpush1.msra.mxu0 0.0
        %3323 = vmatprep.subr.mxu0 0.0
        %3324 = vmatpush1.msra.mxu0 0.0
        %3325 = vmatprep.subr.mxu0 0.0
        %3326 = vmatpush1.msra.mxu0 0.0
        %3327 = vmatprep.subr.mxu0 0.0
        %3328 = vmatpush1.msra.mxu0 0.0
        %3329 = vmatprep.subr.mxu0 0.0
        %3330 = vmatpush1.msra.mxu0 0.0
        %3331 = vmatprep.subr.mxu0 0.0
        %3332 = vmatpush1.msra.mxu0 0.0
        %3333 = vmatprep.subr.mxu0 0.0
        %3334 = vmatpush1.msra.mxu0 0.0
        %3335 = vmatprep.subr.mxu0 0.0
        %3336 = vmatpush1.msra.mxu0 0.0
        %3337 = vmatprep.subr.mxu0 0.0
        %3338 = vmatpush1.msra.mxu0 0.0
        %3339 = vmatprep.subr.mxu0 0.0
        %3340 = vmatpush1.msra.mxu0 0.0
        %3341 = vmatprep.subr.mxu0 0.0
        %3342 = vmatpush1.msra.mxu0 0.0
        %3343 = vmatprep.subr.mxu0 0.0
        %3344 = vmatpush1.msra.mxu0 0.0
        %3345 = vmatprep.subr.mxu0 0.0
        %3346 = vmatpush1.msra.mxu0 0.0
        %3347 = vmatprep.subr.mxu0 0.0
        %3348 = vmatpush1.msra.mxu0 0.0
        %3349 = vmatprep.subr.mxu0 0.0
        %3350 = vmatpush1.msra.mxu0 0.0
        %3351 = vmatprep.subr.mxu0 0.0
        %3352 = vmatpush1.msra.mxu0 0.0
        %3353 = vmatprep.subr.mxu0 0.0
        %3354 = vmatpush1.msra.mxu0 0.0
        %3355 = vmatprep.subr.mxu0 0.0
        %3356 = vmatpush1.msra.mxu0 0.0
        %3357 = vmatprep.subr.mxu0 0.0
        %3358 = vmatpush1.msra.mxu0 0.0
        %3359 = vmatprep.subr.mxu0 0.0
        %3360 = vmatpush1.msra.mxu0 0.0
        %3361 = vmatprep.subr.mxu0 0.0
        %3362 = vmatpush1.msra.mxu0 0.0
        %3363 = vmatprep.subr.mxu0 0.0
        %3364 = vmatpush1.msra.mxu0 0.0
        %3365 = vmatprep.mubr.f32.mxu0 0.0
        %3366 = vmatmul.mubr.f32.gmra.mrb[0].mxu0 %v3023
        %v3367 = vpop.f32.mrb[0].mxu0
        %v3368 = vadd.f32 %v3005, %v3367
        %v3369 = vpop.f32.mrb[0].mxu0
        %v3370 = vadd.f32 %v3005, %v3369
        %3371 = vmatprep.mubr.f32.mxu0 0.0
        %3372 = vmatmul.mubr.f32.gmra.mrb[0].mxu0 %v3026
        %v3373 = vpop.f32.mrb[0].mxu0
        %v3374 = vadd.f32 %v3010, %v3373
        %v3375 = vpop.f32.mrb[0].mxu0
        %v3376 = vadd.f32 %v3010, %v3375
        %3377 = vmatprep.mubr.f32.mxu0 0.0
        %3378 = vmatmul.mubr.f32.gmra.mrb[0].mxu0 %v3029
        %v3379 = vpop.f32.mrb[0].mxu0
        %v3380 = vadd.f32 %v3015, %v3379
        %v3381 = vpop.f32.mrb[0].mxu0
        %v3382 = vadd.f32 %v3015, %v3381
        %3383 = vmatprep.mubr.f32.mxu0 0.0
        %3384 = vmatmul.mubr.f32.gmra.mrb[0].mxu0 %v3032
        %v3385 = vpop.f32.mrb[0].mxu0
        %v3386 = vadd.f32 %v3020, %v3385
        %v3387 = vpop.f32.mrb[0].mxu0
        %v3388 = vadd.f32 %v3020, %v3387
        %3389 = vdwg.mxu0
        %3390 = vmatprep.subr.mxu0 %v2953
        %3391 = vmatpush1.msra.mxu0 %v2952
        %3392 = vmatprep.subr.mxu0 %v2965
        %3393 = vmatpush1.msra.mxu0 %v2964
        %3394 = vmatprep.subr.mxu0 %v2977
        %3395 = vmatpush1.msra.mxu0 %v2976
        %3396 = vmatprep.subr.mxu0 %v2989
        %3397 = vmatpush1.msra.mxu0 %v2988
        %3398 = vmatprep.subr.mxu0 0.0
        %3399 = vmatpush1.msra.mxu0 0.0
        %3400 = vmatprep.subr.mxu0 0.0
        %3401 = vmatpush1.msra.mxu0 0.0
        %3402 = vmatprep.subr.mxu0 0.0
        %3403 = vmatpush1.msra.mxu0 0.0
        %3404 = vmatprep.subr.mxu0 0.0
        %3405 = vmatpush1.msra.mxu0 0.0
        %3406 = vmatprep.subr.mxu0 0.0
        %3407 = vmatpush1.msra.mxu0 0.0
        %3408 = vmatprep.subr.mxu0 0.0
        %3409 = vmatpush1.msra.mxu0 0.0
        %3410 = vmatprep.subr.mxu0 0.0
        %3411 = vmatpush1.msra.mxu0 0.0
        %3412 = vmatprep.subr.mxu0 0.0
        %3413 = vmatpush1.msra.mxu0 0.0
        %3414 = vmatprep.subr.mxu0 0.0
        %3415 = vmatpush1.msra.mxu0 0.0
        %3416 = vmatprep.subr.mxu0 0.0
        %3417 = vmatpush1.msra.mxu0 0.0
        %3418 = vmatprep.subr.mxu0 0.0
        %3419 = vmatpush1.msra.mxu0 0.0
        %3420 = vmatprep.subr.mxu0 0.0
        %3421 = vmatpush1.msra.mxu0 0.0
        %3422 = vmatprep.subr.mxu0 0.0
        %3423 = vmatpush1.msra.mxu0 0.0
        %3424 = vmatprep.subr.mxu0 0.0
        %3425 = vmatpush1.msra.mxu0 0.0
        %3426 = vmatprep.subr.mxu0 0.0
        %3427 = vmatpush1.msra.mxu0 0.0
        %3428 = vmatprep.subr.mxu0 0.0
        %3429 = vmatpush1.msra.mxu0 0.0
        %3430 = vmatprep.subr.mxu0 0.0
        %3431 = vmatpush1.msra.mxu0 0.0
        %3432 = vmatprep.subr.mxu0 0.0
        %3433 = vmatpush1.msra.mxu0 0.0
        %3434 = vmatprep.subr.mxu0 0.0
        %3435 = vmatpush1.msra.mxu0 0.0
        %3436 = vmatprep.subr.mxu0 0.0
        %3437 = vmatpush1.msra.mxu0 0.0
        %3438 = vmatprep.subr.mxu0 0.0
        %3439 = vmatpush1.msra.mxu0 0.0
        %3440 = vmatprep.subr.mxu0 0.0
        %3441 = vmatpush1.msra.mxu0 0.0
        %3442 = vmatprep.subr.mxu0 0.0
        %3443 = vmatpush1.msra.mxu0 0.0
        %3444 = vmatprep.subr.mxu0 0.0
        %3445 = vmatpush1.msra.mxu0 0.0
        %3446 = vmatprep.subr.mxu0 0.0
        %3447 = vmatpush1.msra.mxu0 0.0
        %3448 = vmatprep.subr.mxu0 0.0
        %3449 = vmatpush1.msra.mxu0 0.0
        %3450 = vmatprep.subr.mxu0 0.0
        %3451 = vmatpush1.msra.mxu0 0.0
        %3452 = vmatprep.subr.mxu0 0.0
        %3453 = vmatpush1.msra.mxu0 0.0
        %3454 = vmatprep.mubr.f32.mxu0 0.0
        %3455 = vmatmul.mubr.f32.gmra.mrb[0].mxu0 %v3023
        %v3456 = vpop.f32.mrb[0].mxu0
        %v3457 = vadd.f32 %v3005, %v3456
        %v3458 = vpop.f32.mrb[0].mxu0
        %v3459 = vadd.f32 %v3005, %v3458
        %3460 = vmatprep.mubr.f32.mxu0 0.0
        %3461 = vmatmul.mubr.f32.gmra.mrb[0].mxu0 %v3026
        %v3462 = vpop.f32.mrb[0].mxu0
        %v3463 = vadd.f32 %v3010, %v3462
        %v3464 = vpop.f32.mrb[0].mxu0
        %v3465 = vadd.f32 %v3010, %v3464
        %3466 = vmatprep.mubr.f32.mxu0 0.0
        %3467 = vmatmul.mubr.f32.gmra.mrb[0].mxu0 %v3029
        %v3468 = vpop.f32.mrb[0].mxu0
        %v3469 = vadd.f32 %v3015, %v3468
        %v3470 = vpop.f32.mrb[0].mxu0
        %v3471 = vadd.f32 %v3015, %v3470
        %3472 = vmatprep.mubr.f32.mxu0 0.0
        %3473 = vmatmul.mubr.f32.gmra.mrb[0].mxu0 %v3032
        %v3474 = vpop.f32.mrb[0].mxu0
        %v3475 = vadd.f32 %v3020, %v3474
        %v3476 = vpop.f32.mrb[0].mxu0
        %v3477 = vadd.f32 %v3020, %v3476
        %3478 = vdwg.mxu0
        %3479 = vmatprep.subr.mxu0 %v2955
        %3480 = vmatpush1.msra.mxu0 %v2954
        %3481 = vmatprep.subr.mxu0 %v2967
        %3482 = vmatpush1.msra.mxu0 %v2966
        %3483 = vmatprep.subr.mxu0 %v2979
        %3484 = vmatpush1.msra.mxu0 %v2978
        %3485 = vmatprep.subr.mxu0 %v2991
        %3486 = vmatpush1.msra.mxu0 %v2990
        %3487 = vmatprep.subr.mxu0 0.0
        %3488 = vmatpush1.msra.mxu0 0.0
        %3489 = vmatprep.subr.mxu0 0.0
        %3490 = vmatpush1.msra.mxu0 0.0
        %3491 = vmatprep.subr.mxu0 0.0
        %3492 = vmatpush1.msra.mxu0 0.0
        %3493 = vmatprep.subr.mxu0 0.0
        %3494 = vmatpush1.msra.mxu0 0.0
        %3495 = vmatprep.subr.mxu0 0.0
        %3496 = vmatpush1.msra.mxu0 0.0
        %3497 = vmatprep.subr.mxu0 0.0
        %3498 = vmatpush1.msra.mxu0 0.0
        %3499 = vmatprep.subr.mxu0 0.0
        %3500 = vmatpush1.msra.mxu0 0.0
        %3501 = vmatprep.subr.mxu0 0.0
        %3502 = vmatpush1.msra.mxu0 0.0
        %3503 = vmatprep.subr.mxu0 0.0
        %3504 = vmatpush1.msra.mxu0 0.0
        %3505 = vmatprep.subr.mxu0 0.0
        %3506 = vmatpush1.msra.mxu0 0.0
        %3507 = vmatprep.subr.mxu0 0.0
        %3508 = vmatpush1.msra.mxu0 0.0
        %3509 = vmatprep.subr.mxu0 0.0
        %3510 = vmatpush1.msra.mxu0 0.0
        %3511 = vmatprep.subr.mxu0 0.0
        %3512 = vmatpush1.msra.mxu0 0.0
        %3513 = vmatprep.subr.mxu0 0.0
        %3514 = vmatpush1.msra.mxu0 0.0
        %3515 = vmatprep.subr.mxu0 0.0
        %3516 = vmatpush1.msra.mxu0 0.0
        %3517 = vmatprep.subr.mxu0 0.0
        %3518 = vmatpush1.msra.mxu0 0.0
        %3519 = vmatprep.subr.mxu0 0.0
        %3520 = vmatpush1.msra.mxu0 0.0
        %3521 = vmatprep.subr.mxu0 0.0
        %3522 = vmatpush1.msra.mxu0 0.0
        %3523 = vmatprep.subr.mxu0 0.0
        %3524 = vmatpush1.msra.mxu0 0.0
        %3525 = vmatprep.subr.mxu0 0.0
        %3526 = vmatpush1.msra.mxu0 0.0
        %3527 = vmatprep.subr.mxu0 0.0
        %3528 = vmatpush1.msra.mxu0 0.0
        %3529 = vmatprep.subr.mxu0 0.0
        %3530 = vmatpush1.msra.mxu0 0.0
        %3531 = vmatprep.subr.mxu0 0.0
        %3532 = vmatpush1.msra.mxu0 0.0
        %3533 = vmatprep.subr.mxu0 0.0
        %3534 = vmatpush1.msra.mxu0 0.0
        %3535 = vmatprep.subr.mxu0 0.0
        %3536 = vmatpush1.msra.mxu0 0.0
        %3537 = vmatprep.subr.mxu0 0.0
        %3538 = vmatpush1.msra.mxu0 0.0
        %3539 = vmatprep.subr.mxu0 0.0
        %3540 = vmatpush1.msra.mxu0 0.0
        %3541 = vmatprep.subr.mxu0 0.0
        %3542 = vmatpush1.msra.mxu0 0.0
        %3543 = vmatprep.mubr.f32.mxu0 0.0
        %3544 = vmatmul.mubr.f32.gmra.mrb[0].mxu0 %v3023
        %v3545 = vpop.f32.mrb[0].mxu0
        %v3546 = vadd.f32 %v3005, %v3545
        %v3547 = vpop.f32.mrb[0].mxu0
        %v3548 = vadd.f32 %v3005, %v3547
        %3549 = vmatprep.mubr.f32.mxu0 0.0
        %3550 = vmatmul.mubr.f32.gmra.mrb[0].mxu0 %v3026
        %v3551 = vpop.f32.mrb[0].mxu0
        %v3552 = vadd.f32 %v3010, %v3551
        %v3553 = vpop.f32.mrb[0].mxu0
        %v3554 = vadd.f32 %v3010, %v3553
        %3555 = vmatprep.mubr.f32.mxu0 0.0
        %3556 = vmatmul.mubr.f32.gmra.mrb[0].mxu0 %v3029
        %v3557 = vpop.f32.mrb[0].mxu0
        %v3558 = vadd.f32 %v3015, %v3557
        %v3559 = vpop.f32.mrb[0].mxu0
        %v3560 = vadd.f32 %v3015, %v3559
        %3561 = vmatprep.mubr.f32.mxu0 0.0
        %3562 = vmatmul.mubr.f32.gmra.mrb[0].mxu0 %v3032
        %v3563 = vpop.f32.mrb[0].mxu0
        %v3564 = vadd.f32 %v3020, %v3563
        %v3565 = vpop.f32.mrb[0].mxu0
        %v3566 = vadd.f32 %v3020, %v3565
        %3567 = vdwg.mxu0
        %v3568 = vand.u32 2147483647, %v3101
        %v3569 = vand.u32 2147483647, %v3103
        %v3570 = vand.u32 2147483647, %v3190
        %v3571 = vand.u32 2147483647, %v3192
        %v3572 = vand.u32 2147483647, %v3279
        %v3573 = vand.u32 2147483647, %v3281
        %v3574 = vand.u32 2147483647, %v3368
        %v3575 = vand.u32 2147483647, %v3370
        %v3576 = vand.u32 2147483647, %v3457
        %v3577 = vand.u32 2147483647, %v3459
        %v3578 = vand.u32 2147483647, %v3546
        %v3579 = vand.u32 2147483647, %v3548
        %v3580 = vand.u32 2147483647, %v3107
        %v3581 = vand.u32 2147483647, %v3109
        %v3582 = vand.u32 2147483647, %v3196
        %v3583 = vand.u32 2147483647, %v3198
        %v3584 = vand.u32 2147483647, %v3285
        %v3585 = vand.u32 2147483647, %v3287
        %v3586 = vand.u32 2147483647, %v3374
        %v3587 = vand.u32 2147483647, %v3376
        %v3588 = vand.u32 2147483647, %v3463
        %v3589 = vand.u32 2147483647, %v3465
        %v3590 = vand.u32 2147483647, %v3552
        %v3591 = vand.u32 2147483647, %v3554
        %v3592 = vand.u32 2147483647, %v3113
        %v3593 = vand.u32 2147483647, %v3115
        %v3594 = vand.u32 2147483647, %v3202
        %v3595 = vand.u32 2147483647, %v3204
        %v3596 = vand.u32 2147483647, %v3291
        %v3597 = vand.u32 2147483647, %v3293
        %v3598 = vand.u32 2147483647, %v3380
        %v3599 = vand.u32 2147483647, %v3382
        %v3600 = vand.u32 2147483647, %v3469
        %v3601 = vand.u32 2147483647, %v3471
        %v3602 = vand.u32 2147483647, %v3558
        %v3603 = vand.u32 2147483647, %v3560
        %v3604 = vand.u32 2147483647, %v3119
        %v3605 = vand.u32 2147483647, %v3121
        %v3606 = vand.u32 2147483647, %v3208
        %v3607 = vand.u32 2147483647, %v3210
        %v3608 = vand.u32 2147483647, %v3297
        %v3609 = vand.u32 2147483647, %v3299
        %v3610 = vand.u32 2147483647, %v3386
        %v3611 = vand.u32 2147483647, %v3388
        %v3612 = vand.u32 2147483647, %v3475
        %v3613 = vand.u32 2147483647, %v3477
        %v3614 = vand.u32 2147483647, %v3564
        %v3615 = vand.u32 2147483647, %v3566
        %v3616 = vmul.f32 %v3568, -2.0
        %v3617 = vmul.f32 %v3569, -2.0
        %v3618 = vmul.f32 %v3570, -2.0
        %v3619 = vmul.f32 %v3571, -2.0
        %v3620 = vmul.f32 %v3572, -2.0
        %v3621 = vmul.f32 %v3573, -2.0
        %v3622 = vmul.f32 %v3574, -2.0
        %v3623 = vmul.f32 %v3575, -2.0
        %v3624 = vmul.f32 %v3576, -2.0
        %v3625 = vmul.f32 %v3577, -2.0
        %v3626 = vmul.f32 %v3578, -2.0
        %v3627 = vmul.f32 %v3579, -2.0
        %v3628 = vmul.f32 %v3580, -2.0
        %v3629 = vmul.f32 %v3581, -2.0
        %v3630 = vmul.f32 %v3582, -2.0
        %v3631 = vmul.f32 %v3583, -2.0
        %v3632 = vmul.f32 %v3584, -2.0
        %v3633 = vmul.f32 %v3585, -2.0
        %v3634 = vmul.f32 %v3586, -2.0
        %v3635 = vmul.f32 %v3587, -2.0
        %v3636 = vmul.f32 %v3588, -2.0
        %v3637 = vmul.f32 %v3589, -2.0
        %v3638 = vmul.f32 %v3590, -2.0
        %v3639 = vmul.f32 %v3591, -2.0
        %v3640 = vmul.f32 %v3592, -2.0
        %v3641 = vmul.f32 %v3593, -2.0
        %v3642 = vmul.f32 %v3594, -2.0
        %v3643 = vmul.f32 %v3595, -2.0
        %v3644 = vmul.f32 %v3596, -2.0
        %v3645 = vmul.f32 %v3597, -2.0
        %v3646 = vmul.f32 %v3598, -2.0
        %v3647 = vmul.f32 %v3599, -2.0
        %v3648 = vmul.f32 %v3600, -2.0
        %v3649 = vmul.f32 %v3601, -2.0
        %v3650 = vmul.f32 %v3602, -2.0
        %v3651 = vmul.f32 %v3603, -2.0
        %v3652 = vmul.f32 %v3604, -2.0
        %v3653 = vmul.f32 %v3605, -2.0
        %v3654 = vmul.f32 %v3606, -2.0
        %v3655 = vmul.f32 %v3607, -2.0
        %v3656 = vmul.f32 %v3608, -2.0
        %v3657 = vmul.f32 %v3609, -2.0
        %v3658 = vmul.f32 %v3610, -2.0
        %v3659 = vmul.f32 %v3611, -2.0
        %v3660 = vmul.f32 %v3612, -2.0
        %v3661 = vmul.f32 %v3613, -2.0
        %v3662 = vmul.f32 %v3614, -2.0
        %v3663 = vmul.f32 %v3615, -2.0
        %v3664 = vmul.f32 %v3616, 1.442695
        %v3665 = vpow.pop %v3664
        %v3666 = vmul.f32 %v3617, 1.442695
        %v3667 = vpow.pop %v3666
        %v3668 = vmul.f32 %v3618, 1.442695
        %v3669 = vpow.pop %v3668
        %v3670 = vmul.f32 %v3619, 1.442695
        %v3671 = vpow.pop %v3670
        %v3672 = vmul.f32 %v3620, 1.442695
        %v3673 = vpow.pop %v3672
        %v3674 = vmul.f32 %v3621, 1.442695
        %v3675 = vpow.pop %v3674
        %v3676 = vmul.f32 %v3622, 1.442695
        %v3677 = vpow.pop %v3676
        %v3678 = vmul.f32 %v3623, 1.442695
        %v3679 = vpow.pop %v3678
        %v3680 = vmul.f32 %v3624, 1.442695
        %v3681 = vpow.pop %v3680
        %v3682 = vmul.f32 %v3625, 1.442695
        %v3683 = vpow.pop %v3682
        %v3684 = vmul.f32 %v3626, 1.442695
        %v3685 = vpow.pop %v3684
        %v3686 = vmul.f32 %v3627, 1.442695
        %v3687 = vpow.pop %v3686
        %v3688 = vmul.f32 %v3628, 1.442695
        %v3689 = vpow.pop %v3688
        %v3690 = vmul.f32 %v3629, 1.442695
        %v3691 = vpow.pop %v3690
        %v3692 = vmul.f32 %v3630, 1.442695
        %v3693 = vpow.pop %v3692
        %v3694 = vmul.f32 %v3631, 1.442695
        %v3695 = vpow.pop %v3694
        %v3696 = vmul.f32 %v3632, 1.442695
        %v3697 = vpow.pop %v3696
        %v3698 = vmul.f32 %v3633, 1.442695
        %v3699 = vpow.pop %v3698
        %v3700 = vmul.f32 %v3634, 1.442695
        %v3701 = vpow.pop %v3700
        %v3702 = vmul.f32 %v3635, 1.442695
        %v3703 = vpow.pop %v3702
        %v3704 = vmul.f32 %v3636, 1.442695
        %v3705 = vpow.pop %v3704
        %v3706 = vmul.f32 %v3637, 1.442695
        %v3707 = vpow.pop %v3706
        %v3708 = vmul.f32 %v3638, 1.442695
        %v3709 = vpow.pop %v3708
        %v3710 = vmul.f32 %v3639, 1.442695
        %v3711 = vpow.pop %v3710
        %v3712 = vmul.f32 %v3640, 1.442695
        %v3713 = vpow.pop %v3712
        %v3714 = vmul.f32 %v3641, 1.442695
        %v3715 = vpow.pop %v3714
        %v3716 = vmul.f32 %v3642, 1.442695
        %v3717 = vpow.pop %v3716
        %v3718 = vmul.f32 %v3643, 1.442695
        %v3719 = vpow.pop %v3718
        %v3720 = vmul.f32 %v3644, 1.442695
        %v3721 = vpow.pop %v3720
        %v3722 = vmul.f32 %v3645, 1.442695
        %v3723 = vpow.pop %v3722
        %v3724 = vmul.f32 %v3646, 1.442695
        %v3725 = vpow.pop %v3724
        %v3726 = vmul.f32 %v3647, 1.442695
        %v3727 = vpow.pop %v3726
        %v3728 = vmul.f32 %v3648, 1.442695
        %v3729 = vpow.pop %v3728
        %v3730 = vmul.f32 %v3649, 1.442695
        %v3731 = vpow.pop %v3730
        %v3732 = vmul.f32 %v3650, 1.442695
        %v3733 = vpow.pop %v3732
        %v3734 = vmul.f32 %v3651, 1.442695
        %v3735 = vpow.pop %v3734
        %v3736 = vmul.f32 %v3652, 1.442695
        %v3737 = vpow.pop %v3736
        %v3738 = vmul.f32 %v3653, 1.442695
        %v3739 = vpow.pop %v3738
        %v3740 = vmul.f32 %v3654, 1.442695
        %v3741 = vpow.pop %v3740
        %v3742 = vmul.f32 %v3655, 1.442695
        %v3743 = vpow.pop %v3742
        %v3744 = vmul.f32 %v3656, 1.442695
        %v3745 = vpow.pop %v3744
        %v3746 = vmul.f32 %v3657, 1.442695
        %v3747 = vpow.pop %v3746
        %v3748 = vmul.f32 %v3658, 1.442695
        %v3749 = vpow.pop %v3748
        %v3750 = vmul.f32 %v3659, 1.442695
        %v3751 = vpow.pop %v3750
        %v3752 = vmul.f32 %v3660, 1.442695
        %v3753 = vpow.pop %v3752
        %v3754 = vmul.f32 %v3661, 1.442695
        %v3755 = vpow.pop %v3754
        %v3756 = vmul.f32 %v3662, 1.442695
        %v3757 = vpow.pop %v3756
        %v3758 = vmul.f32 %v3663, 1.442695
        %v3759 = vpow.pop %v3758
        %v3760 = vadd.f32 %v3665, 1.0
        %v3761 = vlog2.pop %v3760
        %v3762 = vmul.f32 %v3761, 0.6931472
        %v3763 = vmul.f32 -0.5, %v3665
        %v3764 = vadd.f32 %v3763, 1.0
        %v3765 = vmul.f32 %v3764, %v3665
        %v3766 = vand.u32 2147483647, %v3665
        %vm3767 = vcmp.lt.f32.partialorder %v3766, 0.0004427343
        %v3768 = vsel %vm3767, %v3765, %v3762
        %v3769 = vadd.f32 %v3667, 1.0
        %v3770 = vlog2.pop %v3769
        %v3771 = vmul.f32 %v3770, 0.6931472
        %v3772 = vmul.f32 -0.5, %v3667
        %v3773 = vadd.f32 %v3772, 1.0
        %v3774 = vmul.f32 %v3773, %v3667
        %v3775 = vand.u32 2147483647, %v3667
        %vm3776 = vcmp.lt.f32.partialorder %v3775, 0.0004427343
        %v3777 = vsel %vm3776, %v3774, %v3771
        %v3778 = vadd.f32 %v3669, 1.0
        %v3779 = vlog2.pop %v3778
        %v3780 = vmul.f32 %v3779, 0.6931472
        %v3781 = vmul.f32 -0.5, %v3669
        %v3782 = vadd.f32 %v3781, 1.0
        %v3783 = vmul.f32 %v3782, %v3669
        %v3784 = vand.u32 2147483647, %v3669
        %vm3785 = vcmp.lt.f32.partialorder %v3784, 0.0004427343
        %v3786 = vsel %vm3785, %v3783, %v3780
        %v3787 = vadd.f32 %v3671, 1.0
        %v3788 = vlog2.pop %v3787
        %v3789 = vmul.f32 %v3788, 0.6931472
        %v3790 = vmul.f32 -0.5, %v3671
        %v3791 = vadd.f32 %v3790, 1.0
        %v3792 = vmul.f32 %v3791, %v3671
        %v3793 = vand.u32 2147483647, %v3671
        %vm3794 = vcmp.lt.f32.partialorder %v3793, 0.0004427343
        %v3795 = vsel %vm3794, %v3792, %v3789
        %v3796 = vadd.f32 %v3673, 1.0
        %v3797 = vlog2.pop %v3796
        %v3798 = vmul.f32 %v3797, 0.6931472
        %v3799 = vmul.f32 -0.5, %v3673
        %v3800 = vadd.f32 %v3799, 1.0
        %v3801 = vmul.f32 %v3800, %v3673
        %v3802 = vand.u32 2147483647, %v3673
        %vm3803 = vcmp.lt.f32.partialorder %v3802, 0.0004427343
        %v3804 = vsel %vm3803, %v3801, %v3798
        %v3805 = vadd.f32 %v3675, 1.0
        %v3806 = vlog2.pop %v3805
        %v3807 = vmul.f32 %v3806, 0.6931472
        %v3808 = vmul.f32 -0.5, %v3675
        %v3809 = vadd.f32 %v3808, 1.0
        %v3810 = vmul.f32 %v3809, %v3675
        %v3811 = vand.u32 2147483647, %v3675
        %vm3812 = vcmp.lt.f32.partialorder %v3811, 0.0004427343
        %v3813 = vsel %vm3812, %v3810, %v3807
        %v3814 = vadd.f32 %v3677, 1.0
        %v3815 = vlog2.pop %v3814
        %v3816 = vmul.f32 %v3815, 0.6931472
        %v3817 = vmul.f32 -0.5, %v3677
        %v3818 = vadd.f32 %v3817, 1.0
        %v3819 = vmul.f32 %v3818, %v3677
        %v3820 = vand.u32 2147483647, %v3677
        %vm3821 = vcmp.lt.f32.partialorder %v3820, 0.0004427343
        %v3822 = vsel %vm3821, %v3819, %v3816
        %v3823 = vadd.f32 %v3679, 1.0
        %v3824 = vlog2.pop %v3823
        %v3825 = vmul.f32 %v3824, 0.6931472
        %v3826 = vmul.f32 -0.5, %v3679
        %v3827 = vadd.f32 %v3826, 1.0
        %v3828 = vmul.f32 %v3827, %v3679
        %v3829 = vand.u32 2147483647, %v3679
        %vm3830 = vcmp.lt.f32.partialorder %v3829, 0.0004427343
        %v3831 = vsel %vm3830, %v3828, %v3825
        %v3832 = vadd.f32 %v3681, 1.0
        %v3833 = vlog2.pop %v3832
        %v3834 = vmul.f32 %v3833, 0.6931472
        %v3835 = vmul.f32 -0.5, %v3681
        %v3836 = vadd.f32 %v3835, 1.0
        %v3837 = vmul.f32 %v3836, %v3681
        %v3838 = vand.u32 2147483647, %v3681
        %vm3839 = vcmp.lt.f32.partialorder %v3838, 0.0004427343
        %v3840 = vsel %vm3839, %v3837, %v3834
        %v3841 = vadd.f32 %v3683, 1.0
        %v3842 = vlog2.pop %v3841
        %v3843 = vmul.f32 %v3842, 0.6931472
        %v3844 = vmul.f32 -0.5, %v3683
        %v3845 = vadd.f32 %v3844, 1.0
        %v3846 = vmul.f32 %v3845, %v3683
        %v3847 = vand.u32 2147483647, %v3683
        %vm3848 = vcmp.lt.f32.partialorder %v3847, 0.0004427343
        %v3849 = vsel %vm3848, %v3846, %v3843
        %v3850 = vadd.f32 %v3685, 1.0
        %v3851 = vlog2.pop %v3850
        %v3852 = vmul.f32 %v3851, 0.6931472
        %v3853 = vmul.f32 -0.5, %v3685
        %v3854 = vadd.f32 %v3853, 1.0
        %v3855 = vmul.f32 %v3854, %v3685
        %v3856 = vand.u32 2147483647, %v3685
        %vm3857 = vcmp.lt.f32.partialorder %v3856, 0.0004427343
        %v3858 = vsel %vm3857, %v3855, %v3852
        %v3859 = vadd.f32 %v3687, 1.0
        %v3860 = vlog2.pop %v3859
        %v3861 = vmul.f32 %v3860, 0.6931472
        %v3862 = vmul.f32 -0.5, %v3687
        %v3863 = vadd.f32 %v3862, 1.0
        %v3864 = vmul.f32 %v3863, %v3687
        %v3865 = vand.u32 2147483647, %v3687
        %vm3866 = vcmp.lt.f32.partialorder %v3865, 0.0004427343
        %v3867 = vsel %vm3866, %v3864, %v3861
        %v3868 = vadd.f32 %v3689, 1.0
        %v3869 = vlog2.pop %v3868
        %v3870 = vmul.f32 %v3869, 0.6931472
        %v3871 = vmul.f32 -0.5, %v3689
        %v3872 = vadd.f32 %v3871, 1.0
        %v3873 = vmul.f32 %v3872, %v3689
        %v3874 = vand.u32 2147483647, %v3689
        %vm3875 = vcmp.lt.f32.partialorder %v3874, 0.0004427343
        %v3876 = vsel %vm3875, %v3873, %v3870
        %v3877 = vadd.f32 %v3691, 1.0
        %v3878 = vlog2.pop %v3877
        %v3879 = vmul.f32 %v3878, 0.6931472
        %v3880 = vmul.f32 -0.5, %v3691
        %v3881 = vadd.f32 %v3880, 1.0
        %v3882 = vmul.f32 %v3881, %v3691
        %v3883 = vand.u32 2147483647, %v3691
        %vm3884 = vcmp.lt.f32.partialorder %v3883, 0.0004427343
        %v3885 = vsel %vm3884, %v3882, %v3879
        %v3886 = vadd.f32 %v3693, 1.0
        %v3887 = vlog2.pop %v3886
        %v3888 = vmul.f32 %v3887, 0.6931472
        %v3889 = vmul.f32 -0.5, %v3693
        %v3890 = vadd.f32 %v3889, 1.0
        %v3891 = vmul.f32 %v3890, %v3693
        %v3892 = vand.u32 2147483647, %v3693
        %vm3893 = vcmp.lt.f32.partialorder %v3892, 0.0004427343
        %v3894 = vsel %vm3893, %v3891, %v3888
        %v3895 = vadd.f32 %v3695, 1.0
        %v3896 = vlog2.pop %v3895
        %v3897 = vmul.f32 %v3896, 0.6931472
        %v3898 = vmul.f32 -0.5, %v3695
        %v3899 = vadd.f32 %v3898, 1.0
        %v3900 = vmul.f32 %v3899, %v3695
        %v3901 = vand.u32 2147483647, %v3695
        %vm3902 = vcmp.lt.f32.partialorder %v3901, 0.0004427343
        %v3903 = vsel %vm3902, %v3900, %v3897
        %v3904 = vadd.f32 %v3697, 1.0
        %v3905 = vlog2.pop %v3904
        %v3906 = vmul.f32 %v3905, 0.6931472
        %v3907 = vmul.f32 -0.5, %v3697
        %v3908 = vadd.f32 %v3907, 1.0
        %v3909 = vmul.f32 %v3908, %v3697
        %v3910 = vand.u32 2147483647, %v3697
        %vm3911 = vcmp.lt.f32.partialorder %v3910, 0.0004427343
        %v3912 = vsel %vm3911, %v3909, %v3906
        %v3913 = vadd.f32 %v3699, 1.0
        %v3914 = vlog2.pop %v3913
        %v3915 = vmul.f32 %v3914, 0.6931472
        %v3916 = vmul.f32 -0.5, %v3699
        %v3917 = vadd.f32 %v3916, 1.0
        %v3918 = vmul.f32 %v3917, %v3699
        %v3919 = vand.u32 2147483647, %v3699
        %vm3920 = vcmp.lt.f32.partialorder %v3919, 0.0004427343
        %v3921 = vsel %vm3920, %v3918, %v3915
        %v3922 = vadd.f32 %v3701, 1.0
        %v3923 = vlog2.pop %v3922
        %v3924 = vmul.f32 %v3923, 0.6931472
        %v3925 = vmul.f32 -0.5, %v3701
        %v3926 = vadd.f32 %v3925, 1.0
        %v3927 = vmul.f32 %v3926, %v3701
        %v3928 = vand.u32 2147483647, %v3701
        %vm3929 = vcmp.lt.f32.partialorder %v3928, 0.0004427343
        %v3930 = vsel %vm3929, %v3927, %v3924
        %v3931 = vadd.f32 %v3703, 1.0
        %v3932 = vlog2.pop %v3931
        %v3933 = vmul.f32 %v3932, 0.6931472
        %v3934 = vmul.f32 -0.5, %v3703
        %v3935 = vadd.f32 %v3934, 1.0
        %v3936 = vmul.f32 %v3935, %v3703
        %v3937 = vand.u32 2147483647, %v3703
        %vm3938 = vcmp.lt.f32.partialorder %v3937, 0.0004427343
        %v3939 = vsel %vm3938, %v3936, %v3933
        %v3940 = vadd.f32 %v3705, 1.0
        %v3941 = vlog2.pop %v3940
        %v3942 = vmul.f32 %v3941, 0.6931472
        %v3943 = vmul.f32 -0.5, %v3705
        %v3944 = vadd.f32 %v3943, 1.0
        %v3945 = vmul.f32 %v3944, %v3705
        %v3946 = vand.u32 2147483647, %v3705
        %vm3947 = vcmp.lt.f32.partialorder %v3946, 0.0004427343
        %v3948 = vsel %vm3947, %v3945, %v3942
        %v3949 = vadd.f32 %v3707, 1.0
        %v3950 = vlog2.pop %v3949
        %v3951 = vmul.f32 %v3950, 0.6931472
        %v3952 = vmul.f32 -0.5, %v3707
        %v3953 = vadd.f32 %v3952, 1.0
        %v3954 = vmul.f32 %v3953, %v3707
        %v3955 = vand.u32 2147483647, %v3707
        %vm3956 = vcmp.lt.f32.partialorder %v3955, 0.0004427343
        %v3957 = vsel %vm3956, %v3954, %v3951
        %v3958 = vadd.f32 %v3709, 1.0
        %v3959 = vlog2.pop %v3958
        %v3960 = vmul.f32 %v3959, 0.6931472
        %v3961 = vmul.f32 -0.5, %v3709
        %v3962 = vadd.f32 %v3961, 1.0
        %v3963 = vmul.f32 %v3962, %v3709
        %v3964 = vand.u32 2147483647, %v3709
        %vm3965 = vcmp.lt.f32.partialorder %v3964, 0.0004427343
        %v3966 = vsel %vm3965, %v3963, %v3960
        %v3967 = vadd.f32 %v3711, 1.0
        %v3968 = vlog2.pop %v3967
        %v3969 = vmul.f32 %v3968, 0.6931472
        %v3970 = vmul.f32 -0.5, %v3711
        %v3971 = vadd.f32 %v3970, 1.0
        %v3972 = vmul.f32 %v3971, %v3711
        %v3973 = vand.u32 2147483647, %v3711
        %vm3974 = vcmp.lt.f32.partialorder %v3973, 0.0004427343
        %v3975 = vsel %vm3974, %v3972, %v3969
        %v3976 = vadd.f32 %v3713, 1.0
        %v3977 = vlog2.pop %v3976
        %v3978 = vmul.f32 %v3977, 0.6931472
        %v3979 = vmul.f32 -0.5, %v3713
        %v3980 = vadd.f32 %v3979, 1.0
        %v3981 = vmul.f32 %v3980, %v3713
        %v3982 = vand.u32 2147483647, %v3713
        %vm3983 = vcmp.lt.f32.partialorder %v3982, 0.0004427343
        %v3984 = vsel %vm3983, %v3981, %v3978
        %v3985 = vadd.f32 %v3715, 1.0
        %v3986 = vlog2.pop %v3985
        %v3987 = vmul.f32 %v3986, 0.6931472
        %v3988 = vmul.f32 -0.5, %v3715
        %v3989 = vadd.f32 %v3988, 1.0
        %v3990 = vmul.f32 %v3989, %v3715
        %v3991 = vand.u32 2147483647, %v3715
        %vm3992 = vcmp.lt.f32.partialorder %v3991, 0.0004427343
        %v3993 = vsel %vm3992, %v3990, %v3987
        %v3994 = vadd.f32 %v3717, 1.0
        %v3995 = vlog2.pop %v3994
        %v3996 = vmul.f32 %v3995, 0.6931472
        %v3997 = vmul.f32 -0.5, %v3717
        %v3998 = vadd.f32 %v3997, 1.0
        %v3999 = vmul.f32 %v3998, %v3717
        %v4000 = vand.u32 2147483647, %v3717
        %vm4001 = vcmp.lt.f32.partialorder %v4000, 0.0004427343
        %v4002 = vsel %vm4001, %v3999, %v3996
        %v4003 = vadd.f32 %v3719, 1.0
        %v4004 = vlog2.pop %v4003
        %v4005 = vmul.f32 %v4004, 0.6931472
        %v4006 = vmul.f32 -0.5, %v3719
        %v4007 = vadd.f32 %v4006, 1.0
        %v4008 = vmul.f32 %v4007, %v3719
        %v4009 = vand.u32 2147483647, %v3719
        %vm4010 = vcmp.lt.f32.partialorder %v4009, 0.0004427343
        %v4011 = vsel %vm4010, %v4008, %v4005
        %v4012 = vadd.f32 %v3721, 1.0
        %v4013 = vlog2.pop %v4012
        %v4014 = vmul.f32 %v4013, 0.6931472
        %v4015 = vmul.f32 -0.5, %v3721
        %v4016 = vadd.f32 %v4015, 1.0
        %v4017 = vmul.f32 %v4016, %v3721
        %v4018 = vand.u32 2147483647, %v3721
        %vm4019 = vcmp.lt.f32.partialorder %v4018, 0.0004427343
        %v4020 = vsel %vm4019, %v4017, %v4014
        %v4021 = vadd.f32 %v3723, 1.0
        %v4022 = vlog2.pop %v4021
        %v4023 = vmul.f32 %v4022, 0.6931472
        %v4024 = vmul.f32 -0.5, %v3723
        %v4025 = vadd.f32 %v4024, 1.0
        %v4026 = vmul.f32 %v4025, %v3723
        %v4027 = vand.u32 2147483647, %v3723
        %vm4028 = vcmp.lt.f32.partialorder %v4027, 0.0004427343
        %v4029 = vsel %vm4028, %v4026, %v4023
        %v4030 = vadd.f32 %v3725, 1.0
        %v4031 = vlog2.pop %v4030
        %v4032 = vmul.f32 %v4031, 0.6931472
        %v4033 = vmul.f32 -0.5, %v3725
        %v4034 = vadd.f32 %v4033, 1.0
        %v4035 = vmul.f32 %v4034, %v3725
        %v4036 = vand.u32 2147483647, %v3725
        %vm4037 = vcmp.lt.f32.partialorder %v4036, 0.0004427343
        %v4038 = vsel %vm4037, %v4035, %v4032
        %v4039 = vadd.f32 %v3727, 1.0
        %v4040 = vlog2.pop %v4039
        %v4041 = vmul.f32 %v4040, 0.6931472
        %v4042 = vmul.f32 -0.5, %v3727
        %v4043 = vadd.f32 %v4042, 1.0
        %v4044 = vmul.f32 %v4043, %v3727
        %v4045 = vand.u32 2147483647, %v3727
        %vm4046 = vcmp.lt.f32.partialorder %v4045, 0.0004427343
        %v4047 = vsel %vm4046, %v4044, %v4041
        %v4048 = vadd.f32 %v3729, 1.0
        %v4049 = vlog2.pop %v4048
        %v4050 = vmul.f32 %v4049, 0.6931472
        %v4051 = vmul.f32 -0.5, %v3729
        %v4052 = vadd.f32 %v4051, 1.0
        %v4053 = vmul.f32 %v4052, %v3729
        %v4054 = vand.u32 2147483647, %v3729
        %vm4055 = vcmp.lt.f32.partialorder %v4054, 0.0004427343
        %v4056 = vsel %vm4055, %v4053, %v4050
        %v4057 = vadd.f32 %v3731, 1.0
        %v4058 = vlog2.pop %v4057
        %v4059 = vmul.f32 %v4058, 0.6931472
        %v4060 = vmul.f32 -0.5, %v3731
        %v4061 = vadd.f32 %v4060, 1.0
        %v4062 = vmul.f32 %v4061, %v3731
        %v4063 = vand.u32 2147483647, %v3731
        %vm4064 = vcmp.lt.f32.partialorder %v4063, 0.0004427343
        %v4065 = vsel %vm4064, %v4062, %v4059
        %v4066 = vadd.f32 %v3733, 1.0
        %v4067 = vlog2.pop %v4066
        %v4068 = vmul.f32 %v4067, 0.6931472
        %v4069 = vmul.f32 -0.5, %v3733
        %v4070 = vadd.f32 %v4069, 1.0
        %v4071 = vmul.f32 %v4070, %v3733
        %v4072 = vand.u32 2147483647, %v3733
        %vm4073 = vcmp.lt.f32.partialorder %v4072, 0.0004427343
        %v4074 = vsel %vm4073, %v4071, %v4068
        %v4075 = vadd.f32 %v3735, 1.0
        %v4076 = vlog2.pop %v4075
        %v4077 = vmul.f32 %v4076, 0.6931472
        %v4078 = vmul.f32 -0.5, %v3735
        %v4079 = vadd.f32 %v4078, 1.0
        %v4080 = vmul.f32 %v4079, %v3735
        %v4081 = vand.u32 2147483647, %v3735
        %vm4082 = vcmp.lt.f32.partialorder %v4081, 0.0004427343
        %v4083 = vsel %vm4082, %v4080, %v4077
        %v4084 = vadd.f32 %v3737, 1.0
        %v4085 = vlog2.pop %v4084
        %v4086 = vmul.f32 %v4085, 0.6931472
        %v4087 = vmul.f32 -0.5, %v3737
        %v4088 = vadd.f32 %v4087, 1.0
        %v4089 = vmul.f32 %v4088, %v3737
        %v4090 = vand.u32 2147483647, %v3737
        %vm4091 = vcmp.lt.f32.partialorder %v4090, 0.0004427343
        %v4092 = vsel %vm4091, %v4089, %v4086
        %v4093 = vadd.f32 %v3739, 1.0
        %v4094 = vlog2.pop %v4093
        %v4095 = vmul.f32 %v4094, 0.6931472
        %v4096 = vmul.f32 -0.5, %v3739
        %v4097 = vadd.f32 %v4096, 1.0
        %v4098 = vmul.f32 %v4097, %v3739
        %v4099 = vand.u32 2147483647, %v3739
        %vm4100 = vcmp.lt.f32.partialorder %v4099, 0.0004427343
        %v4101 = vsel %vm4100, %v4098, %v4095
        %v4102 = vadd.f32 %v3741, 1.0
        %v4103 = vlog2.pop %v4102
        %v4104 = vmul.f32 %v4103, 0.6931472
        %v4105 = vmul.f32 -0.5, %v3741
        %v4106 = vadd.f32 %v4105, 1.0
        %v4107 = vmul.f32 %v4106, %v3741
        %v4108 = vand.u32 2147483647, %v3741
        %vm4109 = vcmp.lt.f32.partialorder %v4108, 0.0004427343
        %v4110 = vsel %vm4109, %v4107, %v4104
        %v4111 = vadd.f32 %v3743, 1.0
        %v4112 = vlog2.pop %v4111
        %v4113 = vmul.f32 %v4112, 0.6931472
        %v4114 = vmul.f32 -0.5, %v3743
        %v4115 = vadd.f32 %v4114, 1.0
        %v4116 = vmul.f32 %v4115, %v3743
        %v4117 = vand.u32 2147483647, %v3743
        %vm4118 = vcmp.lt.f32.partialorder %v4117, 0.0004427343
        %v4119 = vsel %vm4118, %v4116, %v4113
        %v4120 = vadd.f32 %v3745, 1.0
        %v4121 = vlog2.pop %v4120
        %v4122 = vmul.f32 %v4121, 0.6931472
        %v4123 = vmul.f32 -0.5, %v3745
        %v4124 = vadd.f32 %v4123, 1.0
        %v4125 = vmul.f32 %v4124, %v3745
        %v4126 = vand.u32 2147483647, %v3745
        %vm4127 = vcmp.lt.f32.partialorder %v4126, 0.0004427343
        %v4128 = vsel %vm4127, %v4125, %v4122
        %v4129 = vadd.f32 %v3747, 1.0
        %v4130 = vlog2.pop %v4129
        %v4131 = vmul.f32 %v4130, 0.6931472
        %v4132 = vmul.f32 -0.5, %v3747
        %v4133 = vadd.f32 %v4132, 1.0
        %v4134 = vmul.f32 %v4133, %v3747
        %v4135 = vand.u32 2147483647, %v3747
        %vm4136 = vcmp.lt.f32.partialorder %v4135, 0.0004427343
        %v4137 = vsel %vm4136, %v4134, %v4131
        %v4138 = vadd.f32 %v3749, 1.0
        %v4139 = vlog2.pop %v4138
        %v4140 = vmul.f32 %v4139, 0.6931472
        %v4141 = vmul.f32 -0.5, %v3749
        %v4142 = vadd.f32 %v4141, 1.0
        %v4143 = vmul.f32 %v4142, %v3749
        %v4144 = vand.u32 2147483647, %v3749
        %vm4145 = vcmp.lt.f32.partialorder %v4144, 0.0004427343
        %v4146 = vsel %vm4145, %v4143, %v4140
        %v4147 = vadd.f32 %v3751, 1.0
        %v4148 = vlog2.pop %v4147
        %v4149 = vmul.f32 %v4148, 0.6931472
        %v4150 = vmul.f32 -0.5, %v3751
        %v4151 = vadd.f32 %v4150, 1.0
        %v4152 = vmul.f32 %v4151, %v3751
        %v4153 = vand.u32 2147483647, %v3751
        %vm4154 = vcmp.lt.f32.partialorder %v4153, 0.0004427343
        %v4155 = vsel %vm4154, %v4152, %v4149
        %v4156 = vadd.f32 %v3753, 1.0
        %v4157 = vlog2.pop %v4156
        %v4158 = vmul.f32 %v4157, 0.6931472
        %v4159 = vmul.f32 -0.5, %v3753
        %v4160 = vadd.f32 %v4159, 1.0
        %v4161 = vmul.f32 %v4160, %v3753
        %v4162 = vand.u32 2147483647, %v3753
        %vm4163 = vcmp.lt.f32.partialorder %v4162, 0.0004427343
        %v4164 = vsel %vm4163, %v4161, %v4158
        %v4165 = vadd.f32 %v3755, 1.0
        %v4166 = vlog2.pop %v4165
        %v4167 = vmul.f32 %v4166, 0.6931472
        %v4168 = vmul.f32 -0.5, %v3755
        %v4169 = vadd.f32 %v4168, 1.0
        %v4170 = vmul.f32 %v4169, %v3755
        %v4171 = vand.u32 2147483647, %v3755
        %vm4172 = vcmp.lt.f32.partialorder %v4171, 0.0004427343
        %v4173 = vsel %vm4172, %v4170, %v4167
        %v4174 = vadd.f32 %v3757, 1.0
        %v4175 = vlog2.pop %v4174
        %v4176 = vmul.f32 %v4175, 0.6931472
        %v4177 = vmul.f32 -0.5, %v3757
        %v4178 = vadd.f32 %v4177, 1.0
        %v4179 = vmul.f32 %v4178, %v3757
        %v4180 = vand.u32 2147483647, %v3757
        %vm4181 = vcmp.lt.f32.partialorder %v4180, 0.0004427343
        %v4182 = vsel %vm4181, %v4179, %v4176
        %v4183 = vadd.f32 %v3759, 1.0
        %v4184 = vlog2.pop %v4183
        %v4185 = vmul.f32 %v4184, 0.6931472
        %v4186 = vmul.f32 -0.5, %v3759
        %v4187 = vadd.f32 %v4186, 1.0
        %v4188 = vmul.f32 %v4187, %v3759
        %v4189 = vand.u32 2147483647, %v3759
        %vm4190 = vcmp.lt.f32.partialorder %v4189, 0.0004427343
        %v4191 = vsel %vm4190, %v4188, %v4185
        %v4192 = vadd.f32 %v3568, %v3768
        %v4193 = vadd.f32 %v3569, %v3777
        %v4194 = vadd.f32 %v3570, %v3786
        %v4195 = vadd.f32 %v3571, %v3795
        %v4196 = vadd.f32 %v3572, %v3804
        %v4197 = vadd.f32 %v3573, %v3813
        %v4198 = vadd.f32 %v3574, %v3822
        %v4199 = vadd.f32 %v3575, %v3831
        %v4200 = vadd.f32 %v3576, %v3840
        %v4201 = vadd.f32 %v3577, %v3849
        %v4202 = vadd.f32 %v3578, %v3858
        %v4203 = vadd.f32 %v3579, %v3867
        %v4204 = vadd.f32 %v3580, %v3876
        %v4205 = vadd.f32 %v3581, %v3885
        %v4206 = vadd.f32 %v3582, %v3894
        %v4207 = vadd.f32 %v3583, %v3903
        %v4208 = vadd.f32 %v3584, %v3912
        %v4209 = vadd.f32 %v3585, %v3921
        %v4210 = vadd.f32 %v3586, %v3930
        %v4211 = vadd.f32 %v3587, %v3939
        %v4212 = vadd.f32 %v3588, %v3948
        %v4213 = vadd.f32 %v3589, %v3957
        %v4214 = vadd.f32 %v3590, %v3966
        %v4215 = vadd.f32 %v3591, %v3975
        %v4216 = vadd.f32 %v3592, %v3984
        %v4217 = vadd.f32 %v3593, %v3993
        %v4218 = vadd.f32 %v3594, %v4002
        %v4219 = vadd.f32 %v3595, %v4011
        %v4220 = vadd.f32 %v3596, %v4020
        %v4221 = vadd.f32 %v3597, %v4029
        %v4222 = vadd.f32 %v3598, %v4038
        %v4223 = vadd.f32 %v3599, %v4047
        %v4224 = vadd.f32 %v3600, %v4056
        %v4225 = vadd.f32 %v3601, %v4065
        %v4226 = vadd.f32 %v3602, %v4074
        %v4227 = vadd.f32 %v3603, %v4083
        %v4228 = vadd.f32 %v3604, %v4092
        %v4229 = vadd.f32 %v3605, %v4101
        %v4230 = vadd.f32 %v3606, %v4110
        %v4231 = vadd.f32 %v3607, %v4119
        %v4232 = vadd.f32 %v3608, %v4128
        %v4233 = vadd.f32 %v3609, %v4137
        %v4234 = vadd.f32 %v3610, %v4146
        %v4235 = vadd.f32 %v3611, %v4155
        %v4236 = vadd.f32 %v3612, %v4164
        %v4237 = vadd.f32 %v3613, %v4173
        %v4238 = vadd.f32 %v3614, %v4182
        %v4239 = vadd.f32 %v3615, %v4191
        %v4240 = vmul.f32 %v4192, 0.5
        %v4241 = vmul.f32 %v4193, 0.5
        %v4242 = vmul.f32 %v4194, 0.5
        %v4243 = vmul.f32 %v4195, 0.5
        %v4244 = vmul.f32 %v4196, 0.5
        %v4245 = vmul.f32 %v4197, 0.5
        %v4246 = vmul.f32 %v4198, 0.5
        %v4247 = vmul.f32 %v4199, 0.5
        %v4248 = vmul.f32 %v4200, 0.5
        %v4249 = vmul.f32 %v4201, 0.5
        %v4250 = vmul.f32 %v4202, 0.5
        %v4251 = vmul.f32 %v4203, 0.5
        %v4252 = vmul.f32 %v4204, 0.5
        %v4253 = vmul.f32 %v4205, 0.5
        %v4254 = vmul.f32 %v4206, 0.5
        %v4255 = vmul.f32 %v4207, 0.5
        %v4256 = vmul.f32 %v4208, 0.5
        %v4257 = vmul.f32 %v4209, 0.5
        %v4258 = vmul.f32 %v4210, 0.5
        %v4259 = vmul.f32 %v4211, 0.5
        %v4260 = vmul.f32 %v4212, 0.5
        %v4261 = vmul.f32 %v4213, 0.5
        %v4262 = vmul.f32 %v4214, 0.5
        %v4263 = vmul.f32 %v4215, 0.5
        %v4264 = vmul.f32 %v4216, 0.5
        %v4265 = vmul.f32 %v4217, 0.5
        %v4266 = vmul.f32 %v4218, 0.5
        %v4267 = vmul.f32 %v4219, 0.5
        %v4268 = vmul.f32 %v4220, 0.5
        %v4269 = vmul.f32 %v4221, 0.5
        %v4270 = vmul.f32 %v4222, 0.5
        %v4271 = vmul.f32 %v4223, 0.5
        %v4272 = vmul.f32 %v4224, 0.5
        %v4273 = vmul.f32 %v4225, 0.5
        %v4274 = vmul.f32 %v4226, 0.5
        %v4275 = vmul.f32 %v4227, 0.5
        %v4276 = vmul.f32 %v4228, 0.5
        %v4277 = vmul.f32 %v4229, 0.5
        %v4278 = vmul.f32 %v4230, 0.5
        %v4279 = vmul.f32 %v4231, 0.5
        %v4280 = vmul.f32 %v4232, 0.5
        %v4281 = vmul.f32 %v4233, 0.5
        %v4282 = vmul.f32 %v4234, 0.5
        %v4283 = vmul.f32 %v4235, 0.5
        %v4284 = vmul.f32 %v4236, 0.5
        %v4285 = vmul.f32 %v4237, 0.5
        %v4286 = vmul.f32 %v4238, 0.5
        %v4287 = vmul.f32 %v4239, 0.5
        %v4288 = vadd.f32 %v2944, %v4240
        %v4289 = vadd.f32 %v2945, %v4241
        %v4290 = vadd.f32 %v2946, %v4242
        %v4291 = vadd.f32 %v2947, %v4243
        %v4292 = vadd.f32 %v2948, %v4244
        %v4293 = vadd.f32 %v2949, %v4245
        %v4294 = vadd.f32 %v2950, %v4246
        %v4295 = vadd.f32 %v2951, %v4247
        %v4296 = vadd.f32 %v2952, %v4248
        %v4297 = vadd.f32 %v2953, %v4249
        %v4298 = vadd.f32 %v2954, %v4250
        %v4299 = vadd.f32 %v2955, %v4251
        %v4300 = vadd.f32 %v2956, %v4252
        %v4301 = vadd.f32 %v2957, %v4253
        %v4302 = vadd.f32 %v2958, %v4254
        %v4303 = vadd.f32 %v2959, %v4255
        %v4304 = vadd.f32 %v2960, %v4256
        %v4305 = vadd.f32 %v2961, %v4257
        %v4306 = vadd.f32 %v2962, %v4258
        %v4307 = vadd.f32 %v2963, %v4259
        %v4308 = vadd.f32 %v2964, %v4260
        %v4309 = vadd.f32 %v2965, %v4261
        %v4310 = vadd.f32 %v2966, %v4262
        %v4311 = vadd.f32 %v2967, %v4263
        %v4312 = vadd.f32 %v2968, %v4264
        %v4313 = vadd.f32 %v2969, %v4265
        %v4314 = vadd.f32 %v2970, %v4266
        %v4315 = vadd.f32 %v2971, %v4267
        %v4316 = vadd.f32 %v2972, %v4268
        %v4317 = vadd.f32 %v2973, %v4269
        %v4318 = vadd.f32 %v2974, %v4270
        %v4319 = vadd.f32 %v2975, %v4271
        %v4320 = vadd.f32 %v2976, %v4272
        %v4321 = vadd.f32 %v2977, %v4273
        %v4322 = vadd.f32 %v2978, %v4274
        %v4323 = vadd.f32 %v2979, %v4275
        %v4324 = vadd.f32 %v2980, %v4276
        %v4325 = vadd.f32 %v2981, %v4277
        %v4326 = vadd.f32 %v2982, %v4278
        %v4327 = vadd.f32 %v2983, %v4279
        %v4328 = vadd.f32 %v2984, %v4280
        %v4329 = vadd.f32 %v2985, %v4281
        %v4330 = vadd.f32 %v2986, %v4282
        %v4331 = vadd.f32 %v2987, %v4283
        %v4332 = vadd.f32 %v2988, %v4284
        %v4333 = vadd.f32 %v2989, %v4285
        %v4334 = vadd.f32 %v2990, %v4286
        %v4335 = vadd.f32 %v2991, %v4287
        %v4336 = vld [vmem:[%s6] sm:$0xff]
        %v4337 = vld [vmem:[%s6 + $0x8] sm:$0xff]
        %v4338 = vld [vmem:[%s6 + $0x10] sm:$0xff]
        %v4339 = vld [vmem:[%s6 + $0x18] sm:$0xff]
        %4341 = vset.pattern.permute.xlu0 0
        %4342 = vperm.xlu0 %4341, %v4336
        %v4343 = vpop.permute.xlu0 %4342
        %4346 = vset.pattern.permute.xlu0 0
        %4347 = vperm.xlu0 %4346, %v4337
        %v4348 = vpop.permute.xlu0 %4347
        %4351 = vset.pattern.permute.xlu0 0
        %4352 = vperm.xlu0 %4351, %v4338
        %v4353 = vpop.permute.xlu0 %4352
        %4356 = vset.pattern.permute.xlu0 0
        %4357 = vperm.xlu0 %4356, %v4339
        %v4358 = vpop.permute.xlu0 %4357
        %v4360 = vmul.f32 %v4288, %v4343
        %v4361 = vmul.f32 %v4289, %v4343
        %v4362 = vmul.f32 %v4290, %v4343
        %v4363 = vmul.f32 %v4291, %v4343
        %v4364 = vmul.f32 %v4292, %v4343
        %v4365 = vmul.f32 %v4293, %v4343
        %v4366 = vmul.f32 %v4294, %v4343
        %v4367 = vmul.f32 %v4295, %v4343
        %v4368 = vmul.f32 %v4296, %v4343
        %v4369 = vmul.f32 %v4297, %v4343
        %v4370 = vmul.f32 %v4298, %v4343
        %v4371 = vmul.f32 %v4299, %v4343
        %v4372 = vmul.f32 %v4300, %v4348
        %v4373 = vmul.f32 %v4301, %v4348
        %v4374 = vmul.f32 %v4302, %v4348
        %v4375 = vmul.f32 %v4303, %v4348
        %v4376 = vmul.f32 %v4304, %v4348
        %v4377 = vmul.f32 %v4305, %v4348
        %v4378 = vmul.f32 %v4306, %v4348
        %v4379 = vmul.f32 %v4307, %v4348
        %v4380 = vmul.f32 %v4308, %v4348
        %v4381 = vmul.f32 %v4309, %v4348
        %v4382 = vmul.f32 %v4310, %v4348
        %v4383 = vmul.f32 %v4311, %v4348
        %v4384 = vmul.f32 %v4312, %v4353
        %v4385 = vmul.f32 %v4313, %v4353
        %v4386 = vmul.f32 %v4314, %v4353
        %v4387 = vmul.f32 %v4315, %v4353
        %v4388 = vmul.f32 %v4316, %v4353
        %v4389 = vmul.f32 %v4317, %v4353
        %v4390 = vmul.f32 %v4318, %v4353
        %v4391 = vmul.f32 %v4319, %v4353
        %v4392 = vmul.f32 %v4320, %v4353
        %v4393 = vmul.f32 %v4321, %v4353
        %v4394 = vmul.f32 %v4322, %v4353
        %v4395 = vmul.f32 %v4323, %v4353
        %v4396 = vmul.f32 %v4324, %v4358
        %v4397 = vmul.f32 %v4325, %v4358
        %v4398 = vmul.f32 %v4326, %v4358
        %v4399 = vmul.f32 %v4327, %v4358
        %v4400 = vmul.f32 %v4328, %v4358
        %v4401 = vmul.f32 %v4329, %v4358
        %v4402 = vmul.f32 %v4330, %v4358
        %v4403 = vmul.f32 %v4331, %v4358
        %v4404 = vmul.f32 %v4332, %v4358
        %v4405 = vmul.f32 %v4333, %v4358
        %v4406 = vmul.f32 %v4334, %v4358
        %v4407 = vmul.f32 %v4335, %v4358
        %v4408 = vadd.f32 %v4360, %v4372
        %v4409 = vadd.f32 %v4408, %v4384
        %v4410 = vadd.f32 %v4409, %v4396
        %v4411 = vrot.slane %v4410, 4
        %v4412 = vadd.f32 %v4410, %v4411
        %v4413 = vrot.slane %v4412, 2
        %v4414 = vadd.f32 %v4412, %v4413
        %v4415 = vrot.slane %v4414, 1
        %v4416 = vadd.f32 %v4414, %v4415
        %v4417 = vadd.f32 %v4361, %v4373
        %v4418 = vadd.f32 %v4417, %v4385
        %v4419 = vadd.f32 %v4418, %v4397
        %v4420 = vrot.slane %v4419, 4
        %v4421 = vadd.f32 %v4419, %v4420
        %v4422 = vrot.slane %v4421, 2
        %v4423 = vadd.f32 %v4421, %v4422
        %v4424 = vrot.slane %v4423, 1
        %v4425 = vadd.f32 %v4423, %v4424
        %v4426 = vadd.f32 %v4362, %v4374
        %v4427 = vadd.f32 %v4426, %v4386
        %v4428 = vadd.f32 %v4427, %v4398
        %v4429 = vrot.slane %v4428, 4
        %v4430 = vadd.f32 %v4428, %v4429
        %v4431 = vrot.slane %v4430, 2
        %v4432 = vadd.f32 %v4430, %v4431
        %v4433 = vrot.slane %v4432, 1
        %v4434 = vadd.f32 %v4432, %v4433
        %v4435 = vadd.f32 %v4363, %v4375
        %v4436 = vadd.f32 %v4435, %v4387
        %v4437 = vadd.f32 %v4436, %v4399
        %v4438 = vrot.slane %v4437, 4
        %v4439 = vadd.f32 %v4437, %v4438
        %v4440 = vrot.slane %v4439, 2
        %v4441 = vadd.f32 %v4439, %v4440
        %v4442 = vrot.slane %v4441, 1
        %v4443 = vadd.f32 %v4441, %v4442
        %v4444 = vadd.f32 %v4364, %v4376
        %v4445 = vadd.f32 %v4444, %v4388
        %v4446 = vadd.f32 %v4445, %v4400
        %v4447 = vrot.slane %v4446, 4
        %v4448 = vadd.f32 %v4446, %v4447
        %v4449 = vrot.slane %v4448, 2
        %v4450 = vadd.f32 %v4448, %v4449
        %v4451 = vrot.slane %v4450, 1
        %v4452 = vadd.f32 %v4450, %v4451
        %v4453 = vadd.f32 %v4365, %v4377
        %v4454 = vadd.f32 %v4453, %v4389
        %v4455 = vadd.f32 %v4454, %v4401
        %v4456 = vrot.slane %v4455, 4
        %v4457 = vadd.f32 %v4455, %v4456
        %v4458 = vrot.slane %v4457, 2
        %v4459 = vadd.f32 %v4457, %v4458
        %v4460 = vrot.slane %v4459, 1
        %v4461 = vadd.f32 %v4459, %v4460
        %v4462 = vadd.f32 %v4366, %v4378
        %v4463 = vadd.f32 %v4462, %v4390
        %v4464 = vadd.f32 %v4463, %v4402
        %v4465 = vrot.slane %v4464, 4
        %v4466 = vadd.f32 %v4464, %v4465
        %v4467 = vrot.slane %v4466, 2
        %v4468 = vadd.f32 %v4466, %v4467
        %v4469 = vrot.slane %v4468, 1
        %v4470 = vadd.f32 %v4468, %v4469
        %v4471 = vadd.f32 %v4367, %v4379
        %v4472 = vadd.f32 %v4471, %v4391
        %v4473 = vadd.f32 %v4472, %v4403
        %v4474 = vrot.slane %v4473, 4
        %v4475 = vadd.f32 %v4473, %v4474
        %v4476 = vrot.slane %v4475, 2
        %v4477 = vadd.f32 %v4475, %v4476
        %v4478 = vrot.slane %v4477, 1
        %v4479 = vadd.f32 %v4477, %v4478
        %v4480 = vadd.f32 %v4368, %v4380
        %v4481 = vadd.f32 %v4480, %v4392
        %v4482 = vadd.f32 %v4481, %v4404
        %v4483 = vrot.slane %v4482, 4
        %v4484 = vadd.f32 %v4482, %v4483
        %v4485 = vrot.slane %v4484, 2
        %v4486 = vadd.f32 %v4484, %v4485
        %v4487 = vrot.slane %v4486, 1
        %v4488 = vadd.f32 %v4486, %v4487
        %v4489 = vadd.f32 %v4369, %v4381
        %v4490 = vadd.f32 %v4489, %v4393
        %v4491 = vadd.f32 %v4490, %v4405
        %v4492 = vrot.slane %v4491, 4
        %v4493 = vadd.f32 %v4491, %v4492
        %v4494 = vrot.slane %v4493, 2
        %v4495 = vadd.f32 %v4493, %v4494
        %v4496 = vrot.slane %v4495, 1
        %v4497 = vadd.f32 %v4495, %v4496
        %v4498 = vadd.f32 %v4370, %v4382
        %v4499 = vadd.f32 %v4498, %v4394
        %v4500 = vadd.f32 %v4499, %v4406
        %v4501 = vrot.slane %v4500, 4
        %v4502 = vadd.f32 %v4500, %v4501
        %v4503 = vrot.slane %v4502, 2
        %v4504 = vadd.f32 %v4502, %v4503
        %v4505 = vrot.slane %v4504, 1
        %v4506 = vadd.f32 %v4504, %v4505
        %v4507 = vadd.f32 %v4371, %v4383
        %v4508 = vadd.f32 %v4507, %v4395
        %v4509 = vadd.f32 %v4508, %v4407
        %v4510 = vrot.slane %v4509, 4
        %v4511 = vadd.f32 %v4509, %v4510
        %v4512 = vrot.slane %v4511, 2
        %v4513 = vadd.f32 %v4511, %v4512
        %v4514 = vrot.slane %v4513, 1
        %v4515 = vadd.f32 %v4513, %v4514
        %v4516 = vld [vmem:[%s7] sm:$0x1f]
        %4518 = vset.pattern.permute.xlu0 0
        %4519 = vperm.xlu0 %4518, %v4516
        %v4520 = vpop.permute.xlu0 %4519
        %v4522 = vmul.f32 %v353, %v4520
        %v4523 = vmul.f32 %v354, %v4520
        %v4524 = vmul.f32 %v355, %v4520
        %v4525 = vmul.f32 %v356, %v4520
        %v4526 = vmul.f32 %v357, %v4520
        %v4527 = vmul.f32 %v358, %v4520
        %v4528 = vmul.f32 %v359, %v4520
        %v4529 = vmul.f32 %v360, %v4520
        %v4530 = vmul.f32 %v361, %v4520
        %v4531 = vmul.f32 %v362, %v4520
        %v4532 = vmul.f32 %v363, %v4520
        %v4533 = vmul.f32 %v364, %v4520
        %v4534 = vsel %vm406, %v4522, 0.0
        %v4535 = vrot.slane %v4534, 4
        %v4536 = vadd.f32 %v4534, %v4535
        %v4537 = vrot.slane %v4536, 2
        %v4538 = vadd.f32 %v4536, %v4537
        %v4539 = vrot.slane %v4538, 1
        %v4540 = vadd.f32 %v4538, %v4539
        %v4541 = vsel %vm406, %v4523, 0.0
        %v4542 = vrot.slane %v4541, 4
        %v4543 = vadd.f32 %v4541, %v4542
        %v4544 = vrot.slane %v4543, 2
        %v4545 = vadd.f32 %v4543, %v4544
        %v4546 = vrot.slane %v4545, 1
        %v4547 = vadd.f32 %v4545, %v4546
        %v4548 = vsel %vm406, %v4524, 0.0
        %v4549 = vrot.slane %v4548, 4
        %v4550 = vadd.f32 %v4548, %v4549
        %v4551 = vrot.slane %v4550, 2
        %v4552 = vadd.f32 %v4550, %v4551
        %v4553 = vrot.slane %v4552, 1
        %v4554 = vadd.f32 %v4552, %v4553
        %v4555 = vsel %vm406, %v4525, 0.0
        %v4556 = vrot.slane %v4555, 4
        %v4557 = vadd.f32 %v4555, %v4556
        %v4558 = vrot.slane %v4557, 2
        %v4559 = vadd.f32 %v4557, %v4558
        %v4560 = vrot.slane %v4559, 1
        %v4561 = vadd.f32 %v4559, %v4560
        %v4562 = vsel %vm406, %v4526, 0.0
        %v4563 = vrot.slane %v4562, 4
        %v4564 = vadd.f32 %v4562, %v4563
        %v4565 = vrot.slane %v4564, 2
        %v4566 = vadd.f32 %v4564, %v4565
        %v4567 = vrot.slane %v4566, 1
        %v4568 = vadd.f32 %v4566, %v4567
        %v4569 = vsel %vm406, %v4527, 0.0
        %v4570 = vrot.slane %v4569, 4
        %v4571 = vadd.f32 %v4569, %v4570
        %v4572 = vrot.slane %v4571, 2
        %v4573 = vadd.f32 %v4571, %v4572
        %v4574 = vrot.slane %v4573, 1
        %v4575 = vadd.f32 %v4573, %v4574
        %v4576 = vsel %vm406, %v4528, 0.0
        %v4577 = vrot.slane %v4576, 4
        %v4578 = vadd.f32 %v4576, %v4577
        %v4579 = vrot.slane %v4578, 2
        %v4580 = vadd.f32 %v4578, %v4579
        %v4581 = vrot.slane %v4580, 1
        %v4582 = vadd.f32 %v4580, %v4581
        %v4583 = vsel %vm406, %v4529, 0.0
        %v4584 = vrot.slane %v4583, 4
        %v4585 = vadd.f32 %v4583, %v4584
        %v4586 = vrot.slane %v4585, 2
        %v4587 = vadd.f32 %v4585, %v4586
        %v4588 = vrot.slane %v4587, 1
        %v4589 = vadd.f32 %v4587, %v4588
        %v4590 = vsel %vm406, %v4530, 0.0
        %v4591 = vrot.slane %v4590, 4
        %v4592 = vadd.f32 %v4590, %v4591
        %v4593 = vrot.slane %v4592, 2
        %v4594 = vadd.f32 %v4592, %v4593
        %v4595 = vrot.slane %v4594, 1
        %v4596 = vadd.f32 %v4594, %v4595
        %v4597 = vsel %vm406, %v4531, 0.0
        %v4598 = vrot.slane %v4597, 4
        %v4599 = vadd.f32 %v4597, %v4598
        %v4600 = vrot.slane %v4599, 2
        %v4601 = vadd.f32 %v4599, %v4600
        %v4602 = vrot.slane %v4601, 1
        %v4603 = vadd.f32 %v4601, %v4602
        %v4604 = vsel %vm406, %v4532, 0.0
        %v4605 = vrot.slane %v4604, 4
        %v4606 = vadd.f32 %v4604, %v4605
        %v4607 = vrot.slane %v4606, 2
        %v4608 = vadd.f32 %v4606, %v4607
        %v4609 = vrot.slane %v4608, 1
        %v4610 = vadd.f32 %v4608, %v4609
        %v4611 = vsel %vm406, %v4533, 0.0
        %v4612 = vrot.slane %v4611, 4
        %v4613 = vadd.f32 %v4611, %v4612
        %v4614 = vrot.slane %v4613, 2
        %v4615 = vadd.f32 %v4613, %v4614
        %v4616 = vrot.slane %v4615, 1
        %v4617 = vadd.f32 %v4615, %v4616
        %v4618 = vld [vmem:[#allocation2] sm:$0x1]
        %4620 = vset.pattern.permute.xlu0 0
        %4621 = vperm.xlu0 %4620, %v4618
        %v4622 = vpop.permute.xlu0 %4621
        %v4624 = vlaneseq
        %v4625 = vshrl.u32 %v4624, 7
        %v4626 = vsub.s32 0, %v4625
        %v4627 = vrot.slane %v4622, %v4626
        %v4628 = vadd.f32 %v4540, %v4627
        %v4629 = vadd.f32 %v4547, %v4627
        %v4630 = vadd.f32 %v4554, %v4627
        %v4631 = vadd.f32 %v4561, %v4627
        %v4632 = vadd.f32 %v4568, %v4627
        %v4633 = vadd.f32 %v4575, %v4627
        %v4634 = vadd.f32 %v4582, %v4627
        %v4635 = vadd.f32 %v4589, %v4627
        %v4636 = vadd.f32 %v4596, %v4627
        %v4637 = vadd.f32 %v4603, %v4627
        %v4638 = vadd.f32 %v4610, %v4627
        %v4639 = vadd.f32 %v4617, %v4627
        %v4640 = vld [vmem:[%s5] sm:$0x1f]
        %v4642 = vsel %vm393, %v4640, 0
        %4644 = vmatprep.subr.mxu0 %v411
        %4645 = vmatpush1.msra.mxu0 %v408
        %4646 = vmatprep.subr.mxu0 0.0
        %4647 = vmatpush1.msra.mxu0 0.0
        %4648 = vmatprep.subr.mxu0 0.0
        %4649 = vmatpush1.msra.mxu0 0.0
        %4650 = vmatprep.subr.mxu0 0.0
        %4651 = vmatpush1.msra.mxu0 0.0
        %4652 = vmatprep.subr.mxu0 0.0
        %4653 = vmatpush1.msra.mxu0 0.0
        %4654 = vmatprep.subr.mxu0 0.0
        %4655 = vmatpush1.msra.mxu0 0.0
        %4656 = vmatprep.subr.mxu0 0.0
        %4657 = vmatpush1.msra.mxu0 0.0
        %4658 = vmatprep.subr.mxu0 0.0
        %4659 = vmatpush1.msra.mxu0 0.0
        %4660 = vmatprep.subr.mxu0 0.0
        %4661 = vmatpush1.msra.mxu0 0.0
        %4662 = vmatprep.subr.mxu0 0.0
        %4663 = vmatpush1.msra.mxu0 0.0
        %4664 = vmatprep.subr.mxu0 0.0
        %4665 = vmatpush1.msra.mxu0 0.0
        %4666 = vmatprep.subr.mxu0 0.0
        %4667 = vmatpush1.msra.mxu0 0.0
        %4668 = vmatprep.subr.mxu0 0.0
        %4669 = vmatpush1.msra.mxu0 0.0
        %4670 = vmatprep.subr.mxu0 0.0
        %4671 = vmatpush1.msra.mxu0 0.0
        %4672 = vmatprep.subr.mxu0 0.0
        %4673 = vmatpush1.msra.mxu0 0.0
        %4674 = vmatprep.subr.mxu0 0.0
        %4675 = vmatpush1.msra.mxu0 0.0
        %4676 = vmatprep.subr.mxu0 0.0
        %4677 = vmatpush1.msra.mxu0 0.0
        %4678 = vmatprep.subr.mxu0 0.0
        %4679 = vmatpush1.msra.mxu0 0.0
        %4680 = vmatprep.subr.mxu0 0.0
        %4681 = vmatpush1.msra.mxu0 0.0
        %4682 = vmatprep.subr.mxu0 0.0
        %4683 = vmatpush1.msra.mxu0 0.0
        %4684 = vmatprep.subr.mxu0 0.0
        %4685 = vmatpush1.msra.mxu0 0.0
        %4686 = vmatprep.subr.mxu0 0.0
        %4687 = vmatpush1.msra.mxu0 0.0
        %4688 = vmatprep.subr.mxu0 0.0
        %4689 = vmatpush1.msra.mxu0 0.0
        %4690 = vmatprep.subr.mxu0 0.0
        %4691 = vmatpush1.msra.mxu0 0.0
        %4692 = vmatprep.subr.mxu0 0.0
        %4693 = vmatpush1.msra.mxu0 0.0
        %4694 = vmatprep.subr.mxu0 0.0
        %4695 = vmatpush1.msra.mxu0 0.0
        %4696 = vmatprep.subr.mxu0 0.0
        %4697 = vmatpush1.msra.mxu0 0.0
        %4698 = vmatprep.subr.mxu0 0.0
        %4699 = vmatpush1.msra.mxu0 0.0
        %4700 = vmatprep.subr.mxu0 0.0
        %4701 = vmatpush1.msra.mxu0 0.0
        %4702 = vmatprep.subr.mxu0 0.0
        %4703 = vmatpush1.msra.mxu0 0.0
        %4704 = vmatprep.subr.mxu0 0.0
        %4705 = vmatpush1.msra.mxu0 0.0
        %4706 = vmatprep.subr.mxu0 0.0
        %4707 = vmatpush1.msra.mxu0 0.0
        %4708 = vmatprep.mubr.f32.mxu0 0.0
        %4709 = vmatmul.mubr.f32.gmra.mrb[0].mxu0 %v4642
        %v4710 = vpop.f32.mrb[0].mxu0
        %v4711 = vadd.f32 0.0, %v4710
        %v4712 = vpop.f32.mrb[0].mxu0
        %v4713 = vadd.f32 0.0, %v4712
        %4714 = vdwg.mxu0
        %4715 = vmatprep.subr.mxu0 %v417
        %4716 = vmatpush1.msra.mxu0 %v414
        %4717 = vmatprep.subr.mxu0 0.0
        %4718 = vmatpush1.msra.mxu0 0.0
        %4719 = vmatprep.subr.mxu0 0.0
        %4720 = vmatpush1.msra.mxu0 0.0
        %4721 = vmatprep.subr.mxu0 0.0
        %4722 = vmatpush1.msra.mxu0 0.0
        %4723 = vmatprep.subr.mxu0 0.0
        %4724 = vmatpush1.msra.mxu0 0.0
        %4725 = vmatprep.subr.mxu0 0.0
        %4726 = vmatpush1.msra.mxu0 0.0
        %4727 = vmatprep.subr.mxu0 0.0
        %4728 = vmatpush1.msra.mxu0 0.0
        %4729 = vmatprep.subr.mxu0 0.0
        %4730 = vmatpush1.msra.mxu0 0.0
        %4731 = vmatprep.subr.mxu0 0.0
        %4732 = vmatpush1.msra.mxu0 0.0
        %4733 = vmatprep.subr.mxu0 0.0
        %4734 = vmatpush1.msra.mxu0 0.0
        %4735 = vmatprep.subr.mxu0 0.0
        %4736 = vmatpush1.msra.mxu0 0.0
        %4737 = vmatprep.subr.mxu0 0.0
        %4738 = vmatpush1.msra.mxu0 0.0
        %4739 = vmatprep.subr.mxu0 0.0
        %4740 = vmatpush1.msra.mxu0 0.0
        %4741 = vmatprep.subr.mxu0 0.0
        %4742 = vmatpush1.msra.mxu0 0.0
        %4743 = vmatprep.subr.mxu0 0.0
        %4744 = vmatpush1.msra.mxu0 0.0
        %4745 = vmatprep.subr.mxu0 0.0
        %4746 = vmatpush1.msra.mxu0 0.0
        %4747 = vmatprep.subr.mxu0 0.0
        %4748 = vmatpush1.msra.mxu0 0.0
        %4749 = vmatprep.subr.mxu0 0.0
        %4750 = vmatpush1.msra.mxu0 0.0
        %4751 = vmatprep.subr.mxu0 0.0
        %4752 = vmatpush1.msra.mxu0 0.0
        %4753 = vmatprep.subr.mxu0 0.0
        %4754 = vmatpush1.msra.mxu0 0.0
        %4755 = vmatprep.subr.mxu0 0.0
        %4756 = vmatpush1.msra.mxu0 0.0
        %4757 = vmatprep.subr.mxu0 0.0
        %4758 = vmatpush1.msra.mxu0 0.0
        %4759 = vmatprep.subr.mxu0 0.0
        %4760 = vmatpush1.msra.mxu0 0.0
        %4761 = vmatprep.subr.mxu0 0.0
        %4762 = vmatpush1.msra.mxu0 0.0
        %4763 = vmatprep.subr.mxu0 0.0
        %4764 = vmatpush1.msra.mxu0 0.0
        %4765 = vmatprep.subr.mxu0 0.0
        %4766 = vmatpush1.msra.mxu0 0.0
        %4767 = vmatprep.subr.mxu0 0.0
        %4768 = vmatpush1.msra.mxu0 0.0
        %4769 = vmatprep.subr.mxu0 0.0
        %4770 = vmatpush1.msra.mxu0 0.0
        %4771 = vmatprep.subr.mxu0 0.0
        %4772 = vmatpush1.msra.mxu0 0.0
        %4773 = vmatprep.subr.mxu0 0.0
        %4774 = vmatpush1.msra.mxu0 0.0
        %4775 = vmatprep.subr.mxu0 0.0
        %4776 = vmatpush1.msra.mxu0 0.0
        %4777 = vmatprep.subr.mxu0 0.0
        %4778 = vmatpush1.msra.mxu0 0.0
        %4779 = vmatprep.mubr.f32.mxu0 0.0
        %4780 = vmatmul.mubr.f32.gmra.mrb[0].mxu0 %v4642
        %v4781 = vpop.f32.mrb[0].mxu0
        %v4782 = vadd.f32 0.0, %v4781
        %v4783 = vpop.f32.mrb[0].mxu0
        %v4784 = vadd.f32 0.0, %v4783
        %4785 = vdwg.mxu0
        %4786 = vmatprep.subr.mxu0 %v423
        %4787 = vmatpush1.msra.mxu0 %v420
        %4788 = vmatprep.subr.mxu0 0.0
        %4789 = vmatpush1.msra.mxu0 0.0
        %4790 = vmatprep.subr.mxu0 0.0
        %4791 = vmatpush1.msra.mxu0 0.0
        %4792 = vmatprep.subr.mxu0 0.0
        %4793 = vmatpush1.msra.mxu0 0.0
        %4794 = vmatprep.subr.mxu0 0.0
        %4795 = vmatpush1.msra.mxu0 0.0
        %4796 = vmatprep.subr.mxu0 0.0
        %4797 = vmatpush1.msra.mxu0 0.0
        %4798 = vmatprep.subr.mxu0 0.0
        %4799 = vmatpush1.msra.mxu0 0.0
        %4800 = vmatprep.subr.mxu0 0.0
        %4801 = vmatpush1.msra.mxu0 0.0
        %4802 = vmatprep.subr.mxu0 0.0
        %4803 = vmatpush1.msra.mxu0 0.0
        %4804 = vmatprep.subr.mxu0 0.0
        %4805 = vmatpush1.msra.mxu0 0.0
        %4806 = vmatprep.subr.mxu0 0.0
        %4807 = vmatpush1.msra.mxu0 0.0
        %4808 = vmatprep.subr.mxu0 0.0
        %4809 = vmatpush1.msra.mxu0 0.0
        %4810 = vmatprep.subr.mxu0 0.0
        %4811 = vmatpush1.msra.mxu0 0.0
        %4812 = vmatprep.subr.mxu0 0.0
        %4813 = vmatpush1.msra.mxu0 0.0
        %4814 = vmatprep.subr.mxu0 0.0
        %4815 = vmatpush1.msra.mxu0 0.0
        %4816 = vmatprep.subr.mxu0 0.0
        %4817 = vmatpush1.msra.mxu0 0.0
        %4818 = vmatprep.subr.mxu0 0.0
        %4819 = vmatpush1.msra.mxu0 0.0
        %4820 = vmatprep.subr.mxu0 0.0
        %4821 = vmatpush1.msra.mxu0 0.0
        %4822 = vmatprep.subr.mxu0 0.0
        %4823 = vmatpush1.msra.mxu0 0.0
        %4824 = vmatprep.subr.mxu0 0.0
        %4825 = vmatpush1.msra.mxu0 0.0
        %4826 = vmatprep.subr.mxu0 0.0
        %4827 = vmatpush1.msra.mxu0 0.0
        %4828 = vmatprep.subr.mxu0 0.0
        %4829 = vmatpush1.msra.mxu0 0.0
        %4830 = vmatprep.subr.mxu0 0.0
        %4831 = vmatpush1.msra.mxu0 0.0
        %4832 = vmatprep.subr.mxu0 0.0
        %4833 = vmatpush1.msra.mxu0 0.0
        %4834 = vmatprep.subr.mxu0 0.0
        %4835 = vmatpush1.msra.mxu0 0.0
        %4836 = vmatprep.subr.mxu0 0.0
        %4837 = vmatpush1.msra.mxu0 0.0
        %4838 = vmatprep.subr.mxu0 0.0
        %4839 = vmatpush1.msra.mxu0 0.0
        %4840 = vmatprep.subr.mxu0 0.0
        %4841 = vmatpush1.msra.mxu0 0.0
        %4842 = vmatprep.subr.mxu0 0.0
        %4843 = vmatpush1.msra.mxu0 0.0
        %4844 = vmatprep.subr.mxu0 0.0
        %4845 = vmatpush1.msra.mxu0 0.0
        %4846 = vmatprep.subr.mxu0 0.0
        %4847 = vmatpush1.msra.mxu0 0.0
        %4848 = vmatprep.subr.mxu0 0.0
        %4849 = vmatpush1.msra.mxu0 0.0
        %4850 = vmatprep.mubr.f32.mxu0 0.0
        %4851 = vmatmul.mubr.f32.gmra.mrb[0].mxu0 %v4642
        %v4852 = vpop.f32.mrb[0].mxu0
        %v4853 = vadd.f32 0.0, %v4852
        %v4854 = vpop.f32.mrb[0].mxu0
        %v4855 = vadd.f32 0.0, %v4854
        %4856 = vdwg.mxu0
        %4857 = vmatprep.subr.mxu0 %v429
        %4858 = vmatpush1.msra.mxu0 %v426
        %4859 = vmatprep.subr.mxu0 0.0
        %4860 = vmatpush1.msra.mxu0 0.0
        %4861 = vmatprep.subr.mxu0 0.0
        %4862 = vmatpush1.msra.mxu0 0.0
        %4863 = vmatprep.subr.mxu0 0.0
        %4864 = vmatpush1.msra.mxu0 0.0
        %4865 = vmatprep.subr.mxu0 0.0
        %4866 = vmatpush1.msra.mxu0 0.0
        %4867 = vmatprep.subr.mxu0 0.0
        %4868 = vmatpush1.msra.mxu0 0.0
        %4869 = vmatprep.subr.mxu0 0.0
        %4870 = vmatpush1.msra.mxu0 0.0
        %4871 = vmatprep.subr.mxu0 0.0
        %4872 = vmatpush1.msra.mxu0 0.0
        %4873 = vmatprep.subr.mxu0 0.0
        %4874 = vmatpush1.msra.mxu0 0.0
        %4875 = vmatprep.subr.mxu0 0.0
        %4876 = vmatpush1.msra.mxu0 0.0
        %4877 = vmatprep.subr.mxu0 0.0
        %4878 = vmatpush1.msra.mxu0 0.0
        %4879 = vmatprep.subr.mxu0 0.0
        %4880 = vmatpush1.msra.mxu0 0.0
        %4881 = vmatprep.subr.mxu0 0.0
        %4882 = vmatpush1.msra.mxu0 0.0
        %4883 = vmatprep.subr.mxu0 0.0
        %4884 = vmatpush1.msra.mxu0 0.0
        %4885 = vmatprep.subr.mxu0 0.0
        %4886 = vmatpush1.msra.mxu0 0.0
        %4887 = vmatprep.subr.mxu0 0.0
        %4888 = vmatpush1.msra.mxu0 0.0
        %4889 = vmatprep.subr.mxu0 0.0
        %4890 = vmatpush1.msra.mxu0 0.0
        %4891 = vmatprep.subr.mxu0 0.0
        %4892 = vmatpush1.msra.mxu0 0.0
        %4893 = vmatprep.subr.mxu0 0.0
        %4894 = vmatpush1.msra.mxu0 0.0
        %4895 = vmatprep.subr.mxu0 0.0
        %4896 = vmatpush1.msra.mxu0 0.0
        %4897 = vmatprep.subr.mxu0 0.0
        %4898 = vmatpush1.msra.mxu0 0.0
        %4899 = vmatprep.subr.mxu0 0.0
        %4900 = vmatpush1.msra.mxu0 0.0
        %4901 = vmatprep.subr.mxu0 0.0
        %4902 = vmatpush1.msra.mxu0 0.0
        %4903 = vmatprep.subr.mxu0 0.0
        %4904 = vmatpush1.msra.mxu0 0.0
        %4905 = vmatprep.subr.mxu0 0.0
        %4906 = vmatpush1.msra.mxu0 0.0
        %4907 = vmatprep.subr.mxu0 0.0
        %4908 = vmatpush1.msra.mxu0 0.0
        %4909 = vmatprep.subr.mxu0 0.0
        %4910 = vmatpush1.msra.mxu0 0.0
        %4911 = vmatprep.subr.mxu0 0.0
        %4912 = vmatpush1.msra.mxu0 0.0
        %4913 = vmatprep.subr.mxu0 0.0
        %4914 = vmatpush1.msra.mxu0 0.0
        %4915 = vmatprep.subr.mxu0 0.0
        %4916 = vmatpush1.msra.mxu0 0.0
        %4917 = vmatprep.subr.mxu0 0.0
        %4918 = vmatpush1.msra.mxu0 0.0
        %4919 = vmatprep.subr.mxu0 0.0
        %4920 = vmatpush1.msra.mxu0 0.0
        %4921 = vmatprep.mubr.f32.mxu0 0.0
        %4922 = vmatmul.mubr.f32.gmra.mrb[0].mxu0 %v4642
        %v4923 = vpop.f32.mrb[0].mxu0
        %v4924 = vadd.f32 0.0, %v4923
        %v4925 = vpop.f32.mrb[0].mxu0
        %v4926 = vadd.f32 0.0, %v4925
        %4927 = vdwg.mxu0
        %4928 = vmatprep.subr.mxu0 %v435
        %4929 = vmatpush1.msra.mxu0 %v432
        %4930 = vmatprep.subr.mxu0 0.0
        %4931 = vmatpush1.msra.mxu0 0.0
        %4932 = vmatprep.subr.mxu0 0.0
        %4933 = vmatpush1.msra.mxu0 0.0
        %4934 = vmatprep.subr.mxu0 0.0
        %4935 = vmatpush1.msra.mxu0 0.0
        %4936 = vmatprep.subr.mxu0 0.0
        %4937 = vmatpush1.msra.mxu0 0.0
        %4938 = vmatprep.subr.mxu0 0.0
        %4939 = vmatpush1.msra.mxu0 0.0
        %4940 = vmatprep.subr.mxu0 0.0
        %4941 = vmatpush1.msra.mxu0 0.0
        %4942 = vmatprep.subr.mxu0 0.0
        %4943 = vmatpush1.msra.mxu0 0.0
        %4944 = vmatprep.subr.mxu0 0.0
        %4945 = vmatpush1.msra.mxu0 0.0
        %4946 = vmatprep.subr.mxu0 0.0
        %4947 = vmatpush1.msra.mxu0 0.0
        %4948 = vmatprep.subr.mxu0 0.0
        %4949 = vmatpush1.msra.mxu0 0.0
        %4950 = vmatprep.subr.mxu0 0.0
        %4951 = vmatpush1.msra.mxu0 0.0
        %4952 = vmatprep.subr.mxu0 0.0
        %4953 = vmatpush1.msra.mxu0 0.0
        %4954 = vmatprep.subr.mxu0 0.0
        %4955 = vmatpush1.msra.mxu0 0.0
        %4956 = vmatprep.subr.mxu0 0.0
        %4957 = vmatpush1.msra.mxu0 0.0
        %4958 = vmatprep.subr.mxu0 0.0
        %4959 = vmatpush1.msra.mxu0 0.0
        %4960 = vmatprep.subr.mxu0 0.0
        %4961 = vmatpush1.msra.mxu0 0.0
        %4962 = vmatprep.subr.mxu0 0.0
        %4963 = vmatpush1.msra.mxu0 0.0
        %4964 = vmatprep.subr.mxu0 0.0
        %4965 = vmatpush1.msra.mxu0 0.0
        %4966 = vmatprep.subr.mxu0 0.0
        %4967 = vmatpush1.msra.mxu0 0.0
        %4968 = vmatprep.subr.mxu0 0.0
        %4969 = vmatpush1.msra.mxu0 0.0
        %4970 = vmatprep.subr.mxu0 0.0
        %4971 = vmatpush1.msra.mxu0 0.0
        %4972 = vmatprep.subr.mxu0 0.0
        %4973 = vmatpush1.msra.mxu0 0.0
        %4974 = vmatprep.subr.mxu0 0.0
        %4975 = vmatpush1.msra.mxu0 0.0
        %4976 = vmatprep.subr.mxu0 0.0
        %4977 = vmatpush1.msra.mxu0 0.0
        %4978 = vmatprep.subr.mxu0 0.0
        %4979 = vmatpush1.msra.mxu0 0.0
        %4980 = vmatprep.subr.mxu0 0.0
        %4981 = vmatpush1.msra.mxu0 0.0
        %4982 = vmatprep.subr.mxu0 0.0
        %4983 = vmatpush1.msra.mxu0 0.0
        %4984 = vmatprep.subr.mxu0 0.0
        %4985 = vmatpush1.msra.mxu0 0.0
        %4986 = vmatprep.subr.mxu0 0.0
        %4987 = vmatpush1.msra.mxu0 0.0
        %4988 = vmatprep.subr.mxu0 0.0
        %4989 = vmatpush1.msra.mxu0 0.0
        %4990 = vmatprep.subr.mxu0 0.0
        %4991 = vmatpush1.msra.mxu0 0.0
        %4992 = vmatprep.mubr.f32.mxu0 0.0
        %4993 = vmatmul.mubr.f32.gmra.mrb[0].mxu0 %v4642
        %v4994 = vpop.f32.mrb[0].mxu0
        %v4995 = vadd.f32 0.0, %v4994
        %v4996 = vpop.f32.mrb[0].mxu0
        %v4997 = vadd.f32 0.0, %v4996
        %4998 = vdwg.mxu0
        %4999 = vmatprep.subr.mxu0 %v441
        %5000 = vmatpush1.msra.mxu0 %v438
        %5001 = vmatprep.subr.mxu0 0.0
        %5002 = vmatpush1.msra.mxu0 0.0
        %5003 = vmatprep.subr.mxu0 0.0
        %5004 = vmatpush1.msra.mxu0 0.0
        %5005 = vmatprep.subr.mxu0 0.0
        %5006 = vmatpush1.msra.mxu0 0.0
        %5007 = vmatprep.subr.mxu0 0.0
        %5008 = vmatpush1.msra.mxu0 0.0
        %5009 = vmatprep.subr.mxu0 0.0
        %5010 = vmatpush1.msra.mxu0 0.0
        %5011 = vmatprep.subr.mxu0 0.0
        %5012 = vmatpush1.msra.mxu0 0.0
        %5013 = vmatprep.subr.mxu0 0.0
        %5014 = vmatpush1.msra.mxu0 0.0
        %5015 = vmatprep.subr.mxu0 0.0
        %5016 = vmatpush1.msra.mxu0 0.0
        %5017 = vmatprep.subr.mxu0 0.0
        %5018 = vmatpush1.msra.mxu0 0.0
        %5019 = vmatprep.subr.mxu0 0.0
        %5020 = vmatpush1.msra.mxu0 0.0
        %5021 = vmatprep.subr.mxu0 0.0
        %5022 = vmatpush1.msra.mxu0 0.0
        %5023 = vmatprep.subr.mxu0 0.0
        %5024 = vmatpush1.msra.mxu0 0.0
        %5025 = vmatprep.subr.mxu0 0.0
        %5026 = vmatpush1.msra.mxu0 0.0
        %5027 = vmatprep.subr.mxu0 0.0
        %5028 = vmatpush1.msra.mxu0 0.0
        %5029 = vmatprep.subr.mxu0 0.0
        %5030 = vmatpush1.msra.mxu0 0.0
        %5031 = vmatprep.subr.mxu0 0.0
        %5032 = vmatpush1.msra.mxu0 0.0
        %5033 = vmatprep.subr.mxu0 0.0
        %5034 = vmatpush1.msra.mxu0 0.0
        %5035 = vmatprep.subr.mxu0 0.0
        %5036 = vmatpush1.msra.mxu0 0.0
        %5037 = vmatprep.subr.mxu0 0.0
        %5038 = vmatpush1.msra.mxu0 0.0
        %5039 = vmatprep.subr.mxu0 0.0
        %5040 = vmatpush1.msra.mxu0 0.0
        %5041 = vmatprep.subr.mxu0 0.0
        %5042 = vmatpush1.msra.mxu0 0.0
        %5043 = vmatprep.subr.mxu0 0.0
        %5044 = vmatpush1.msra.mxu0 0.0
        %5045 = vmatprep.subr.mxu0 0.0
        %5046 = vmatpush1.msra.mxu0 0.0
        %5047 = vmatprep.subr.mxu0 0.0
        %5048 = vmatpush1.msra.mxu0 0.0
        %5049 = vmatprep.subr.mxu0 0.0
        %5050 = vmatpush1.msra.mxu0 0.0
        %5051 = vmatprep.subr.mxu0 0.0
        %5052 = vmatpush1.msra.mxu0 0.0
        %5053 = vmatprep.subr.mxu0 0.0
        %5054 = vmatpush1.msra.mxu0 0.0
        %5055 = vmatprep.subr.mxu0 0.0
        %5056 = vmatpush1.msra.mxu0 0.0
        %5057 = vmatprep.subr.mxu0 0.0
        %5058 = vmatpush1.msra.mxu0 0.0
        %5059 = vmatprep.subr.mxu0 0.0
        %5060 = vmatpush1.msra.mxu0 0.0
        %5061 = vmatprep.subr.mxu0 0.0
        %5062 = vmatpush1.msra.mxu0 0.0
        %5063 = vmatprep.mubr.f32.mxu0 0.0
        %5064 = vmatmul.mubr.f32.gmra.mrb[0].mxu0 %v4642
        %v5065 = vpop.f32.mrb[0].mxu0
        %v5066 = vadd.f32 0.0, %v5065
        %v5067 = vpop.f32.mrb[0].mxu0
        %v5068 = vadd.f32 0.0, %v5067
        %5069 = vdwg.mxu0
        %v5070 = vmul.f32 %v4711, %v353
        %v5071 = vmul.f32 %v4713, %v354
        %v5072 = vmul.f32 %v4782, %v355
        %v5073 = vmul.f32 %v4784, %v356
        %v5074 = vmul.f32 %v4853, %v357
        %v5075 = vmul.f32 %v4855, %v358
        %v5076 = vmul.f32 %v4924, %v359
        %v5077 = vmul.f32 %v4926, %v360
        %v5078 = vmul.f32 %v4995, %v361
        %v5079 = vmul.f32 %v4997, %v362
        %v5080 = vmul.f32 %v5066, %v363
        %v5081 = vmul.f32 %v5068, %v364
        %v5082 = vsel %vm406, %v5070, 0.0
        %v5083 = vrot.slane %v5082, 4
        %v5084 = vadd.f32 %v5082, %v5083
        %v5085 = vrot.slane %v5084, 2
        %v5086 = vadd.f32 %v5084, %v5085
        %v5087 = vrot.slane %v5086, 1
        %v5088 = vadd.f32 %v5086, %v5087
        %v5089 = vsel %vm406, %v5071, 0.0
        %v5090 = vrot.slane %v5089, 4
        %v5091 = vadd.f32 %v5089, %v5090
        %v5092 = vrot.slane %v5091, 2
        %v5093 = vadd.f32 %v5091, %v5092
        %v5094 = vrot.slane %v5093, 1
        %v5095 = vadd.f32 %v5093, %v5094
        %v5096 = vsel %vm406, %v5072, 0.0
        %v5097 = vrot.slane %v5096, 4
        %v5098 = vadd.f32 %v5096, %v5097
        %v5099 = vrot.slane %v5098, 2
        %v5100 = vadd.f32 %v5098, %v5099
        %v5101 = vrot.slane %v5100, 1
        %v5102 = vadd.f32 %v5100, %v5101
        %v5103 = vsel %vm406, %v5073, 0.0
        %v5104 = vrot.slane %v5103, 4
        %v5105 = vadd.f32 %v5103, %v5104
        %v5106 = vrot.slane %v5105, 2
        %v5107 = vadd.f32 %v5105, %v5106
        %v5108 = vrot.slane %v5107, 1
        %v5109 = vadd.f32 %v5107, %v5108
        %v5110 = vsel %vm406, %v5074, 0.0
        %v5111 = vrot.slane %v5110, 4
        %v5112 = vadd.f32 %v5110, %v5111
        %v5113 = vrot.slane %v5112, 2
        %v5114 = vadd.f32 %v5112, %v5113
        %v5115 = vrot.slane %v5114, 1
        %v5116 = vadd.f32 %v5114, %v5115
        %v5117 = vsel %vm406, %v5075, 0.0
        %v5118 = vrot.slane %v5117, 4
        %v5119 = vadd.f32 %v5117, %v5118
        %v5120 = vrot.slane %v5119, 2
        %v5121 = vadd.f32 %v5119, %v5120
        %v5122 = vrot.slane %v5121, 1
        %v5123 = vadd.f32 %v5121, %v5122
        %v5124 = vsel %vm406, %v5076, 0.0
        %v5125 = vrot.slane %v5124, 4
        %v5126 = vadd.f32 %v5124, %v5125
        %v5127 = vrot.slane %v5126, 2
        %v5128 = vadd.f32 %v5126, %v5127
        %v5129 = vrot.slane %v5128, 1
        %v5130 = vadd.f32 %v5128, %v5129
        %v5131 = vsel %vm406, %v5077, 0.0
        %v5132 = vrot.slane %v5131, 4
        %v5133 = vadd.f32 %v5131, %v5132
        %v5134 = vrot.slane %v5133, 2
        %v5135 = vadd.f32 %v5133, %v5134
        %v5136 = vrot.slane %v5135, 1
        %v5137 = vadd.f32 %v5135, %v5136
        %v5138 = vsel %vm406, %v5078, 0.0
        %v5139 = vrot.slane %v5138, 4
        %v5140 = vadd.f32 %v5138, %v5139
        %v5141 = vrot.slane %v5140, 2
        %v5142 = vadd.f32 %v5140, %v5141
        %v5143 = vrot.slane %v5142, 1
        %v5144 = vadd.f32 %v5142, %v5143
        %v5145 = vsel %vm406, %v5079, 0.0
        %v5146 = vrot.slane %v5145, 4
        %v5147 = vadd.f32 %v5145, %v5146
        %v5148 = vrot.slane %v5147, 2
        %v5149 = vadd.f32 %v5147, %v5148
        %v5150 = vrot.slane %v5149, 1
        %v5151 = vadd.f32 %v5149, %v5150
        %v5152 = vsel %vm406, %v5080, 0.0
        %v5153 = vrot.slane %v5152, 4
        %v5154 = vadd.f32 %v5152, %v5153
        %v5155 = vrot.slane %v5154, 2
        %v5156 = vadd.f32 %v5154, %v5155
        %v5157 = vrot.slane %v5156, 1
        %v5158 = vadd.f32 %v5156, %v5157
        %v5159 = vsel %vm406, %v5081, 0.0
        %v5160 = vrot.slane %v5159, 4
        %v5161 = vadd.f32 %v5159, %v5160
        %v5162 = vrot.slane %v5161, 2
        %v5163 = vadd.f32 %v5161, %v5162
        %v5164 = vrot.slane %v5163, 1
        %v5165 = vadd.f32 %v5163, %v5164
        %v5166 = vmul.f32 %v5088, 0.5
        %v5167 = vmul.f32 %v5095, 0.5
        %v5168 = vmul.f32 %v5102, 0.5
        %v5169 = vmul.f32 %v5109, 0.5
        %v5170 = vmul.f32 %v5116, 0.5
        %v5171 = vmul.f32 %v5123, 0.5
        %v5172 = vmul.f32 %v5130, 0.5
        %v5173 = vmul.f32 %v5137, 0.5
        %v5174 = vmul.f32 %v5144, 0.5
        %v5175 = vmul.f32 %v5151, 0.5
        %v5176 = vmul.f32 %v5158, 0.5
        %v5177 = vmul.f32 %v5165, 0.5
        %v5178 = vadd.f32 %v4416, %v5166
        %v5179 = vadd.f32 %v4425, %v5167
        %v5180 = vadd.f32 %v4434, %v5168
        %v5181 = vadd.f32 %v4443, %v5169
        %v5182 = vadd.f32 %v4452, %v5170
        %v5183 = vadd.f32 %v4461, %v5171
        %v5184 = vadd.f32 %v4470, %v5172
        %v5185 = vadd.f32 %v4479, %v5173
        %v5186 = vadd.f32 %v4488, %v5174
        %v5187 = vadd.f32 %v4497, %v5175
        %v5188 = vadd.f32 %v4506, %v5176
        %v5189 = vadd.f32 %v4515, %v5177
        %v5190 = vadd.f32 %v5178, %v4628
        %v5191 = vadd.f32 %v5179, %v4629
        %v5192 = vadd.f32 %v5180, %v4630
        %v5193 = vadd.f32 %v5181, %v4631
        %v5194 = vadd.f32 %v5182, %v4632
        %v5195 = vadd.f32 %v5183, %v4633
        %v5196 = vadd.f32 %v5184, %v4634
        %v5197 = vadd.f32 %v5185, %v4635
        %v5198 = vadd.f32 %v5186, %v4636
        %v5199 = vadd.f32 %v5187, %v4637
        %v5200 = vadd.f32 %v5188, %v4638
        %v5201 = vadd.f32 %v5189, %v4639
        %v5214 = vcombine.low %v5190, %v5191
        %v5215 = vcombine.low %v5192, %v5193
        %v5216 = vcombine.low %v5194, %v5195
        %v5217 = vcombine.low %v5196, %v5197
        %v5219 = vunpack.c.l.s4 1966171168
        %v5220 = vunpack.c.0.s8 %v5219
        %v5221 = vlaneseq
        %v5222 = vshrl.u32 %v5221, 7
        %v5223 = vsub.s32 %v5220, %v5222
        %v5224 = vrot.slane %v5214, %v5223
        %v5226 = vunpack.c.l.s4 1966171168
        %v5227 = vunpack.c.0.s8 %v5226
        %v5228 = vlaneseq
        %v5229 = vshrl.u32 %v5228, 7
        %v5230 = vsub.s32 %v5227, %v5229
        %v5231 = vrot.slane %v5215, %v5230
        %v5233 = vunpack.c.l.s4 1966171168
        %v5234 = vunpack.c.0.s8 %v5233
        %v5235 = vlaneseq
        %v5236 = vshrl.u32 %v5235, 7
        %v5237 = vsub.s32 %v5234, %v5236
        %v5238 = vrot.slane %v5216, %v5237
        %v5240 = vunpack.c.l.s4 1966171168
        %v5241 = vunpack.c.0.s8 %v5240
        %v5242 = vlaneseq
        %v5243 = vshrl.u32 %v5242, 7
        %v5244 = vsub.s32 %v5241, %v5243
        %v5245 = vrot.slane %v5217, %v5244
        %v5246 = vcombine.low %v5224, %v5231
        %v5247 = vcombine.low %v5238, %v5245
        %v5249 = vunpack.c.l.s4 1966171168
        %v5250 = vunpack.c.0.s8 %v5249
        %v5251 = vlaneseq
        %v5252 = vshrl.u32 %v5251, 7
        %v5253 = vsub.s32 %v5250, %v5252
        %v5254 = vrot.slane %v5246, %v5253
        %v5256 = vunpack.c.l.s4 1966171168
        %v5257 = vunpack.c.0.s8 %v5256
        %v5258 = vlaneseq
        %v5259 = vshrl.u32 %v5258, 7
        %v5260 = vsub.s32 %v5257, %v5259
        %v5261 = vrot.slane %v5247, %v5260
        %v5262 = vcombine.low %v5254, %v5261
        %v5263 = vcombine.low %v5198, %v5199
        %v5264 = vcombine.low %v5200, %v5201
        %v5266 = vunpack.c.l.s4 1966171168
        %v5267 = vunpack.c.0.s8 %v5266
        %v5268 = vlaneseq
        %v5269 = vshrl.u32 %v5268, 7
        %v5270 = vsub.s32 %v5267, %v5269
        %v5271 = vrot.slane %v5263, %v5270
        %v5273 = vunpack.c.l.s4 1966171168
        %v5274 = vunpack.c.0.s8 %v5273
        %v5275 = vlaneseq
        %v5276 = vshrl.u32 %v5275, 7
        %v5277 = vsub.s32 %v5274, %v5276
        %v5278 = vrot.slane %v5264, %v5277
        %v5279 = vcombine.low %v5271, %v5278
        %v5281 = vunpack.c.l.s4 1966171168
        %v5282 = vunpack.c.0.s8 %v5281
        %v5283 = vlaneseq
        %v5284 = vshrl.u32 %v5283, 7
        %v5285 = vsub.s32 %v5282, %v5284
        %v5286 = vrot.slane %v5279, %v5285
        %5289 = vst [vmem:[%s350] sm:$0xff] %v5262
        %v5290 = vlaneseq
        %vm5291 = vcmp.ge.s32.totalorder %v5290, 0
        %vm5292 = vcmp.lt.s32.totalorder %v5290, 512
        %vm5293 = vmand %vm5291, %vm5292
        %5294 = vst.msk [vmem:[%s350 + $0x8] sm:$0xf] %vm5293, %v5286
        %s5295 = sand.u32 %s230, 1
        %s5296 = scalar_lea.sflag [#allocation5], %s5295
        %s5297 = sand.u32 %s230, 1
        %s5298 = smul.addr %s5297, 12
        %s5299 = scalar_lea.vmem [#allocation6], %s5298
        // Predicated region
        $region61: #{tpu_custom_call.1} parent=55 // pred_check
          %p5300 = pneg %p240
        $region62: #{tpu_custom_call.1} parent=55 // pred_check_branch
          %5302 = sbr.rel (%p5300) target = $region64
        $region63: #{tpu_custom_call.1} parent=55 // pred_region
          %s5303 = smul.u32 12, %s28
          %s5305 = ssub.s32 192, 192
          %5306 = vsyncadd %s5296, %s5305
          %s5307 = smul.addr %s5303, 16
          %s5308 = scalar_lea.hbm %s9, %s5307
          %s5310 = sshll.u32 %s5299, 4
          %s5311 = int_to_ptr.vmem [resolvable:$true] %s5310
          %5313 = dma.vmem_to_hbm [thread:$0]  %s5311, 192, %s5308, %s5296
        $region64: #{tpu_custom_call.1} parent=55 // pred_fallthru
          _
      $region56: #{tpu_custom_call.1} parent=5 // pred_fallthru
        _
      %p5314 = scmp.le.s32.totalorder 2, %s23
      // Predicated region
      $region65: #{tpu_custom_call.1} parent=5 // pred_check
        %p5315 = pneg %p5314
      $region66: #{tpu_custom_call.1} parent=5 // pred_check_branch
        %5317 = sbr.rel (%p5315) target = $region68
      $region67: #{tpu_custom_call.1} parent=5 // pred_region
        %s5318 = ssub.s32 %s23, 2
        // Predicated region
        $region69: #{tpu_custom_call.1} parent=67 // pred_check
          %p5319 = pneg %p246
        $region70: #{tpu_custom_call.1} parent=67 // pred_check_branch
          %5321 = sbr.rel (%p5319) target = $region72
        $region71: #{tpu_custom_call.1} parent=67 // pred_region
          %s5322 = sand.u32 %s231, 1
          %s5323 = scalar_lea.sflag [#allocation5], %s5322
          %s5324 = sand.u32 %s231, 1
          %s5325 = smul.addr %s5324, 12
          %s5326 = scalar_lea.vmem [#allocation6], %s5325
          %5327 = dma.done %s5323, 192
        $region72: #{tpu_custom_call.1} parent=67 // pred_fallthru
          _
      $region68: #{tpu_custom_call.1} parent=5 // pred_fallthru
        _
    $region6: #{tpu_custom_call.1} parent=1 // loop_footer
      %s27 = sadd.s32 1, %s23
    $region7: #{tpu_custom_call.1} parent=1 // loop_footer_branch
      %22 = sbr.rel target = $region3
    $region8: #{tpu_custom_call.1} parent=1 // loop_exit
      _
    %5328 = vsyncpa [#allocation4], 1
    %s5329 = scalar_lea.sflag [#allocation4], 1
    %5330 = vsyncpa %s5329, 1
    %5331 = vsyncpa [#allocation5], 1
    %s5332 = scalar_lea.sflag [#allocation5], 1
    %5333 = vsyncpa %s5332, 1

</llo_original>
